<compile_context>
chip_gen: v7x
topology: tpu7x:2x2x1
jax: 0.10.0
libtpu: 0.0.40
codegen_flags: <defaults>
</compile_context>

<pallas_src>
import functools

import jax
import jax.numpy as jnp
from jax import lax
from jax.experimental import pallas as pl
from jax.experimental.pallas import tpu as pltpu

INS = 2
HIDS = 16
OUTS = 3

_HI = jax.lax.Precision.HIGHEST


def _round_up(x, m):
    return (x + m - 1) // m * m


def _choose_tiles(batch, block_lanes, chunk_lanes, min_steps=2):
    """Pick (lane-tile, lane-chunk) sizes.

    - tile is a multiple of 128 lanes and of the chunk size;
    - tile is capped so there are >= min_steps grid steps when the batch is
      large enough (v7x megacore sharding of the "parallel" axis);
    - chunk bounds the in-flight h1/h2 working set (vreg-resident).
    """
    b128 = _round_up(max(batch, 1), 128)
    tb = min(_round_up(block_lanes, 128), b128)
    if b128 // tb < min_steps and b128 >= min_steps * 128:
        tb = _round_up(-(-b128 // min_steps), 128)
    ch = min(_round_up(chunk_lanes, 128), tb)
    tb = _round_up(tb, ch)
    return tb, ch


def mlp_kernel(xt_ref, w1_ref, b1_ref, w2_ref, b2_ref, w3_ref, b3_ref, o_ref,
               *, chunk, layer1_on_mxu):
    """One (INS, tb) -> (OUTS, tb) batch tile, processed in lane chunks.

    Feature-major layout: batch on the 128-wide lane axis, features on
    sublanes, so elementwise work is fully lane-packed and the output store is
    lane-dense.
    """
    tb = o_ref.shape[-1]
    n_chunks = tb // chunk

    # Weights/biases are tiny; load once per grid step (their blocks are
    # grid-invariant, so Pallas keeps them VMEM-resident across steps).
    w1 = w1_ref[...]                      # (HIDS, INS)
    b1 = b1_ref[...]                      # (HIDS, 1)
    w2 = w2_ref[...]                      # (HIDS, HIDS)
    b2 = b2_ref[...]                      # (HIDS, 1)
    w3 = w3_ref[...]                      # (OUTS, HIDS)
    b3 = b3_ref[...]                      # (OUTS, 1)

    def body(c, carry):
        off = pl.multiple_of(c * chunk, chunk)
        # Upcast to f32 before any VPU math (v5e has no bf16 VALU); x may be
        # streamed through HBM as bf16 on v6e/v7x.
        xc = xt_ref[:, pl.ds(off, chunk)].astype(jnp.float32)     # (INS, chunk)

        if layer1_on_mxu:
            # K=2 matmul on the (otherwise idle) MXU keeps the VALU slot free.
            h = jnp.dot(w1, xc, preferred_element_type=jnp.float32,
                        precision=_HI)                            # (HIDS, chunk)
        else:
            # Pure-VPU fallback: two broadcast FMAs.
            h = w1[:, 0:1] * xc[0:1, :] + w1[:, 1:2] * xc[1:2, :]
        h = jnp.maximum(h + b1, 0.0)

        h = jnp.dot(w2, h, preferred_element_type=jnp.float32, precision=_HI)
        h = jnp.maximum(h + b2, 0.0)                              # (HIDS, chunk)

        out = jnp.dot(w3, h, preferred_element_type=jnp.float32,
                      precision=_HI) + b3                         # (OUTS, chunk)
        o_ref[:, pl.ds(off, chunk)] = out.astype(o_ref.dtype)
        return carry

    lax.fori_loop(0, n_chunks, body, 0)


def modelv1_forward_fm(xt, params, *, block_lanes=128 * 1024, chunk_lanes=1024,
                       layer1_on_mxu=True):
    """Feature-major forward pass (performance entry point).

    xt: (INS, B), f32 or bf16 (bf16 halves the dominant HBM read; math is f32).
    Returns (OUTS, B) float32 logits^T.  No wrapper-side transposes or pads.
    """
    assert xt.ndim == 2 and xt.shape[0] == INS
    B = xt.shape[1]
    w1, b1 = params["w1"], params["b1"]
    w2, b2 = params["w2"], params["b2"]
    w3, b3 = params["w3"], params["b3"]

    tb, ch = _choose_tiles(B, block_lanes, chunk_lanes)
    grid = (pl.cdiv(B, tb),)              # ragged last block masked by Pallas

    kernel = functools.partial(mlp_kernel, chunk=ch, layer1_on_mxu=layer1_on_mxu)

    def resident(a):
        return pl.BlockSpec(a.shape, lambda i: (0, 0))   # grid-invariant block

    return pl.pallas_call(
        kernel,
        out_shape=jax.ShapeDtypeStruct((OUTS, B), jnp.float32),
        grid=grid,
        in_specs=[
            # Lane-dense x^T tile.  (Optionally pipeline_mode=pl.Buffered(3)
            # if the x DMA ever shows up exposed in a profile.)
            pl.BlockSpec((INS, tb), lambda i: (0, i)),
            resident(w1), resident(b1),
            resident(w2), resident(b2),
            resident(w3), resident(b3),
        ],
        out_specs=pl.BlockSpec((OUTS, tb), lambda i: (0, i)),   # lane-dense
        compiler_params=pltpu.CompilerParams(
            dimension_semantics=("parallel",),
            vmem_limit_bytes=32 * 1024 * 1024,
        ),
    )(xt, w1, b1, w2, b2, w3, b3)


def modelv1_forward(x, params, *, stream_dtype=None, **kw):
    """PyTorch-layout adapter: x (B, INS) -> (B, OUTS), matching modelv1.forward.

    NOTE(perf): prefer modelv1_forward_fm — the transposes here are XLA-side
    HBM round trips; keep data feature-major end-to-end in production.
    """
    xt = x.T
    if stream_dtype is not None:
        xt = xt.astype(stream_dtype)
    return modelv1_forward_fm(xt, params, **kw).T


def init_params(key):
    """PyTorch nn.Linear default init: U(-1/sqrt(fan_in), +1/sqrt(fan_in)).
    Weights in PyTorch layout (out_features, in_features); bias (out, 1)."""
    def linear(k, fan_in, fan_out):
        kw, kb = jax.random.split(k)
        bound = 1.0 / jnp.sqrt(float(fan_in))
        w = jax.random.uniform(kw, (fan_out, fan_in), jnp.float32, -bound, bound)
        b = jax.random.uniform(kb, (fan_out, 1), jnp.float32, -bound, bound)
        return w, b

    k1, k2, k3 = jax.random.split(key, 3)
    w1, b1 = linear(k1, INS, HIDS)
    w2, b2 = linear(k2, HIDS, HIDS)
    w3, b3 = linear(k3, HIDS, OUTS)
    return {"w1": w1, "b1": b1, "w2": w2, "b2": b2, "w3": w3, "b3": b3}


def reference_forward_fm(xt, p):
    """Pure-JAX feature-major reference (f32, HIGHEST-precision matmuls)."""
    x = xt.astype(jnp.float32)
    h = jnp.maximum(jnp.dot(p["w1"], x, precision=_HI) + p["b1"], 0.0)
    h = jnp.maximum(jnp.dot(p["w2"], h, precision=_HI) + p["b2"], 0.0)
    return jnp.dot(p["w3"], h, precision=_HI) + p["b3"]


def reference_forward(x, p):
    """Pure-JAX row-major reference mirroring the PyTorch module."""
    h = jnp.maximum(jnp.dot(x, p["w1"].T, precision=_HI) + p["b1"].T, 0.0)
    h = jnp.maximum(jnp.dot(h, p["w2"].T, precision=_HI) + p["b2"].T, 0.0)
    return jnp.dot(h, p["w3"].T, precision=_HI) + p["b3"].T


if __name__ == "__main__":
    key = jax.random.PRNGKey(0)
    kp, k1, k2 = jax.random.split(key, 3)
    params = init_params(kp)

    def run_fm(xt, **kw):
        return jax.block_until_ready(modelv1_forward_fm(xt, params, **kw))

    # --- Ragged multi-block batch (grid=2, masked last block) ---
    B1 = 1000
    xt1 = jax.random.normal(k1, (INS, B1), dtype=jnp.float32)
    try:
        out1 = run_fm(xt1)
        l1kw = {}
    except Exception:
        # Fallback if this Mosaic build rejects the K=2 MXU matmul shape:
        # pure-VPU broadcast-FMA layer 1 (always lowers).
        l1kw = {"layer1_on_mxu": False}
        out1 = run_fm(xt1, **l1kw)
    ref1 = reference_forward_fm(xt1, params)
    assert out1.shape == (OUTS, B1)
    assert jnp.allclose(out1, ref1, atol=1e-4, rtol=1e-4), "fm ragged mismatch"

    # --- Exact-multiple multi-block batch ---
    B2 = 1024
    xt2 = jax.random.normal(k2, (INS, B2), dtype=jnp.float32)
    out2 = run_fm(xt2, **l1kw)
    ref2 = reference_forward_fm(xt2, params)
    assert jnp.allclose(out2, ref2, atol=1e-4, rtol=1e-4), "fm exact mismatch"

    # --- VPU layer-1 fallback path (documented option for v5e) ---
    out_vpu = run_fm(xt1, layer1_on_mxu=False)
    assert jnp.allclose(out_vpu, ref1, atol=1e-4, rtol=1e-4), "vpu path mismatch"

    # --- bf16 streaming of x (halves input HBM traffic on v6e/v7x) ---
    out_bf = run_fm(xt1.astype(jnp.bfloat16), **l1kw)
    ref_bf = reference_forward_fm(xt1.astype(jnp.bfloat16), params)
    assert jnp.allclose(out_bf, ref_bf, atol=1e-2, rtol=1e-2), "bf16 stream mismatch"

    # --- PyTorch-layout adapter ((B, INS) -> (B, OUTS)), module semantics ---
    x_rm = xt1.T
    out_rm = jax.block_until_ready(modelv1_forward(x_rm, params, **l1kw))
    ref_rm = reference_forward(x_rm, params)
    assert out_rm.shape == (B1, OUTS)
    assert jnp.allclose(out_rm, ref_rm, atol=1e-4, rtol=1e-4), "row-major mismatch"

    print("KERNEL_OK")
</pallas_src>

<mosaic_0001>
module attributes {stable_mosaic.version = 11 : i64} {
  func.func @mlp_kernel(%arg0: i32, %arg1: memref<2x512xf32, #tpu.memory_space<vmem>>, %arg2: memref<16x2xf32, #tpu.memory_space<vmem>>, %arg3: memref<16x1xf32, #tpu.memory_space<vmem>>, %arg4: memref<16x16xf32, #tpu.memory_space<vmem>>, %arg5: memref<16x1xf32, #tpu.memory_space<vmem>>, %arg6: memref<3x16xf32, #tpu.memory_space<vmem>>, %arg7: memref<3x1xf32, #tpu.memory_space<vmem>>, %arg8: memref<3x512xf32, #tpu.memory_space<vmem>>) attributes {dimension_semantics = [#tpu.dimension_semantics<parallel>], iteration_bounds = array<i64: 2>, scalar_prefetch = 0 : i64, scratch_operands = 0 : i64, tpu.core_type = #tpu.core_type<tc>, window_params = [{transform_indices = @transform_0, window_bounds = array<i64: 2, 512>}, {pipeline_mode = #tpu.pipeline_mode<synchronous>, transform_indices = @transform_1, window_bounds = array<i64: 16, 2>}, {pipeline_mode = #tpu.pipeline_mode<synchronous>, transform_indices = @transform_2, window_bounds = array<i64: 16, 1>}, {pipeline_mode = #tpu.pipeline_mode<synchronous>, transform_indices = @transform_3, window_bounds = array<i64: 16, 16>}, {pipeline_mode = #tpu.pipeline_mode<synchronous>, transform_indices = @transform_4, window_bounds = array<i64: 16, 1>}, {pipeline_mode = #tpu.pipeline_mode<synchronous>, transform_indices = @transform_5, window_bounds = array<i64: 3, 16>}, {pipeline_mode = #tpu.pipeline_mode<synchronous>, transform_indices = @transform_6, window_bounds = array<i64: 3, 1>}, {transform_indices = @transform_7, window_bounds = array<i64: 3, 512>}]} {
    %c0 = arith.constant 0 : index
    %c0_0 = arith.constant 0 : index
    %0 = vector.load %arg2[%c0, %c0_0] : memref<16x2xf32, #tpu.memory_space<vmem>>, vector<16x2xf32>
    %c0_1 = arith.constant 0 : index
    %c0_2 = arith.constant 0 : index
    %1 = vector.load %arg3[%c0_1, %c0_2] : memref<16x1xf32, #tpu.memory_space<vmem>>, vector<16x1xf32>
    %c0_3 = arith.constant 0 : index
    %c0_4 = arith.constant 0 : index
    %2 = vector.load %arg4[%c0_3, %c0_4] : memref<16x16xf32, #tpu.memory_space<vmem>>, vector<16x16xf32>
    %c0_5 = arith.constant 0 : index
    %c0_6 = arith.constant 0 : index
    %3 = vector.load %arg5[%c0_5, %c0_6] : memref<16x1xf32, #tpu.memory_space<vmem>>, vector<16x1xf32>
    %c0_7 = arith.constant 0 : index
    %c0_8 = arith.constant 0 : index
    %4 = vector.load %arg6[%c0_7, %c0_8] : memref<3x16xf32, #tpu.memory_space<vmem>>, vector<3x16xf32>
    %c0_9 = arith.constant 0 : index
    %c0_10 = arith.constant 0 : index
    %5 = vector.load %arg7[%c0_9, %c0_10] : memref<3x1xf32, #tpu.memory_space<vmem>>, vector<3x1xf32>
    %c0_i32 = arith.constant 0 : i32
    %c512_i32 = arith.constant 512 : i32
    %6 = arith.muli %c0_i32, %c512_i32 : i32
    %7 = tpu.assume_multiple %6, 512 : i32
    %c0_11 = arith.constant 0 : index
    %8 = arith.index_cast %7 : i32 to index
    %9 = vector.load %arg1[%c0_11, %8] : memref<2x512xf32, #tpu.memory_space<vmem>>, vector<2x512xf32>
    %cst = arith.constant dense<0.000000e+00> : vector<16x512xf32>
    %10 = tpu.matmul %0, %9, %cst {dimension_numbers = #tpu.dot_dimension_numbers<[1], [0], [0], [1], [0, 0, 1, 1], [], []>, precision = #tpu.contract_precision<fp32>} : vector<16x2xf32>, vector<2x512xf32>, vector<16x512xf32> -> vector<16x512xf32>
    %11 = vector.broadcast %1 : vector<16x1xf32> to vector<16x512xf32>
    %12 = arith.addf %10, %11 : vector<16x512xf32>
    %cst_12 = arith.constant 0.000000e+00 : f32
    %13 = vector.broadcast %cst_12 : f32 to vector<16x512xf32>
    %14 = arith.maximumf %12, %13 : vector<16x512xf32>
    %cst_13 = arith.constant dense<0.000000e+00> : vector<16x512xf32>
    %15 = tpu.matmul %2, %14, %cst_13 {dimension_numbers = #tpu.dot_dimension_numbers<[1], [0], [0], [1], [0, 0, 1, 1], [], []>, precision = #tpu.contract_precision<fp32>} : vector<16x16xf32>, vector<16x512xf32>, vector<16x512xf32> -> vector<16x512xf32>
    %16 = vector.broadcast %3 : vector<16x1xf32> to vector<16x512xf32>
    %17 = arith.addf %15, %16 : vector<16x512xf32>
    %cst_14 = arith.constant 0.000000e+00 : f32
    %18 = vector.broadcast %cst_14 : f32 to vector<16x512xf32>
    %19 = arith.maximumf %17, %18 : vector<16x512xf32>
    %cst_15 = arith.constant dense<0.000000e+00> : vector<3x512xf32>
    %20 = tpu.matmul %4, %19, %cst_15 {dimension_numbers = #tpu.dot_dimension_numbers<[1], [0], [0], [1], [0, 0, 1, 1], [], []>, precision = #tpu.contract_precision<fp32>} : vector<3x16xf32>, vector<16x512xf32>, vector<3x512xf32> -> vector<3x512xf32>
    %21 = vector.broadcast %5 : vector<3x1xf32> to vector<3x512xf32>
    %22 = arith.addf %20, %21 : vector<3x512xf32>
    %c0_16 = arith.constant 0 : index
    %23 = arith.index_cast %7 : i32 to index
    %24 = vector.load %arg8[%c0_16, %23] : memref<3x512xf32, #tpu.memory_space<vmem>>, vector<3x512xf32>
    tpu.vector_store %arg8[%c0_16, %23], %22 {strides = array<i32>} : memref<3x512xf32, #tpu.memory_space<vmem>>, vector<3x512xf32>,
    %c1_i32 = arith.constant 1 : i32
    return
  }
  func.func @transform_0(%arg0: i32) -> (i32, i32) {
    %c0_i32 = arith.constant 0 : i32
    %c0_i32_0 = arith.constant 0 : i32
    return %c0_i32, %arg0 : i32, i32
  }
  func.func @transform_1(%arg0: i32) -> (i32, i32) {
    %c0_i32 = arith.constant 0 : i32
    %c0_i32_0 = arith.constant 0 : i32
    %c0_i32_1 = arith.constant 0 : i32
    return %c0_i32, %c0_i32_0 : i32, i32
  }
  func.func @transform_2(%arg0: i32) -> (i32, i32) {
    %c0_i32 = arith.constant 0 : i32
    %c0_i32_0 = arith.constant 0 : i32
    %c0_i32_1 = arith.constant 0 : i32
    return %c0_i32, %c0_i32_0 : i32, i32
  }
  func.func @transform_3(%arg0: i32) -> (i32, i32) {
    %c0_i32 = arith.constant 0 : i32
    %c0_i32_0 = arith.constant 0 : i32
    %c0_i32_1 = arith.constant 0 : i32
    return %c0_i32, %c0_i32_0 : i32, i32
  }
  func.func @transform_4(%arg0: i32) -> (i32, i32) {
    %c0_i32 = arith.constant 0 : i32
    %c0_i32_0 = arith.constant 0 : i32
    %c0_i32_1 = arith.constant 0 : i32
    return %c0_i32, %c0_i32_0 : i32, i32
  }
  func.func @transform_5(%arg0: i32) -> (i32, i32) {
    %c0_i32 = arith.constant 0 : i32
    %c0_i32_0 = arith.constant 0 : i32
    %c0_i32_1 = arith.constant 0 : i32
    return %c0_i32, %c0_i32_0 : i32, i32
  }
  func.func @transform_6(%arg0: i32) -> (i32, i32) {
    %c0_i32 = arith.constant 0 : i32
    %c0_i32_0 = arith.constant 0 : i32
    %c0_i32_1 = arith.constant 0 : i32
    return %c0_i32, %c0_i32_0 : i32, i32
  }
  func.func @transform_7(%arg0: i32) -> (i32, i32) {
    %c0_i32 = arith.constant 0 : i32
    %c0_i32_0 = arith.constant 0 : i32
    return %c0_i32, %arg0 : i32, i32
  }
}

module attributes {stable_mosaic.version = 11 : i64} {
  func.func @mlp_kernel(%arg0: i32, %arg1: memref<2x512xf32, #tpu.memory_space<vmem>>, %arg2: memref<16x2xf32, #tpu.memory_space<vmem>>, %arg3: memref<16x1xf32, #tpu.memory_space<vmem>>, %arg4: memref<16x16xf32, #tpu.memory_space<vmem>>, %arg5: memref<16x1xf32, #tpu.memory_space<vmem>>, %arg6: memref<3x16xf32, #tpu.memory_space<vmem>>, %arg7: memref<3x1xf32, #tpu.memory_space<vmem>>, %arg8: memref<3x512xf32, #tpu.memory_space<vmem>>) attributes {dimension_semantics = [#tpu.dimension_semantics<parallel>], iteration_bounds = array<i64: 2>, scalar_prefetch = 0 : i64, scratch_operands = 0 : i64, tpu.core_type = #tpu.core_type<tc>, window_params = [{transform_indices = @transform_0, window_bounds = array<i64: 2, 512>}, {pipeline_mode = #tpu.pipeline_mode<synchronous>, transform_indices = @transform_1, window_bounds = array<i64: 16, 2>}, {pipeline_mode = #tpu.pipeline_mode<synchronous>, transform_indices = @transform_2, window_bounds = array<i64: 16, 1>}, {pipeline_mode = #tpu.pipeline_mode<synchronous>, transform_indices = @transform_3, window_bounds = array<i64: 16, 16>}, {pipeline_mode = #tpu.pipeline_mode<synchronous>, transform_indices = @transform_4, window_bounds = array<i64: 16, 1>}, {pipeline_mode = #tpu.pipeline_mode<synchronous>, transform_indices = @transform_5, window_bounds = array<i64: 3, 16>}, {pipeline_mode = #tpu.pipeline_mode<synchronous>, transform_indices = @transform_6, window_bounds = array<i64: 3, 1>}, {transform_indices = @transform_7, window_bounds = array<i64: 3, 512>}]} {
    %c0 = arith.constant 0 : index
    %c0_0 = arith.constant 0 : index
    %0 = vector.load %arg2[%c0, %c0_0] : memref<16x2xf32, #tpu.memory_space<vmem>>, vector<16x2xf32>
    %c0_1 = arith.constant 0 : index
    %c0_2 = arith.constant 0 : index
    %1 = vector.load %arg3[%c0_1, %c0_2] : memref<16x1xf32, #tpu.memory_space<vmem>>, vector<16x1xf32>
    %c0_3 = arith.constant 0 : index
    %c0_4 = arith.constant 0 : index
    %2 = vector.load %arg4[%c0_3, %c0_4] : memref<16x16xf32, #tpu.memory_space<vmem>>, vector<16x16xf32>
    %c0_5 = arith.constant 0 : index
    %c0_6 = arith.constant 0 : index
    %3 = vector.load %arg5[%c0_5, %c0_6] : memref<16x1xf32, #tpu.memory_space<vmem>>, vector<16x1xf32>
    %c0_7 = arith.constant 0 : index
    %c0_8 = arith.constant 0 : index
    %4 = vector.load %arg6[%c0_7, %c0_8] : memref<3x16xf32, #tpu.memory_space<vmem>>, vector<3x16xf32>
    %c0_9 = arith.constant 0 : index
    %c0_10 = arith.constant 0 : index
    %5 = vector.load %arg7[%c0_9, %c0_10] : memref<3x1xf32, #tpu.memory_space<vmem>>, vector<3x1xf32>
    %c0_i32 = arith.constant 0 : i32
    %c512_i32 = arith.constant 512 : i32
    %6 = arith.muli %c0_i32, %c512_i32 : i32
    %7 = tpu.assume_multiple %6, 512 : i32
    %c0_11 = arith.constant 0 : index
    %8 = arith.index_cast %7 : i32 to index
    %9 = vector.load %arg1[%c0_11, %8] : memref<2x512xf32, #tpu.memory_space<vmem>>, vector<2x512xf32>
    %10 = vector.extract_strided_slice %0 {offsets = [0, 0], sizes = [16, 1], strides = [1, 1]} : vector<16x2xf32> to vector<16x1xf32>
    %11 = vector.extract_strided_slice %9 {offsets = [0, 0], sizes = [1, 512], strides = [1, 1]} : vector<2x512xf32> to vector<1x512xf32>
    %12 = vector.broadcast %10 : vector<16x1xf32> to vector<16x512xf32>
    %13 = vector.broadcast %11 : vector<1x512xf32> to vector<16x512xf32>
    %14 = arith.mulf %12, %13 : vector<16x512xf32>
    %15 = vector.extract_strided_slice %0 {offsets = [0, 1], sizes = [16, 1], strides = [1, 1]} : vector<16x2xf32> to vector<16x1xf32>
    %16 = vector.extract_strided_slice %9 {offsets = [1, 0], sizes = [1, 512], strides = [1, 1]} : vector<2x512xf32> to vector<1x512xf32>
    %17 = vector.broadcast %15 : vector<16x1xf32> to vector<16x512xf32>
    %18 = vector.broadcast %16 : vector<1x512xf32> to vector<16x512xf32>
    %19 = arith.mulf %17, %18 : vector<16x512xf32>
    %20 = arith.addf %14, %19 : vector<16x512xf32>
    %21 = vector.broadcast %1 : vector<16x1xf32> to vector<16x512xf32>
    %22 = arith.addf %20, %21 : vector<16x512xf32>
    %cst = arith.constant 0.000000e+00 : f32
    %23 = vector.broadcast %cst : f32 to vector<16x512xf32>
    %24 = arith.maximumf %22, %23 : vector<16x512xf32>
    %cst_12 = arith.constant dense<0.000000e+00> : vector<16x512xf32>
    %25 = tpu.matmul %2, %24, %cst_12 {dimension_numbers = #tpu.dot_dimension_numbers<[1], [0], [0], [1], [0, 0, 1, 1], [], []>, precision = #tpu.contract_precision<fp32>} : vector<16x16xf32>, vector<16x512xf32>, vector<16x512xf32> -> vector<16x512xf32>
    %26 = vector.broadcast %3 : vector<16x1xf32> to vector<16x512xf32>
    %27 = arith.addf %25, %26 : vector<16x512xf32>
    %cst_13 = arith.constant 0.000000e+00 : f32
    %28 = vector.broadcast %cst_13 : f32 to vector<16x512xf32>
    %29 = arith.maximumf %27, %28 : vector<16x512xf32>
    %cst_14 = arith.constant dense<0.000000e+00> : vector<3x512xf32>
    %30 = tpu.matmul %4, %29, %cst_14 {dimension_numbers = #tpu.dot_dimension_numbers<[1], [0], [0], [1], [0, 0, 1, 1], [], []>, precision = #tpu.contract_precision<fp32>} : vector<3x16xf32>, vector<16x512xf32>, vector<3x512xf32> -> vector<3x512xf32>
    %31 = vector.broadcast %5 : vector<3x1xf32> to vector<3x512xf32>
    %32 = arith.addf %30, %31 : vector<3x512xf32>
    %c0_15 = arith.constant 0 : index
    %33 = arith.index_cast %7 : i32 to index
    %34 = vector.load %arg8[%c0_15, %33] : memref<3x512xf32, #tpu.memory_space<vmem>>, vector<3x512xf32>
    tpu.vector_store %arg8[%c0_15, %33], %32 {strides = array<i32>} : memref<3x512xf32, #tpu.memory_space<vmem>>, vector<3x512xf32>,
    %c1_i32 = arith.constant 1 : i32
    return
  }
  func.func @transform_0(%arg0: i32) -> (i32, i32) {
    %c0_i32 = arith.constant 0 : i32
    %c0_i32_0 = arith.constant 0 : i32
    return %c0_i32, %arg0 : i32, i32
  }
  func.func @transform_1(%arg0: i32) -> (i32, i32) {
    %c0_i32 = arith.constant 0 : i32
    %c0_i32_0 = arith.constant 0 : i32
    %c0_i32_1 = arith.constant 0 : i32
    return %c0_i32, %c0_i32_0 : i32, i32
  }
  func.func @transform_2(%arg0: i32) -> (i32, i32) {
    %c0_i32 = arith.constant 0 : i32
    %c0_i32_0 = arith.constant 0 : i32
    %c0_i32_1 = arith.constant 0 : i32
    return %c0_i32, %c0_i32_0 : i32, i32
  }
  func.func @transform_3(%arg0: i32) -> (i32, i32) {
    %c0_i32 = arith.constant 0 : i32
    %c0_i32_0 = arith.constant 0 : i32
    %c0_i32_1 = arith.constant 0 : i32
    return %c0_i32, %c0_i32_0 : i32, i32
  }
  func.func @transform_4(%arg0: i32) -> (i32, i32) {
    %c0_i32 = arith.constant 0 : i32
    %c0_i32_0 = arith.constant 0 : i32
    %c0_i32_1 = arith.constant 0 : i32
    return %c0_i32, %c0_i32_0 : i32, i32
  }
  func.func @transform_5(%arg0: i32) -> (i32, i32) {
    %c0_i32 = arith.constant 0 : i32
    %c0_i32_0 = arith.constant 0 : i32
    %c0_i32_1 = arith.constant 0 : i32
    return %c0_i32, %c0_i32_0 : i32, i32
  }
  func.func @transform_6(%arg0: i32) -> (i32, i32) {
    %c0_i32 = arith.constant 0 : i32
    %c0_i32_0 = arith.constant 0 : i32
    %c0_i32_1 = arith.constant 0 : i32
    return %c0_i32, %c0_i32_0 : i32, i32
  }
  func.func @transform_7(%arg0: i32) -> (i32, i32) {
    %c0_i32 = arith.constant 0 : i32
    %c0_i32_0 = arith.constant 0 : i32
    return %c0_i32, %arg0 : i32, i32
  }
}

</mosaic_0001>

<llo_original>
// kernel: tpu_custom_call.1
$region0: #{tpu_custom_call.1}
  #allocation0 [shape = 'u32[]', space=smem, size = 0x4, offset = 0x4, fixed_abs, tag = 'smem constant byte address 0x4 - core index']
  #allocation1 [shape = 'u32[144,128]{1,0:T(1,128)}', space=vmem, size = 0x12000, scoped, tag = 'internal scratch']
  %s0 = inlined_call_operand.vmem [shape: f32[2,1000], index: 0, kind: input, shape index: {}]
  %s1 = inlined_call_operand.vmem [shape: f32[16,2], index: 1, kind: input, shape index: {}]
  %s2 = inlined_call_operand.vmem [shape: f32[16,1], index: 2, kind: input, shape index: {}]
  %s3 = inlined_call_operand.vmem [shape: f32[16,16], index: 3, kind: input, shape index: {}]
  %s4 = inlined_call_operand.vmem [shape: f32[16,1], index: 4, kind: input, shape index: {}]
  %s5 = inlined_call_operand.vmem [shape: f32[3,16], index: 5, kind: input, shape index: {}]
  %s6 = inlined_call_operand.vmem [shape: f32[3,1], index: 6, kind: input, shape index: {}]
  %s7 = inlined_call_operand.hbm [shape: f32[3,1000], index: 7, kind: output, shape index: {}]
  %s8 = sld [smem:[#allocation0]]
  $region61: #{tpu_custom_call.1} parent=0
    _
  %s10 = ssub.s32 1, %s8
  %s11 = scalar_select 0, %s10, %s8
  $region1: #{tpu_custom_call.1} parent=0
    #allocation2 [shape = 'u8[16384]{0}', space=vmem, size = 0x4000, scoped, tag = 'output window, operand 0']
    #allocation3 [shape = 's32[2]{0}', space=sflag, size = 0x8, scoped, tag = 'scoped memory for tpu_custom_call.1']
    %12 = vsyncpa [#allocation3], 0
    %s13 = scalar_lea.sflag [#allocation3], 1
    %14 = vsyncpa %s13, 0
    loop: start=0, step=1, limit=4
    $region2: #{tpu_custom_call.1} parent=1 // loop_pre_header
      _
    $region3: #{tpu_custom_call.1} parent=1 // loop_header
      %s16 = sphi 0, %s20
      %p17 = scmp.ge.s32.totalorder %s16, 4
      %s26 = sphi 0, %s28
      %s29 = sphi 0, %s26
      %s30 = sphi 0, %s29
      %s46 = sphi 0, %s30
      %s50 = sphi 0, %s50
      %s52 = sphi 0, %s50
      %s53 = sphi 0, %s52
      %s67 = sphi 0, %s53
      %s71 = sphi 0, %s71
      %s73 = sphi 0, %s71
      %s74 = sphi 0, %s73
      %s88 = sphi 0, %s74
      %s92 = sphi 0, %s92
      %s94 = sphi 0, %s92
      %s95 = sphi 0, %s94
      %s109 = sphi 0, %s95
      %s113 = sphi 0, %s113
      %s115 = sphi 0, %s113
      %s116 = sphi 0, %s115
      %s130 = sphi 0, %s116
      %s134 = sphi 0, %s134
      %s136 = sphi 0, %s134
      %s137 = sphi 0, %s136
      %s151 = sphi 0, %s137
      %s155 = sphi 0, %s155
      %s157 = sphi 0, %s155
      %s158 = sphi 0, %s157
      %s172 = sphi 0, %s158
      %s178 = sphi 0, %s180
      %s181 = sphi 0, %s178
      %s182 = sphi 0, %s181
      %s198 = sphi 0, %s182
    $region4: #{tpu_custom_call.1} parent=1 // loop_header_branch
      %19 = sbr.rel (%p17) target = $region8
    $region5: #{tpu_custom_call.1} parent=1 // loop_body
      %s21 = ssub.s32 %s16, 1
      %s22 = ssub.s32 %s16, 2
      %s23 = sadd.s32 %s16, 1
      %s24 = ssub.s32 %s16, %s23
      %p25 = scmp.eq.s32.totalorder %s24, 0
      %s27 = sadd.s32 %s26, 1
      %s28 = scalar_select %p25, %s26, %s27
      %p31 = pneg %p25
      %p32 = scmp.eq.s32.totalorder %s16, 1
      %p33 = por %p31, %p32
      %p34 = scmp.ne.s32.totalorder %s26, %s29
      %p35 = scmp.eq.s32.totalorder %s16, 0
      %p36 = por %p34, %p35
      %p37 = scmp.ne.s32.totalorder %s26, %s29
      %p38 = scmp.eq.s32.totalorder %s21, 1
      %p39 = por %p37, %p38
      %p40 = scmp.ne.s32.totalorder %s29, %s30
      %p41 = scmp.eq.s32.totalorder %s21, 0
      %p42 = por %p40, %p41
      %p43 = scmp.ne.s32.totalorder %s29, %s30
      %p44 = scmp.eq.s32.totalorder %s22, 1
      %p45 = por %p43, %p44
      %p47 = scmp.ne.s32.totalorder %s30, %s46
      %p48 = scmp.eq.s32.totalorder %s22, 0
      %p49 = por %p47, %p48
      %s51 = sadd.s32 %s50, 1
      %p54 = scmp.eq.s32.totalorder %s16, 1
      %p55 = scmp.ne.s32.totalorder %s50, %s52
      %p56 = scmp.eq.s32.totalorder %s16, 0
      %p57 = por %p55, %p56
      %p58 = scmp.ne.s32.totalorder %s50, %s52
      %p59 = scmp.eq.s32.totalorder %s21, 1
      %p60 = por %p58, %p59
      %p61 = scmp.ne.s32.totalorder %s52, %s53
      %p62 = scmp.eq.s32.totalorder %s21, 0
      %p63 = por %p61, %p62
      %p64 = scmp.ne.s32.totalorder %s52, %s53
      %p65 = scmp.eq.s32.totalorder %s22, 1
      %p66 = por %p64, %p65
      %p68 = scmp.ne.s32.totalorder %s53, %s67
      %p69 = scmp.eq.s32.totalorder %s22, 0
      %p70 = por %p68, %p69
      %s72 = sadd.s32 %s71, 1
      %p75 = scmp.eq.s32.totalorder %s16, 1
      %p76 = scmp.ne.s32.totalorder %s71, %s73
      %p77 = scmp.eq.s32.totalorder %s16, 0
      %p78 = por %p76, %p77
      %p79 = scmp.ne.s32.totalorder %s71, %s73
      %p80 = scmp.eq.s32.totalorder %s21, 1
      %p81 = por %p79, %p80
      %p82 = scmp.ne.s32.totalorder %s73, %s74
      %p83 = scmp.eq.s32.totalorder %s21, 0
      %p84 = por %p82, %p83
      %p85 = scmp.ne.s32.totalorder %s73, %s74
      %p86 = scmp.eq.s32.totalorder %s22, 1
      %p87 = por %p85, %p86
      %p89 = scmp.ne.s32.totalorder %s74, %s88
      %p90 = scmp.eq.s32.totalorder %s22, 0
      %p91 = por %p89, %p90
      %s93 = sadd.s32 %s92, 1
      %p96 = scmp.eq.s32.totalorder %s16, 1
      %p97 = scmp.ne.s32.totalorder %s92, %s94
      %p98 = scmp.eq.s32.totalorder %s16, 0
      %p99 = por %p97, %p98
      %p100 = scmp.ne.s32.totalorder %s92, %s94
      %p101 = scmp.eq.s32.totalorder %s21, 1
      %p102 = por %p100, %p101
      %p103 = scmp.ne.s32.totalorder %s94, %s95
      %p104 = scmp.eq.s32.totalorder %s21, 0
      %p105 = por %p103, %p104
      %p106 = scmp.ne.s32.totalorder %s94, %s95
      %p107 = scmp.eq.s32.totalorder %s22, 1
      %p108 = por %p106, %p107
      %p110 = scmp.ne.s32.totalorder %s95, %s109
      %p111 = scmp.eq.s32.totalorder %s22, 0
      %p112 = por %p110, %p111
      %s114 = sadd.s32 %s113, 1
      %p117 = scmp.eq.s32.totalorder %s16, 1
      %p118 = scmp.ne.s32.totalorder %s113, %s115
      %p119 = scmp.eq.s32.totalorder %s16, 0
      %p120 = por %p118, %p119
      %p121 = scmp.ne.s32.totalorder %s113, %s115
      %p122 = scmp.eq.s32.totalorder %s21, 1
      %p123 = por %p121, %p122
      %p124 = scmp.ne.s32.totalorder %s115, %s116
      %p125 = scmp.eq.s32.totalorder %s21, 0
      %p126 = por %p124, %p125
      %p127 = scmp.ne.s32.totalorder %s115, %s116
      %p128 = scmp.eq.s32.totalorder %s22, 1
      %p129 = por %p127, %p128
      %p131 = scmp.ne.s32.totalorder %s116, %s130
      %p132 = scmp.eq.s32.totalorder %s22, 0
      %p133 = por %p131, %p132
      %s135 = sadd.s32 %s134, 1
      %p138 = scmp.eq.s32.totalorder %s16, 1
      %p139 = scmp.ne.s32.totalorder %s134, %s136
      %p140 = scmp.eq.s32.totalorder %s16, 0
      %p141 = por %p139, %p140
      %p142 = scmp.ne.s32.totalorder %s134, %s136
      %p143 = scmp.eq.s32.totalorder %s21, 1
      %p144 = por %p142, %p143
      %p145 = scmp.ne.s32.totalorder %s136, %s137
      %p146 = scmp.eq.s32.totalorder %s21, 0
      %p147 = por %p145, %p146
      %p148 = scmp.ne.s32.totalorder %s136, %s137
      %p149 = scmp.eq.s32.totalorder %s22, 1
      %p150 = por %p148, %p149
      %p152 = scmp.ne.s32.totalorder %s137, %s151
      %p153 = scmp.eq.s32.totalorder %s22, 0
      %p154 = por %p152, %p153
      %s156 = sadd.s32 %s155, 1
      %p159 = scmp.eq.s32.totalorder %s16, 1
      %p160 = scmp.ne.s32.totalorder %s155, %s157
      %p161 = scmp.eq.s32.totalorder %s16, 0
      %p162 = por %p160, %p161
      %p163 = scmp.ne.s32.totalorder %s155, %s157
      %p164 = scmp.eq.s32.totalorder %s21, 1
      %p165 = por %p163, %p164
      %p166 = scmp.ne.s32.totalorder %s157, %s158
      %p167 = scmp.eq.s32.totalorder %s21, 0
      %p168 = por %p166, %p167
      %p169 = scmp.ne.s32.totalorder %s157, %s158
      %p170 = scmp.eq.s32.totalorder %s22, 1
      %p171 = por %p169, %p170
      %p173 = scmp.ne.s32.totalorder %s158, %s172
      %p174 = scmp.eq.s32.totalorder %s22, 0
      %p175 = por %p173, %p174
      %s176 = ssub.s32 %s16, %s23
      %p177 = scmp.eq.s32.totalorder %s176, 0
      %s179 = sadd.s32 %s178, 1
      %s180 = scalar_select %p177, %s178, %s179
      %p183 = pneg %p177
      %p184 = scmp.eq.s32.totalorder %s16, 1
      %p185 = por %p183, %p184
      %p186 = scmp.ne.s32.totalorder %s178, %s181
      %p187 = scmp.eq.s32.totalorder %s16, 0
      %p188 = por %p186, %p187
      %p189 = scmp.ne.s32.totalorder %s178, %s181
      %p190 = scmp.eq.s32.totalorder %s21, 1
      %p191 = por %p189, %p190
      %p192 = scmp.ne.s32.totalorder %s181, %s182
      %p193 = scmp.eq.s32.totalorder %s21, 0
      %p194 = por %p192, %p193
      %p195 = scmp.ne.s32.totalorder %s181, %s182
      %p196 = scmp.eq.s32.totalorder %s22, 1
      %p197 = por %p195, %p196
      %p199 = scmp.ne.s32.totalorder %s182, %s198
      %p200 = scmp.eq.s32.totalorder %s22, 0
      %p201 = por %p199, %p200
      %p202 = scmp.le.s32.totalorder 1, %s16
      %p203 = scmp.lt.s32.totalorder %s16, 3
      %p204 = pnand %p202, %p203
      %p205 = pneg %p204
      // Predicated region
      $region9: #{tpu_custom_call.1} parent=5 // pred_check
        _
      $region10: #{tpu_custom_call.1} parent=5 // pred_check_branch
        %207 = sbr.rel (%p204) target = $region12
      $region11: #{tpu_custom_call.1} parent=5 // pred_region
        %s208 = ssub.s32 %s16, 1
        // Predicated region
        $region13: #{tpu_custom_call.1} parent=11 // pred_check
          %p209 = pneg %p63
        $region14: #{tpu_custom_call.1} parent=11 // pred_check_branch
          %211 = sbr.rel (%p209) target = $region16
        $region15: #{tpu_custom_call.1} parent=11 // pred_region
          _
        $region16: #{tpu_custom_call.1} parent=11 // pred_fallthru
          _
        // Predicated region
        $region17: #{tpu_custom_call.1} parent=11 // pred_check
          %p212 = pneg %p84
        $region18: #{tpu_custom_call.1} parent=11 // pred_check_branch
          %214 = sbr.rel (%p212) target = $region20
        $region19: #{tpu_custom_call.1} parent=11 // pred_region
          _
        $region20: #{tpu_custom_call.1} parent=11 // pred_fallthru
          _
        // Predicated region
        $region21: #{tpu_custom_call.1} parent=11 // pred_check
          %p215 = pneg %p105
        $region22: #{tpu_custom_call.1} parent=11 // pred_check_branch
          %217 = sbr.rel (%p215) target = $region24
        $region23: #{tpu_custom_call.1} parent=11 // pred_region
          _
        $region24: #{tpu_custom_call.1} parent=11 // pred_fallthru
          _
        // Predicated region
        $region25: #{tpu_custom_call.1} parent=11 // pred_check
          %p218 = pneg %p126
        $region26: #{tpu_custom_call.1} parent=11 // pred_check_branch
          %220 = sbr.rel (%p218) target = $region28
        $region27: #{tpu_custom_call.1} parent=11 // pred_region
          _
        $region28: #{tpu_custom_call.1} parent=11 // pred_fallthru
          _
        // Predicated region
        $region29: #{tpu_custom_call.1} parent=11 // pred_check
          %p221 = pneg %p147
        $region30: #{tpu_custom_call.1} parent=11 // pred_check_branch
          %223 = sbr.rel (%p221) target = $region32
        $region31: #{tpu_custom_call.1} parent=11 // pred_region
          _
        $region32: #{tpu_custom_call.1} parent=11 // pred_fallthru
          _
        // Predicated region
        $region33: #{tpu_custom_call.1} parent=11 // pred_check
          %p224 = pneg %p168
        $region34: #{tpu_custom_call.1} parent=11 // pred_check_branch
          %226 = sbr.rel (%p224) target = $region36
        $region35: #{tpu_custom_call.1} parent=11 // pred_region
          _
        $region36: #{tpu_custom_call.1} parent=11 // pred_fallthru
          _
      $region12: #{tpu_custom_call.1} parent=5 // pred_fallthru
        _
      %p227 = scmp.lt.s32.totalorder %s16, 2
      // Predicated region
      $region37: #{tpu_custom_call.1} parent=5 // pred_check
        %p228 = pneg %p227
      $region38: #{tpu_custom_call.1} parent=5 // pred_check_branch
        %230 = sbr.rel (%p228) target = $region40
      $region39: #{tpu_custom_call.1} parent=5 // pred_region
        // Predicated region
        $region41: #{tpu_custom_call.1} parent=39 // pred_check
          %p231 = pneg %p36
        $region42: #{tpu_custom_call.1} parent=39 // pred_check_branch
          %233 = sbr.rel (%p231) target = $region44
        $region43: #{tpu_custom_call.1} parent=39 // pred_region
          %s234 = smul.u32 4, %s16
          %p235 = scmp.lt.s32.totalorder %s234, 7
          %s236 = scalar_select %p235, %s234, 7
          %s237 = smul.addr %s236, 2
          %s238 = scalar_lea.vmem %s0, %s237
          %s239 = smul.u32 4, %s16
        $region44: #{tpu_custom_call.1} parent=39 // pred_fallthru
          _
      $region40: #{tpu_custom_call.1} parent=5 // pred_fallthru
        _
      %p240 = scmp.le.s32.totalorder 1, %s16
      %p241 = scmp.lt.s32.totalorder %s16, 3
      %p242 = pnand %p240, %p241
      %p243 = pneg %p242
      // Predicated region
      $region45: #{tpu_custom_call.1} parent=5 // pred_check
        _
      $region46: #{tpu_custom_call.1} parent=5 // pred_check_branch
        %245 = sbr.rel (%p242) target = $region48
      $region47: #{tpu_custom_call.1} parent=5 // pred_region
        %s246 = ssub.s32 %s16, 1
        %s247 = smul.u32 4, %s21
        %p248 = scmp.lt.s32.totalorder %s247, 7
        %s249 = scalar_select %p248, %s247, 7
        %s250 = smul.addr %s249, 2
        %s251 = scalar_lea.vmem %s0, %s250
        %p252 = pneg %p42
        %p253 = pneg %p39
        %p254 = pneg %p63
        %p255 = pneg %p60
        %p256 = pneg %p84
        %p257 = pneg %p81
        %p258 = pneg %p105
        %p259 = pneg %p102
        %p260 = pneg %p126
        %p261 = pneg %p123
        %p262 = pneg %p147
        %p263 = pneg %p144
        %p264 = pneg %p168
        %p265 = pneg %p165
        %p266 = pneg %p194
        %p267 = pneg %p191
        %s268 = sand.u32 %s181, 1
        %s269 = scalar_lea.sflag [#allocation3], %s268
        %s270 = sand.u32 %s181, 1
        %s271 = smul.addr %s270, 16
        %s272 = scalar_lea.vmem [#allocation2], %s271
        %s273 = smul.u32 4, %s21
        %p274 = scmp.lt.s32.totalorder %s273, 7
        %s275 = scalar_select %p274, %s273, 7
        %s276 = smul.addr %s275, 2
        %s277 = scalar_lea.vmem %s0, %s276
        %s278 = smul.u32 4, %s21
        %s279 = smul.u32 4, %s21
        %v280 = vld [vmem:[%s1] sm:$0xff]
        %v281 = vld [vmem:[%s1 + $0x8] sm:$0xff]
        %v282 = vld [vmem:[%s2] sm:$0xff]
        %v283 = vld [vmem:[%s2 + $0x8] sm:$0xff]
        %v284 = vld [vmem:[%s3] sm:$0xff]
        %v285 = vld [vmem:[%s3 + $0x8] sm:$0xff]
        %v286 = vld [vmem:[%s4] sm:$0xff]
        %v287 = vld [vmem:[%s4 + $0x8] sm:$0xff]
        %v288 = vld [vmem:[%s5] sm:$0x7]
        %v289 = vld [vmem:[%s6] sm:$0x7]
        %v290 = vld [vmem:[%s277] sm:$0xff]
        %292 = vset.pattern.permute.xlu0 0
        %293 = vperm.xlu0 %292, %v282
        %v294 = vpop.permute.xlu0 %293
        %297 = vset.pattern.permute.xlu0 0
        %298 = vperm.xlu0 %297, %v283
        %v299 = vpop.permute.xlu0 %298
        %v302 = vcombine.high %v290, %v290
        %v304 = vunpack.c.l.s4 1983009808
        %v305 = vunpack.c.0.s8 %v304
        %v306 = vlaneseq
        %v307 = vshrl.u32 %v306, 7
        %v308 = vsub.s32 %v305, %v307
        %v309 = vrot.slane %v290, %v308
        %v311 = vunpack.c.l.s4 1983009808
        %v312 = vunpack.c.0.s8 %v311
        %v313 = vlaneseq
        %v314 = vshrl.u32 %v313, 7
        %v315 = vsub.s32 %v312, %v314
        %v316 = vrot.slane %v302, %v315
        %v317 = vcombine.high %v309, %v309
        %v318 = vcombine.high %v316, %v316
        %vm319 = vcmask 15360
        %v321 = vsel %vm319, %v280, 0
        %v324 = vsel %vm319, %v281, 0
        %vm326 = vcmask 1041408
        %v327 = vsel %vm326, %v309, 0
        %v329 = vsel %vm326, %v317, 0
        %v331 = vsel %vm326, %v316, 0
        %v333 = vsel %vm326, %v318, 0
        %v335 = vand.u32 %v329, 4294901760
        %336 = vmatprep.subr.mxu0 %v335
        %v337 = vand.u32 %v327, 4294901760
        %338 = vmatpush1.msra.mxu0 %v337
        %339 = vmatprep.subr.mxu0 0.0
        %340 = vmatpush1.msra.mxu0 0.0
        %341 = vmatprep.subr.mxu0 0.0
        %342 = vmatpush1.msra.mxu0 0.0
        %343 = vmatprep.subr.mxu0 0.0
        %344 = vmatpush1.msra.mxu0 0.0
        %345 = vmatprep.subr.mxu0 0.0
        %346 = vmatpush1.msra.mxu0 0.0
        %347 = vmatprep.subr.mxu0 0.0
        %348 = vmatpush1.msra.mxu0 0.0
        %349 = vmatprep.subr.mxu0 0.0
        %350 = vmatpush1.msra.mxu0 0.0
        %351 = vmatprep.subr.mxu0 0.0
        %352 = vmatpush1.msra.mxu0 0.0
        %353 = vmatprep.subr.mxu0 0.0
        %354 = vmatpush1.msra.mxu0 0.0
        %355 = vmatprep.subr.mxu0 0.0
        %356 = vmatpush1.msra.mxu0 0.0
        %357 = vmatprep.subr.mxu0 0.0
        %358 = vmatpush1.msra.mxu0 0.0
        %359 = vmatprep.subr.mxu0 0.0
        %360 = vmatpush1.msra.mxu0 0.0
        %361 = vmatprep.subr.mxu0 0.0
        %362 = vmatpush1.msra.mxu0 0.0
        %363 = vmatprep.subr.mxu0 0.0
        %364 = vmatpush1.msra.mxu0 0.0
        %365 = vmatprep.subr.mxu0 0.0
        %366 = vmatpush1.msra.mxu0 0.0
        %367 = vmatprep.subr.mxu0 0.0
        %368 = vmatpush1.msra.mxu0 0.0
        %369 = vmatprep.subr.mxu0 0.0
        %370 = vmatpush1.msra.mxu0 0.0
        %371 = vmatprep.subr.mxu0 0.0
        %372 = vmatpush1.msra.mxu0 0.0
        %373 = vmatprep.subr.mxu0 0.0
        %374 = vmatpush1.msra.mxu0 0.0
        %375 = vmatprep.subr.mxu0 0.0
        %376 = vmatpush1.msra.mxu0 0.0
        %377 = vmatprep.subr.mxu0 0.0
        %378 = vmatpush1.msra.mxu0 0.0
        %379 = vmatprep.subr.mxu0 0.0
        %380 = vmatpush1.msra.mxu0 0.0
        %381 = vmatprep.subr.mxu0 0.0
        %382 = vmatpush1.msra.mxu0 0.0
        %383 = vmatprep.subr.mxu0 0.0
        %384 = vmatpush1.msra.mxu0 0.0
        %385 = vmatprep.subr.mxu0 0.0
        %386 = vmatpush1.msra.mxu0 0.0
        %387 = vmatprep.subr.mxu0 0.0
        %388 = vmatpush1.msra.mxu0 0.0
        %389 = vmatprep.subr.mxu0 0.0
        %390 = vmatpush1.msra.mxu0 0.0
        %391 = vmatprep.subr.mxu0 0.0
        %392 = vmatpush1.msra.mxu0 0.0
        %393 = vmatprep.subr.mxu0 0.0
        %394 = vmatpush1.msra.mxu0 0.0
        %395 = vmatprep.subr.mxu0 0.0
        %396 = vmatpush1.msra.mxu0 0.0
        %397 = vmatprep.subr.mxu0 0.0
        %398 = vmatpush1.msra.mxu0 0.0
        %399 = vmatprep.subr.mxu0 0.0
        %400 = vmatpush1.msra.mxu0 0.0
        %401 = vmatprep.mubr.f32.mxu0 0.0
        %v402 = vand.u32 %v321, 4294901760
        %v403 = vsub.f32 %v321, %v402
        %v404 = vand.u32 %v403, 4294901760
        %v405 = vsub.f32 %v403, %v404
        %v406 = vand.u32 %v405, 4294901760
        %407 = vmatmul.mubr.f32.gmra.mrb[0].mxu0 %v406
        %v408 = vpop.f32.mrb[0].mxu0
        %v409 = vadd.f32 %v294, %v408
        %v410 = vpop.f32.mrb[0].mxu0
        %v411 = vadd.f32 %v294, %v410
        %412 = vmatprep.mubr.f32.mxu0 0.0
        %v413 = vand.u32 %v324, 4294901760
        %v414 = vsub.f32 %v324, %v413
        %v415 = vand.u32 %v414, 4294901760
        %v416 = vsub.f32 %v414, %v415
        %v417 = vand.u32 %v416, 4294901760
        %418 = vmatmul.mubr.f32.gmra.mrb[0].mxu0 %v417
        %v419 = vpop.f32.mrb[0].mxu0
        %v420 = vadd.f32 %v299, %v419
        %v421 = vpop.f32.mrb[0].mxu0
        %v422 = vadd.f32 %v299, %v421
        %423 = vdwg.mxu0
        %v424 = vand.u32 %v329, 4294901760
        %v425 = vsub.f32 %v329, %v424
        %v426 = vand.u32 %v425, 4294901760
        %v427 = vsub.f32 %v425, %v426
        %v428 = vand.u32 %v427, 4294901760
        %429 = vmatprep.subr.mxu0 %v428
        %v430 = vand.u32 %v327, 4294901760
        %v431 = vsub.f32 %v327, %v430
        %v432 = vand.u32 %v431, 4294901760
        %v433 = vsub.f32 %v431, %v432
        %v434 = vand.u32 %v433, 4294901760
        %435 = vmatpush1.msra.mxu0 %v434
        %436 = vmatprep.subr.mxu0 0.0
        %437 = vmatpush1.msra.mxu0 0.0
        %438 = vmatprep.subr.mxu0 0.0
        %439 = vmatpush1.msra.mxu0 0.0
        %440 = vmatprep.subr.mxu0 0.0
        %441 = vmatpush1.msra.mxu0 0.0
        %442 = vmatprep.subr.mxu0 0.0
        %443 = vmatpush1.msra.mxu0 0.0
        %444 = vmatprep.subr.mxu0 0.0
        %445 = vmatpush1.msra.mxu0 0.0
        %446 = vmatprep.subr.mxu0 0.0
        %447 = vmatpush1.msra.mxu0 0.0
        %448 = vmatprep.subr.mxu0 0.0
        %449 = vmatpush1.msra.mxu0 0.0
        %450 = vmatprep.subr.mxu0 0.0
        %451 = vmatpush1.msra.mxu0 0.0
        %452 = vmatprep.subr.mxu0 0.0
        %453 = vmatpush1.msra.mxu0 0.0
        %454 = vmatprep.subr.mxu0 0.0
        %455 = vmatpush1.msra.mxu0 0.0
        %456 = vmatprep.subr.mxu0 0.0
        %457 = vmatpush1.msra.mxu0 0.0
        %458 = vmatprep.subr.mxu0 0.0
        %459 = vmatpush1.msra.mxu0 0.0
        %460 = vmatprep.subr.mxu0 0.0
        %461 = vmatpush1.msra.mxu0 0.0
        %462 = vmatprep.subr.mxu0 0.0
        %463 = vmatpush1.msra.mxu0 0.0
        %464 = vmatprep.subr.mxu0 0.0
        %465 = vmatpush1.msra.mxu0 0.0
        %466 = vmatprep.subr.mxu0 0.0
        %467 = vmatpush1.msra.mxu0 0.0
        %468 = vmatprep.subr.mxu0 0.0
        %469 = vmatpush1.msra.mxu0 0.0
        %470 = vmatprep.subr.mxu0 0.0
        %471 = vmatpush1.msra.mxu0 0.0
        %472 = vmatprep.subr.mxu0 0.0
        %473 = vmatpush1.msra.mxu0 0.0
        %474 = vmatprep.subr.mxu0 0.0
        %475 = vmatpush1.msra.mxu0 0.0
        %476 = vmatprep.subr.mxu0 0.0
        %477 = vmatpush1.msra.mxu0 0.0
        %478 = vmatprep.subr.mxu0 0.0
        %479 = vmatpush1.msra.mxu0 0.0
        %480 = vmatprep.subr.mxu0 0.0
        %481 = vmatpush1.msra.mxu0 0.0
        %482 = vmatprep.subr.mxu0 0.0
        %483 = vmatpush1.msra.mxu0 0.0
        %484 = vmatprep.subr.mxu0 0.0
        %485 = vmatpush1.msra.mxu0 0.0
        %486 = vmatprep.subr.mxu0 0.0
        %487 = vmatpush1.msra.mxu0 0.0
        %488 = vmatprep.subr.mxu0 0.0
        %489 = vmatpush1.msra.mxu0 0.0
        %490 = vmatprep.subr.mxu0 0.0
        %491 = vmatpush1.msra.mxu0 0.0
        %492 = vmatprep.subr.mxu0 0.0
        %493 = vmatpush1.msra.mxu0 0.0
        %494 = vmatprep.subr.mxu0 0.0
        %495 = vmatpush1.msra.mxu0 0.0
        %496 = vmatprep.subr.mxu0 0.0
        %497 = vmatpush1.msra.mxu0 0.0
        %498 = vmatprep.mubr.f32.mxu0 0.0
        %v499 = vand.u32 %v321, 4294901760
        %500 = vmatmul.mubr.f32.gmra.mrb[0].mxu0 %v499
        %v501 = vpop.f32.mrb[0].mxu0
        %v502 = vadd.f32 %v409, %v501
        %v503 = vpop.f32.mrb[0].mxu0
        %v504 = vadd.f32 %v411, %v503
        %505 = vmatprep.mubr.f32.mxu0 0.0
        %v506 = vand.u32 %v324, 4294901760
        %507 = vmatmul.mubr.f32.gmra.mrb[0].mxu0 %v506
        %v508 = vpop.f32.mrb[0].mxu0
        %v509 = vadd.f32 %v420, %v508
        %v510 = vpop.f32.mrb[0].mxu0
        %v511 = vadd.f32 %v422, %v510
        %512 = vdwg.mxu0
        %v513 = vand.u32 %v329, 4294901760
        %v514 = vsub.f32 %v329, %v513
        %515 = vmatprep.subr.mxu0 %v514
        %v516 = vand.u32 %v327, 4294901760
        %v517 = vsub.f32 %v327, %v516
        %518 = vmatpush1.msra.mxu0 %v517
        %519 = vmatprep.subr.mxu0 0.0
        %520 = vmatpush1.msra.mxu0 0.0
        %521 = vmatprep.subr.mxu0 0.0
        %522 = vmatpush1.msra.mxu0 0.0
        %523 = vmatprep.subr.mxu0 0.0
        %524 = vmatpush1.msra.mxu0 0.0
        %525 = vmatprep.subr.mxu0 0.0
        %526 = vmatpush1.msra.mxu0 0.0
        %527 = vmatprep.subr.mxu0 0.0
        %528 = vmatpush1.msra.mxu0 0.0
        %529 = vmatprep.subr.mxu0 0.0
        %530 = vmatpush1.msra.mxu0 0.0
        %531 = vmatprep.subr.mxu0 0.0
        %532 = vmatpush1.msra.mxu0 0.0
        %533 = vmatprep.subr.mxu0 0.0
        %534 = vmatpush1.msra.mxu0 0.0
        %535 = vmatprep.subr.mxu0 0.0
        %536 = vmatpush1.msra.mxu0 0.0
        %537 = vmatprep.subr.mxu0 0.0
        %538 = vmatpush1.msra.mxu0 0.0
        %539 = vmatprep.subr.mxu0 0.0
        %540 = vmatpush1.msra.mxu0 0.0
        %541 = vmatprep.subr.mxu0 0.0
        %542 = vmatpush1.msra.mxu0 0.0
        %543 = vmatprep.subr.mxu0 0.0
        %544 = vmatpush1.msra.mxu0 0.0
        %545 = vmatprep.subr.mxu0 0.0
        %546 = vmatpush1.msra.mxu0 0.0
        %547 = vmatprep.subr.mxu0 0.0
        %548 = vmatpush1.msra.mxu0 0.0
        %549 = vmatprep.subr.mxu0 0.0
        %550 = vmatpush1.msra.mxu0 0.0
        %551 = vmatprep.subr.mxu0 0.0
        %552 = vmatpush1.msra.mxu0 0.0
        %553 = vmatprep.subr.mxu0 0.0
        %554 = vmatpush1.msra.mxu0 0.0
        %555 = vmatprep.subr.mxu0 0.0
        %556 = vmatpush1.msra.mxu0 0.0
        %557 = vmatprep.subr.mxu0 0.0
        %558 = vmatpush1.msra.mxu0 0.0
        %559 = vmatprep.subr.mxu0 0.0
        %560 = vmatpush1.msra.mxu0 0.0
        %561 = vmatprep.subr.mxu0 0.0
        %562 = vmatpush1.msra.mxu0 0.0
        %563 = vmatprep.subr.mxu0 0.0
        %564 = vmatpush1.msra.mxu0 0.0
        %565 = vmatprep.subr.mxu0 0.0
        %566 = vmatpush1.msra.mxu0 0.0
        %567 = vmatprep.subr.mxu0 0.0
        %568 = vmatpush1.msra.mxu0 0.0
        %569 = vmatprep.subr.mxu0 0.0
        %570 = vmatpush1.msra.mxu0 0.0
        %571 = vmatprep.subr.mxu0 0.0
        %572 = vmatpush1.msra.mxu0 0.0
        %573 = vmatprep.subr.mxu0 0.0
        %574 = vmatpush1.msra.mxu0 0.0
        %575 = vmatprep.subr.mxu0 0.0
        %576 = vmatpush1.msra.mxu0 0.0
        %577 = vmatprep.subr.mxu0 0.0
        %578 = vmatpush1.msra.mxu0 0.0
        %579 = vmatprep.subr.mxu0 0.0
        %580 = vmatpush1.msra.mxu0 0.0
        %581 = vmatprep.mubr.f32.mxu0 0.0
        %v582 = vand.u32 %v321, 4294901760
        %v583 = vsub.f32 %v321, %v582
        %584 = vmatmul.mubr.f32.gmra.mrb[0].mxu0 %v583
        %v585 = vpop.f32.mrb[0].mxu0
        %v586 = vadd.f32 %v502, %v585
        %v587 = vpop.f32.mrb[0].mxu0
        %v588 = vadd.f32 %v504, %v587
        %589 = vmatprep.mubr.f32.mxu0 0.0
        %v590 = vand.u32 %v324, 4294901760
        %v591 = vsub.f32 %v324, %v590
        %592 = vmatmul.mubr.f32.gmra.mrb[0].mxu0 %v591
        %v593 = vpop.f32.mrb[0].mxu0
        %v594 = vadd.f32 %v509, %v593
        %v595 = vpop.f32.mrb[0].mxu0
        %v596 = vadd.f32 %v511, %v595
        %597 = vdwg.mxu0
        %v598 = vand.u32 %v329, 4294901760
        %599 = vmatprep.subr.mxu0 %v598
        %v600 = vand.u32 %v327, 4294901760
        %601 = vmatpush1.msra.mxu0 %v600
        %602 = vmatprep.subr.mxu0 0.0
        %603 = vmatpush1.msra.mxu0 0.0
        %604 = vmatprep.subr.mxu0 0.0
        %605 = vmatpush1.msra.mxu0 0.0
        %606 = vmatprep.subr.mxu0 0.0
        %607 = vmatpush1.msra.mxu0 0.0
        %608 = vmatprep.subr.mxu0 0.0
        %609 = vmatpush1.msra.mxu0 0.0
        %610 = vmatprep.subr.mxu0 0.0
        %611 = vmatpush1.msra.mxu0 0.0
        %612 = vmatprep.subr.mxu0 0.0
        %613 = vmatpush1.msra.mxu0 0.0
        %614 = vmatprep.subr.mxu0 0.0
        %615 = vmatpush1.msra.mxu0 0.0
        %616 = vmatprep.subr.mxu0 0.0
        %617 = vmatpush1.msra.mxu0 0.0
        %618 = vmatprep.subr.mxu0 0.0
        %619 = vmatpush1.msra.mxu0 0.0
        %620 = vmatprep.subr.mxu0 0.0
        %621 = vmatpush1.msra.mxu0 0.0
        %622 = vmatprep.subr.mxu0 0.0
        %623 = vmatpush1.msra.mxu0 0.0
        %624 = vmatprep.subr.mxu0 0.0
        %625 = vmatpush1.msra.mxu0 0.0
        %626 = vmatprep.subr.mxu0 0.0
        %627 = vmatpush1.msra.mxu0 0.0
        %628 = vmatprep.subr.mxu0 0.0
        %629 = vmatpush1.msra.mxu0 0.0
        %630 = vmatprep.subr.mxu0 0.0
        %631 = vmatpush1.msra.mxu0 0.0
        %632 = vmatprep.subr.mxu0 0.0
        %633 = vmatpush1.msra.mxu0 0.0
        %634 = vmatprep.subr.mxu0 0.0
        %635 = vmatpush1.msra.mxu0 0.0
        %636 = vmatprep.subr.mxu0 0.0
        %637 = vmatpush1.msra.mxu0 0.0
        %638 = vmatprep.subr.mxu0 0.0
        %639 = vmatpush1.msra.mxu0 0.0
        %640 = vmatprep.subr.mxu0 0.0
        %641 = vmatpush1.msra.mxu0 0.0
        %642 = vmatprep.subr.mxu0 0.0
        %643 = vmatpush1.msra.mxu0 0.0
        %644 = vmatprep.subr.mxu0 0.0
        %645 = vmatpush1.msra.mxu0 0.0
        %646 = vmatprep.subr.mxu0 0.0
        %647 = vmatpush1.msra.mxu0 0.0
        %648 = vmatprep.subr.mxu0 0.0
        %649 = vmatpush1.msra.mxu0 0.0
        %650 = vmatprep.subr.mxu0 0.0
        %651 = vmatpush1.msra.mxu0 0.0
        %652 = vmatprep.subr.mxu0 0.0
        %653 = vmatpush1.msra.mxu0 0.0
        %654 = vmatprep.subr.mxu0 0.0
        %655 = vmatpush1.msra.mxu0 0.0
        %656 = vmatprep.subr.mxu0 0.0
        %657 = vmatpush1.msra.mxu0 0.0
        %658 = vmatprep.subr.mxu0 0.0
        %659 = vmatpush1.msra.mxu0 0.0
        %660 = vmatprep.subr.mxu0 0.0
        %661 = vmatpush1.msra.mxu0 0.0
        %662 = vmatprep.subr.mxu0 0.0
        %663 = vmatpush1.msra.mxu0 0.0
        %664 = vmatprep.mubr.f32.mxu0 0.0
        %v665 = vand.u32 %v321, 4294901760
        %v666 = vsub.f32 %v321, %v665
        %v667 = vand.u32 %v666, 4294901760
        %668 = vmatmul.mubr.f32.gmra.mrb[0].mxu0 %v667
        %v669 = vpop.f32.mrb[0].mxu0
        %v670 = vadd.f32 %v586, %v669
        %v671 = vpop.f32.mrb[0].mxu0
        %v672 = vadd.f32 %v588, %v671
        %673 = vmatprep.mubr.f32.mxu0 0.0
        %v674 = vand.u32 %v324, 4294901760
        %v675 = vsub.f32 %v324, %v674
        %v676 = vand.u32 %v675, 4294901760
        %677 = vmatmul.mubr.f32.gmra.mrb[0].mxu0 %v676
        %v678 = vpop.f32.mrb[0].mxu0
        %v679 = vadd.f32 %v594, %v678
        %v680 = vpop.f32.mrb[0].mxu0
        %v681 = vadd.f32 %v596, %v680
        %682 = vdwg.mxu0
        %v683 = vand.u32 %v329, 4294901760
        %v684 = vsub.f32 %v329, %v683
        %v685 = vand.u32 %v684, 4294901760
        %686 = vmatprep.subr.mxu0 %v685
        %v687 = vand.u32 %v327, 4294901760
        %v688 = vsub.f32 %v327, %v687
        %v689 = vand.u32 %v688, 4294901760
        %690 = vmatpush1.msra.mxu0 %v689
        %691 = vmatprep.subr.mxu0 0.0
        %692 = vmatpush1.msra.mxu0 0.0
        %693 = vmatprep.subr.mxu0 0.0
        %694 = vmatpush1.msra.mxu0 0.0
        %695 = vmatprep.subr.mxu0 0.0
        %696 = vmatpush1.msra.mxu0 0.0
        %697 = vmatprep.subr.mxu0 0.0
        %698 = vmatpush1.msra.mxu0 0.0
        %699 = vmatprep.subr.mxu0 0.0
        %700 = vmatpush1.msra.mxu0 0.0
        %701 = vmatprep.subr.mxu0 0.0
        %702 = vmatpush1.msra.mxu0 0.0
        %703 = vmatprep.subr.mxu0 0.0
        %704 = vmatpush1.msra.mxu0 0.0
        %705 = vmatprep.subr.mxu0 0.0
        %706 = vmatpush1.msra.mxu0 0.0
        %707 = vmatprep.subr.mxu0 0.0
        %708 = vmatpush1.msra.mxu0 0.0
        %709 = vmatprep.subr.mxu0 0.0
        %710 = vmatpush1.msra.mxu0 0.0
        %711 = vmatprep.subr.mxu0 0.0
        %712 = vmatpush1.msra.mxu0 0.0
        %713 = vmatprep.subr.mxu0 0.0
        %714 = vmatpush1.msra.mxu0 0.0
        %715 = vmatprep.subr.mxu0 0.0
        %716 = vmatpush1.msra.mxu0 0.0
        %717 = vmatprep.subr.mxu0 0.0
        %718 = vmatpush1.msra.mxu0 0.0
        %719 = vmatprep.subr.mxu0 0.0
        %720 = vmatpush1.msra.mxu0 0.0
        %721 = vmatprep.subr.mxu0 0.0
        %722 = vmatpush1.msra.mxu0 0.0
        %723 = vmatprep.subr.mxu0 0.0
        %724 = vmatpush1.msra.mxu0 0.0
        %725 = vmatprep.subr.mxu0 0.0
        %726 = vmatpush1.msra.mxu0 0.0
        %727 = vmatprep.subr.mxu0 0.0
        %728 = vmatpush1.msra.mxu0 0.0
        %729 = vmatprep.subr.mxu0 0.0
        %730 = vmatpush1.msra.mxu0 0.0
        %731 = vmatprep.subr.mxu0 0.0
        %732 = vmatpush1.msra.mxu0 0.0
        %733 = vmatprep.subr.mxu0 0.0
        %734 = vmatpush1.msra.mxu0 0.0
        %735 = vmatprep.subr.mxu0 0.0
        %736 = vmatpush1.msra.mxu0 0.0
        %737 = vmatprep.subr.mxu0 0.0
        %738 = vmatpush1.msra.mxu0 0.0
        %739 = vmatprep.subr.mxu0 0.0
        %740 = vmatpush1.msra.mxu0 0.0
        %741 = vmatprep.subr.mxu0 0.0
        %742 = vmatpush1.msra.mxu0 0.0
        %743 = vmatprep.subr.mxu0 0.0
        %744 = vmatpush1.msra.mxu0 0.0
        %745 = vmatprep.subr.mxu0 0.0
        %746 = vmatpush1.msra.mxu0 0.0
        %747 = vmatprep.subr.mxu0 0.0
        %748 = vmatpush1.msra.mxu0 0.0
        %749 = vmatprep.subr.mxu0 0.0
        %750 = vmatpush1.msra.mxu0 0.0
        %751 = vmatprep.subr.mxu0 0.0
        %752 = vmatpush1.msra.mxu0 0.0
        %753 = vmatprep.mubr.f32.mxu0 0.0
        %v754 = vand.u32 %v321, 4294901760
        %755 = vmatmul.mubr.f32.gmra.mrb[0].mxu0 %v754
        %v756 = vpop.f32.mrb[0].mxu0
        %v757 = vadd.f32 %v670, %v756
        %v758 = vpop.f32.mrb[0].mxu0
        %v759 = vadd.f32 %v672, %v758
        %760 = vmatprep.mubr.f32.mxu0 0.0
        %v761 = vand.u32 %v324, 4294901760
        %762 = vmatmul.mubr.f32.gmra.mrb[0].mxu0 %v761
        %v763 = vpop.f32.mrb[0].mxu0
        %v764 = vadd.f32 %v679, %v763
        %v765 = vpop.f32.mrb[0].mxu0
        %v766 = vadd.f32 %v681, %v765
        %767 = vdwg.mxu0
        %v768 = vand.u32 %v329, 4294901760
        %769 = vmatprep.subr.mxu0 %v768
        %v770 = vand.u32 %v327, 4294901760
        %771 = vmatpush1.msra.mxu0 %v770
        %772 = vmatprep.subr.mxu0 0.0
        %773 = vmatpush1.msra.mxu0 0.0
        %774 = vmatprep.subr.mxu0 0.0
        %775 = vmatpush1.msra.mxu0 0.0
        %776 = vmatprep.subr.mxu0 0.0
        %777 = vmatpush1.msra.mxu0 0.0
        %778 = vmatprep.subr.mxu0 0.0
        %779 = vmatpush1.msra.mxu0 0.0
        %780 = vmatprep.subr.mxu0 0.0
        %781 = vmatpush1.msra.mxu0 0.0
        %782 = vmatprep.subr.mxu0 0.0
        %783 = vmatpush1.msra.mxu0 0.0
        %784 = vmatprep.subr.mxu0 0.0
        %785 = vmatpush1.msra.mxu0 0.0
        %786 = vmatprep.subr.mxu0 0.0
        %787 = vmatpush1.msra.mxu0 0.0
        %788 = vmatprep.subr.mxu0 0.0
        %789 = vmatpush1.msra.mxu0 0.0
        %790 = vmatprep.subr.mxu0 0.0
        %791 = vmatpush1.msra.mxu0 0.0
        %792 = vmatprep.subr.mxu0 0.0
        %793 = vmatpush1.msra.mxu0 0.0
        %794 = vmatprep.subr.mxu0 0.0
        %795 = vmatpush1.msra.mxu0 0.0
        %796 = vmatprep.subr.mxu0 0.0
        %797 = vmatpush1.msra.mxu0 0.0
        %798 = vmatprep.subr.mxu0 0.0
        %799 = vmatpush1.msra.mxu0 0.0
        %800 = vmatprep.subr.mxu0 0.0
        %801 = vmatpush1.msra.mxu0 0.0
        %802 = vmatprep.subr.mxu0 0.0
        %803 = vmatpush1.msra.mxu0 0.0
        %804 = vmatprep.subr.mxu0 0.0
        %805 = vmatpush1.msra.mxu0 0.0
        %806 = vmatprep.subr.mxu0 0.0
        %807 = vmatpush1.msra.mxu0 0.0
        %808 = vmatprep.subr.mxu0 0.0
        %809 = vmatpush1.msra.mxu0 0.0
        %810 = vmatprep.subr.mxu0 0.0
        %811 = vmatpush1.msra.mxu0 0.0
        %812 = vmatprep.subr.mxu0 0.0
        %813 = vmatpush1.msra.mxu0 0.0
        %814 = vmatprep.subr.mxu0 0.0
        %815 = vmatpush1.msra.mxu0 0.0
        %816 = vmatprep.subr.mxu0 0.0
        %817 = vmatpush1.msra.mxu0 0.0
        %818 = vmatprep.subr.mxu0 0.0
        %819 = vmatpush1.msra.mxu0 0.0
        %820 = vmatprep.subr.mxu0 0.0
        %821 = vmatpush1.msra.mxu0 0.0
        %822 = vmatprep.subr.mxu0 0.0
        %823 = vmatpush1.msra.mxu0 0.0
        %824 = vmatprep.subr.mxu0 0.0
        %825 = vmatpush1.msra.mxu0 0.0
        %826 = vmatprep.subr.mxu0 0.0
        %827 = vmatpush1.msra.mxu0 0.0
        %828 = vmatprep.subr.mxu0 0.0
        %829 = vmatpush1.msra.mxu0 0.0
        %830 = vmatprep.subr.mxu0 0.0
        %831 = vmatpush1.msra.mxu0 0.0
        %832 = vmatprep.subr.mxu0 0.0
        %833 = vmatpush1.msra.mxu0 0.0
        %834 = vmatprep.mubr.f32.mxu0 0.0
        %v835 = vand.u32 %v321, 4294901760
        %836 = vmatmul.mubr.f32.gmra.mrb[0].mxu0 %v835
        %v837 = vpop.f32.mrb[0].mxu0
        %v838 = vadd.f32 %v757, %v837
        %v839 = vpop.f32.mrb[0].mxu0
        %v840 = vadd.f32 %v759, %v839
        %841 = vmatprep.mubr.f32.mxu0 0.0
        %v842 = vand.u32 %v324, 4294901760
        %843 = vmatmul.mubr.f32.gmra.mrb[0].mxu0 %v842
        %v844 = vpop.f32.mrb[0].mxu0
        %v845 = vadd.f32 %v764, %v844
        %v846 = vpop.f32.mrb[0].mxu0
        %v847 = vadd.f32 %v766, %v846
        %848 = vdwg.mxu0
        %v849 = vand.u32 %v333, 4294901760
        %850 = vmatprep.subr.mxu0 %v849
        %v851 = vand.u32 %v331, 4294901760
        %852 = vmatpush1.msra.mxu0 %v851
        %853 = vmatprep.subr.mxu0 0.0
        %854 = vmatpush1.msra.mxu0 0.0
        %855 = vmatprep.subr.mxu0 0.0
        %856 = vmatpush1.msra.mxu0 0.0
        %857 = vmatprep.subr.mxu0 0.0
        %858 = vmatpush1.msra.mxu0 0.0
        %859 = vmatprep.subr.mxu0 0.0
        %860 = vmatpush1.msra.mxu0 0.0
        %861 = vmatprep.subr.mxu0 0.0
        %862 = vmatpush1.msra.mxu0 0.0
        %863 = vmatprep.subr.mxu0 0.0
        %864 = vmatpush1.msra.mxu0 0.0
        %865 = vmatprep.subr.mxu0 0.0
        %866 = vmatpush1.msra.mxu0 0.0
        %867 = vmatprep.subr.mxu0 0.0
        %868 = vmatpush1.msra.mxu0 0.0
        %869 = vmatprep.subr.mxu0 0.0
        %870 = vmatpush1.msra.mxu0 0.0
        %871 = vmatprep.subr.mxu0 0.0
        %872 = vmatpush1.msra.mxu0 0.0
        %873 = vmatprep.subr.mxu0 0.0
        %874 = vmatpush1.msra.mxu0 0.0
        %875 = vmatprep.subr.mxu0 0.0
        %876 = vmatpush1.msra.mxu0 0.0
        %877 = vmatprep.subr.mxu0 0.0
        %878 = vmatpush1.msra.mxu0 0.0
        %879 = vmatprep.subr.mxu0 0.0
        %880 = vmatpush1.msra.mxu0 0.0
        %881 = vmatprep.subr.mxu0 0.0
        %882 = vmatpush1.msra.mxu0 0.0
        %883 = vmatprep.subr.mxu0 0.0
        %884 = vmatpush1.msra.mxu0 0.0
        %885 = vmatprep.subr.mxu0 0.0
        %886 = vmatpush1.msra.mxu0 0.0
        %887 = vmatprep.subr.mxu0 0.0
        %888 = vmatpush1.msra.mxu0 0.0
        %889 = vmatprep.subr.mxu0 0.0
        %890 = vmatpush1.msra.mxu0 0.0
        %891 = vmatprep.subr.mxu0 0.0
        %892 = vmatpush1.msra.mxu0 0.0
        %893 = vmatprep.subr.mxu0 0.0
        %894 = vmatpush1.msra.mxu0 0.0
        %895 = vmatprep.subr.mxu0 0.0
        %896 = vmatpush1.msra.mxu0 0.0
        %897 = vmatprep.subr.mxu0 0.0
        %898 = vmatpush1.msra.mxu0 0.0
        %899 = vmatprep.subr.mxu0 0.0
        %900 = vmatpush1.msra.mxu0 0.0
        %901 = vmatprep.subr.mxu0 0.0
        %902 = vmatpush1.msra.mxu0 0.0
        %903 = vmatprep.subr.mxu0 0.0
        %904 = vmatpush1.msra.mxu0 0.0
        %905 = vmatprep.subr.mxu0 0.0
        %906 = vmatpush1.msra.mxu0 0.0
        %907 = vmatprep.subr.mxu0 0.0
        %908 = vmatpush1.msra.mxu0 0.0
        %909 = vmatprep.subr.mxu0 0.0
        %910 = vmatpush1.msra.mxu0 0.0
        %911 = vmatprep.subr.mxu0 0.0
        %912 = vmatpush1.msra.mxu0 0.0
        %913 = vmatprep.subr.mxu0 0.0
        %914 = vmatpush1.msra.mxu0 0.0
        %915 = vmatprep.mubr.f32.mxu0 0.0
        %v916 = vand.u32 %v321, 4294901760
        %v917 = vsub.f32 %v321, %v916
        %v918 = vand.u32 %v917, 4294901760
        %v919 = vsub.f32 %v917, %v918
        %v920 = vand.u32 %v919, 4294901760
        %921 = vmatmul.mubr.f32.gmra.mrb[0].mxu0 %v920
        %v922 = vpop.f32.mrb[0].mxu0
        %v923 = vadd.f32 %v294, %v922
        %v924 = vpop.f32.mrb[0].mxu0
        %v925 = vadd.f32 %v294, %v924
        %926 = vmatprep.mubr.f32.mxu0 0.0
        %v927 = vand.u32 %v324, 4294901760
        %v928 = vsub.f32 %v324, %v927
        %v929 = vand.u32 %v928, 4294901760
        %v930 = vsub.f32 %v928, %v929
        %v931 = vand.u32 %v930, 4294901760
        %932 = vmatmul.mubr.f32.gmra.mrb[0].mxu0 %v931
        %v933 = vpop.f32.mrb[0].mxu0
        %v934 = vadd.f32 %v299, %v933
        %v935 = vpop.f32.mrb[0].mxu0
        %v936 = vadd.f32 %v299, %v935
        %937 = vdwg.mxu0
        %v938 = vand.u32 %v333, 4294901760
        %v939 = vsub.f32 %v333, %v938
        %v940 = vand.u32 %v939, 4294901760
        %v941 = vsub.f32 %v939, %v940
        %v942 = vand.u32 %v941, 4294901760
        %943 = vmatprep.subr.mxu0 %v942
        %v944 = vand.u32 %v331, 4294901760
        %v945 = vsub.f32 %v331, %v944
        %v946 = vand.u32 %v945, 4294901760
        %v947 = vsub.f32 %v945, %v946
        %v948 = vand.u32 %v947, 4294901760
        %949 = vmatpush1.msra.mxu0 %v948
        %950 = vmatprep.subr.mxu0 0.0
        %951 = vmatpush1.msra.mxu0 0.0
        %952 = vmatprep.subr.mxu0 0.0
        %953 = vmatpush1.msra.mxu0 0.0
        %954 = vmatprep.subr.mxu0 0.0
        %955 = vmatpush1.msra.mxu0 0.0
        %956 = vmatprep.subr.mxu0 0.0
        %957 = vmatpush1.msra.mxu0 0.0
        %958 = vmatprep.subr.mxu0 0.0
        %959 = vmatpush1.msra.mxu0 0.0
        %960 = vmatprep.subr.mxu0 0.0
        %961 = vmatpush1.msra.mxu0 0.0
        %962 = vmatprep.subr.mxu0 0.0
        %963 = vmatpush1.msra.mxu0 0.0
        %964 = vmatprep.subr.mxu0 0.0
        %965 = vmatpush1.msra.mxu0 0.0
        %966 = vmatprep.subr.mxu0 0.0
        %967 = vmatpush1.msra.mxu0 0.0
        %968 = vmatprep.subr.mxu0 0.0
        %969 = vmatpush1.msra.mxu0 0.0
        %970 = vmatprep.subr.mxu0 0.0
        %971 = vmatpush1.msra.mxu0 0.0
        %972 = vmatprep.subr.mxu0 0.0
        %973 = vmatpush1.msra.mxu0 0.0
        %974 = vmatprep.subr.mxu0 0.0
        %975 = vmatpush1.msra.mxu0 0.0
        %976 = vmatprep.subr.mxu0 0.0
        %977 = vmatpush1.msra.mxu0 0.0
        %978 = vmatprep.subr.mxu0 0.0
        %979 = vmatpush1.msra.mxu0 0.0
        %980 = vmatprep.subr.mxu0 0.0
        %981 = vmatpush1.msra.mxu0 0.0
        %982 = vmatprep.subr.mxu0 0.0
        %983 = vmatpush1.msra.mxu0 0.0
        %984 = vmatprep.subr.mxu0 0.0
        %985 = vmatpush1.msra.mxu0 0.0
        %986 = vmatprep.subr.mxu0 0.0
        %987 = vmatpush1.msra.mxu0 0.0
        %988 = vmatprep.subr.mxu0 0.0
        %989 = vmatpush1.msra.mxu0 0.0
        %990 = vmatprep.subr.mxu0 0.0
        %991 = vmatpush1.msra.mxu0 0.0
        %992 = vmatprep.subr.mxu0 0.0
        %993 = vmatpush1.msra.mxu0 0.0
        %994 = vmatprep.subr.mxu0 0.0
        %995 = vmatpush1.msra.mxu0 0.0
        %996 = vmatprep.subr.mxu0 0.0
        %997 = vmatpush1.msra.mxu0 0.0
        %998 = vmatprep.subr.mxu0 0.0
        %999 = vmatpush1.msra.mxu0 0.0
        %1000 = vmatprep.subr.mxu0 0.0
        %1001 = vmatpush1.msra.mxu0 0.0
        %1002 = vmatprep.subr.mxu0 0.0
        %1003 = vmatpush1.msra.mxu0 0.0
        %1004 = vmatprep.subr.mxu0 0.0
        %1005 = vmatpush1.msra.mxu0 0.0
        %1006 = vmatprep.subr.mxu0 0.0
        %1007 = vmatpush1.msra.mxu0 0.0
        %1008 = vmatprep.subr.mxu0 0.0
        %1009 = vmatpush1.msra.mxu0 0.0
        %1010 = vmatprep.subr.mxu0 0.0
        %1011 = vmatpush1.msra.mxu0 0.0
        %1012 = vmatprep.mubr.f32.mxu0 0.0
        %v1013 = vand.u32 %v321, 4294901760
        %1014 = vmatmul.mubr.f32.gmra.mrb[0].mxu0 %v1013
        %v1015 = vpop.f32.mrb[0].mxu0
        %v1016 = vadd.f32 %v923, %v1015
        %v1017 = vpop.f32.mrb[0].mxu0
        %v1018 = vadd.f32 %v925, %v1017
        %1019 = vmatprep.mubr.f32.mxu0 0.0
        %v1020 = vand.u32 %v324, 4294901760
        %1021 = vmatmul.mubr.f32.gmra.mrb[0].mxu0 %v1020
        %v1022 = vpop.f32.mrb[0].mxu0
        %v1023 = vadd.f32 %v934, %v1022
        %v1024 = vpop.f32.mrb[0].mxu0
        %v1025 = vadd.f32 %v936, %v1024
        %1026 = vdwg.mxu0
        %v1027 = vand.u32 %v333, 4294901760
        %v1028 = vsub.f32 %v333, %v1027
        %1029 = vmatprep.subr.mxu0 %v1028
        %v1030 = vand.u32 %v331, 4294901760
        %v1031 = vsub.f32 %v331, %v1030
        %1032 = vmatpush1.msra.mxu0 %v1031
        %1033 = vmatprep.subr.mxu0 0.0
        %1034 = vmatpush1.msra.mxu0 0.0
        %1035 = vmatprep.subr.mxu0 0.0
        %1036 = vmatpush1.msra.mxu0 0.0
        %1037 = vmatprep.subr.mxu0 0.0
        %1038 = vmatpush1.msra.mxu0 0.0
        %1039 = vmatprep.subr.mxu0 0.0
        %1040 = vmatpush1.msra.mxu0 0.0
        %1041 = vmatprep.subr.mxu0 0.0
        %1042 = vmatpush1.msra.mxu0 0.0
        %1043 = vmatprep.subr.mxu0 0.0
        %1044 = vmatpush1.msra.mxu0 0.0
        %1045 = vmatprep.subr.mxu0 0.0
        %1046 = vmatpush1.msra.mxu0 0.0
        %1047 = vmatprep.subr.mxu0 0.0
        %1048 = vmatpush1.msra.mxu0 0.0
        %1049 = vmatprep.subr.mxu0 0.0
        %1050 = vmatpush1.msra.mxu0 0.0
        %1051 = vmatprep.subr.mxu0 0.0
        %1052 = vmatpush1.msra.mxu0 0.0
        %1053 = vmatprep.subr.mxu0 0.0
        %1054 = vmatpush1.msra.mxu0 0.0
        %1055 = vmatprep.subr.mxu0 0.0
        %1056 = vmatpush1.msra.mxu0 0.0
        %1057 = vmatprep.subr.mxu0 0.0
        %1058 = vmatpush1.msra.mxu0 0.0
        %1059 = vmatprep.subr.mxu0 0.0
        %1060 = vmatpush1.msra.mxu0 0.0
        %1061 = vmatprep.subr.mxu0 0.0
        %1062 = vmatpush1.msra.mxu0 0.0
        %1063 = vmatprep.subr.mxu0 0.0
        %1064 = vmatpush1.msra.mxu0 0.0
        %1065 = vmatprep.subr.mxu0 0.0
        %1066 = vmatpush1.msra.mxu0 0.0
        %1067 = vmatprep.subr.mxu0 0.0
        %1068 = vmatpush1.msra.mxu0 0.0
        %1069 = vmatprep.subr.mxu0 0.0
        %1070 = vmatpush1.msra.mxu0 0.0
        %1071 = vmatprep.subr.mxu0 0.0
        %1072 = vmatpush1.msra.mxu0 0.0
        %1073 = vmatprep.subr.mxu0 0.0
        %1074 = vmatpush1.msra.mxu0 0.0
        %1075 = vmatprep.subr.mxu0 0.0
        %1076 = vmatpush1.msra.mxu0 0.0
        %1077 = vmatprep.subr.mxu0 0.0
        %1078 = vmatpush1.msra.mxu0 0.0
        %1079 = vmatprep.subr.mxu0 0.0
        %1080 = vmatpush1.msra.mxu0 0.0
        %1081 = vmatprep.subr.mxu0 0.0
        %1082 = vmatpush1.msra.mxu0 0.0
        %1083 = vmatprep.subr.mxu0 0.0
        %1084 = vmatpush1.msra.mxu0 0.0
        %1085 = vmatprep.subr.mxu0 0.0
        %1086 = vmatpush1.msra.mxu0 0.0
        %1087 = vmatprep.subr.mxu0 0.0
        %1088 = vmatpush1.msra.mxu0 0.0
        %1089 = vmatprep.subr.mxu0 0.0
        %1090 = vmatpush1.msra.mxu0 0.0
        %1091 = vmatprep.subr.mxu0 0.0
        %1092 = vmatpush1.msra.mxu0 0.0
        %1093 = vmatprep.subr.mxu0 0.0
        %1094 = vmatpush1.msra.mxu0 0.0
        %1095 = vmatprep.mubr.f32.mxu0 0.0
        %v1096 = vand.u32 %v321, 4294901760
        %v1097 = vsub.f32 %v321, %v1096
        %1098 = vmatmul.mubr.f32.gmra.mrb[0].mxu0 %v1097
        %v1099 = vpop.f32.mrb[0].mxu0
        %v1100 = vadd.f32 %v1016, %v1099
        %v1101 = vpop.f32.mrb[0].mxu0
        %v1102 = vadd.f32 %v1018, %v1101
        %1103 = vmatprep.mubr.f32.mxu0 0.0
        %v1104 = vand.u32 %v324, 4294901760
        %v1105 = vsub.f32 %v324, %v1104
        %1106 = vmatmul.mubr.f32.gmra.mrb[0].mxu0 %v1105
        %v1107 = vpop.f32.mrb[0].mxu0
        %v1108 = vadd.f32 %v1023, %v1107
        %v1109 = vpop.f32.mrb[0].mxu0
        %v1110 = vadd.f32 %v1025, %v1109
        %1111 = vdwg.mxu0
        %v1112 = vand.u32 %v333, 4294901760
        %1113 = vmatprep.subr.mxu0 %v1112
        %v1114 = vand.u32 %v331, 4294901760
        %1115 = vmatpush1.msra.mxu0 %v1114
        %1116 = vmatprep.subr.mxu0 0.0
        %1117 = vmatpush1.msra.mxu0 0.0
        %1118 = vmatprep.subr.mxu0 0.0
        %1119 = vmatpush1.msra.mxu0 0.0
        %1120 = vmatprep.subr.mxu0 0.0
        %1121 = vmatpush1.msra.mxu0 0.0
        %1122 = vmatprep.subr.mxu0 0.0
        %1123 = vmatpush1.msra.mxu0 0.0
        %1124 = vmatprep.subr.mxu0 0.0
        %1125 = vmatpush1.msra.mxu0 0.0
        %1126 = vmatprep.subr.mxu0 0.0
        %1127 = vmatpush1.msra.mxu0 0.0
        %1128 = vmatprep.subr.mxu0 0.0
        %1129 = vmatpush1.msra.mxu0 0.0
        %1130 = vmatprep.subr.mxu0 0.0
        %1131 = vmatpush1.msra.mxu0 0.0
        %1132 = vmatprep.subr.mxu0 0.0
        %1133 = vmatpush1.msra.mxu0 0.0
        %1134 = vmatprep.subr.mxu0 0.0
        %1135 = vmatpush1.msra.mxu0 0.0
        %1136 = vmatprep.subr.mxu0 0.0
        %1137 = vmatpush1.msra.mxu0 0.0
        %1138 = vmatprep.subr.mxu0 0.0
        %1139 = vmatpush1.msra.mxu0 0.0
        %1140 = vmatprep.subr.mxu0 0.0
        %1141 = vmatpush1.msra.mxu0 0.0
        %1142 = vmatprep.subr.mxu0 0.0
        %1143 = vmatpush1.msra.mxu0 0.0
        %1144 = vmatprep.subr.mxu0 0.0
        %1145 = vmatpush1.msra.mxu0 0.0
        %1146 = vmatprep.subr.mxu0 0.0
        %1147 = vmatpush1.msra.mxu0 0.0
        %1148 = vmatprep.subr.mxu0 0.0
        %1149 = vmatpush1.msra.mxu0 0.0
        %1150 = vmatprep.subr.mxu0 0.0
        %1151 = vmatpush1.msra.mxu0 0.0
        %1152 = vmatprep.subr.mxu0 0.0
        %1153 = vmatpush1.msra.mxu0 0.0
        %1154 = vmatprep.subr.mxu0 0.0
        %1155 = vmatpush1.msra.mxu0 0.0
        %1156 = vmatprep.subr.mxu0 0.0
        %1157 = vmatpush1.msra.mxu0 0.0
        %1158 = vmatprep.subr.mxu0 0.0
        %1159 = vmatpush1.msra.mxu0 0.0
        %1160 = vmatprep.subr.mxu0 0.0
        %1161 = vmatpush1.msra.mxu0 0.0
        %1162 = vmatprep.subr.mxu0 0.0
        %1163 = vmatpush1.msra.mxu0 0.0
        %1164 = vmatprep.subr.mxu0 0.0
        %1165 = vmatpush1.msra.mxu0 0.0
        %1166 = vmatprep.subr.mxu0 0.0
        %1167 = vmatpush1.msra.mxu0 0.0
        %1168 = vmatprep.subr.mxu0 0.0
        %1169 = vmatpush1.msra.mxu0 0.0
        %1170 = vmatprep.subr.mxu0 0.0
        %1171 = vmatpush1.msra.mxu0 0.0
        %1172 = vmatprep.subr.mxu0 0.0
        %1173 = vmatpush1.msra.mxu0 0.0
        %1174 = vmatprep.subr.mxu0 0.0
        %1175 = vmatpush1.msra.mxu0 0.0
        %1176 = vmatprep.subr.mxu0 0.0
        %1177 = vmatpush1.msra.mxu0 0.0
        %1178 = vmatprep.mubr.f32.mxu0 0.0
        %v1179 = vand.u32 %v321, 4294901760
        %v1180 = vsub.f32 %v321, %v1179
        %v1181 = vand.u32 %v1180, 4294901760
        %1182 = vmatmul.mubr.f32.gmra.mrb[0].mxu0 %v1181
        %v1183 = vpop.f32.mrb[0].mxu0
        %v1184 = vadd.f32 %v1100, %v1183
        %v1185 = vpop.f32.mrb[0].mxu0
        %v1186 = vadd.f32 %v1102, %v1185
        %1187 = vmatprep.mubr.f32.mxu0 0.0
        %v1188 = vand.u32 %v324, 4294901760
        %v1189 = vsub.f32 %v324, %v1188
        %v1190 = vand.u32 %v1189, 4294901760
        %1191 = vmatmul.mubr.f32.gmra.mrb[0].mxu0 %v1190
        %v1192 = vpop.f32.mrb[0].mxu0
        %v1193 = vadd.f32 %v1108, %v1192
        %v1194 = vpop.f32.mrb[0].mxu0
        %v1195 = vadd.f32 %v1110, %v1194
        %1196 = vdwg.mxu0
        %v1197 = vand.u32 %v333, 4294901760
        %v1198 = vsub.f32 %v333, %v1197
        %v1199 = vand.u32 %v1198, 4294901760
        %1200 = vmatprep.subr.mxu0 %v1199
        %v1201 = vand.u32 %v331, 4294901760
        %v1202 = vsub.f32 %v331, %v1201
        %v1203 = vand.u32 %v1202, 4294901760
        %1204 = vmatpush1.msra.mxu0 %v1203
        %1205 = vmatprep.subr.mxu0 0.0
        %1206 = vmatpush1.msra.mxu0 0.0
        %1207 = vmatprep.subr.mxu0 0.0
        %1208 = vmatpush1.msra.mxu0 0.0
        %1209 = vmatprep.subr.mxu0 0.0
        %1210 = vmatpush1.msra.mxu0 0.0
        %1211 = vmatprep.subr.mxu0 0.0
        %1212 = vmatpush1.msra.mxu0 0.0
        %1213 = vmatprep.subr.mxu0 0.0
        %1214 = vmatpush1.msra.mxu0 0.0
        %1215 = vmatprep.subr.mxu0 0.0
        %1216 = vmatpush1.msra.mxu0 0.0
        %1217 = vmatprep.subr.mxu0 0.0
        %1218 = vmatpush1.msra.mxu0 0.0
        %1219 = vmatprep.subr.mxu0 0.0
        %1220 = vmatpush1.msra.mxu0 0.0
        %1221 = vmatprep.subr.mxu0 0.0
        %1222 = vmatpush1.msra.mxu0 0.0
        %1223 = vmatprep.subr.mxu0 0.0
        %1224 = vmatpush1.msra.mxu0 0.0
        %1225 = vmatprep.subr.mxu0 0.0
        %1226 = vmatpush1.msra.mxu0 0.0
        %1227 = vmatprep.subr.mxu0 0.0
        %1228 = vmatpush1.msra.mxu0 0.0
        %1229 = vmatprep.subr.mxu0 0.0
        %1230 = vmatpush1.msra.mxu0 0.0
        %1231 = vmatprep.subr.mxu0 0.0
        %1232 = vmatpush1.msra.mxu0 0.0
        %1233 = vmatprep.subr.mxu0 0.0
        %1234 = vmatpush1.msra.mxu0 0.0
        %1235 = vmatprep.subr.mxu0 0.0
        %1236 = vmatpush1.msra.mxu0 0.0
        %1237 = vmatprep.subr.mxu0 0.0
        %1238 = vmatpush1.msra.mxu0 0.0
        %1239 = vmatprep.subr.mxu0 0.0
        %1240 = vmatpush1.msra.mxu0 0.0
        %1241 = vmatprep.subr.mxu0 0.0
        %1242 = vmatpush1.msra.mxu0 0.0
        %1243 = vmatprep.subr.mxu0 0.0
        %1244 = vmatpush1.msra.mxu0 0.0
        %1245 = vmatprep.subr.mxu0 0.0
        %1246 = vmatpush1.msra.mxu0 0.0
        %1247 = vmatprep.subr.mxu0 0.0
        %1248 = vmatpush1.msra.mxu0 0.0
        %1249 = vmatprep.subr.mxu0 0.0
        %1250 = vmatpush1.msra.mxu0 0.0
        %1251 = vmatprep.subr.mxu0 0.0
        %1252 = vmatpush1.msra.mxu0 0.0
        %1253 = vmatprep.subr.mxu0 0.0
        %1254 = vmatpush1.msra.mxu0 0.0
        %1255 = vmatprep.subr.mxu0 0.0
        %1256 = vmatpush1.msra.mxu0 0.0
        %1257 = vmatprep.subr.mxu0 0.0
        %1258 = vmatpush1.msra.mxu0 0.0
        %1259 = vmatprep.subr.mxu0 0.0
        %1260 = vmatpush1.msra.mxu0 0.0
        %1261 = vmatprep.subr.mxu0 0.0
        %1262 = vmatpush1.msra.mxu0 0.0
        %1263 = vmatprep.subr.mxu0 0.0
        %1264 = vmatpush1.msra.mxu0 0.0
        %1265 = vmatprep.subr.mxu0 0.0
        %1266 = vmatpush1.msra.mxu0 0.0
        %1267 = vmatprep.mubr.f32.mxu0 0.0
        %v1268 = vand.u32 %v321, 4294901760
        %1269 = vmatmul.mubr.f32.gmra.mrb[0].mxu0 %v1268
        %v1270 = vpop.f32.mrb[0].mxu0
        %v1271 = vadd.f32 %v1184, %v1270
        %v1272 = vpop.f32.mrb[0].mxu0
        %v1273 = vadd.f32 %v1186, %v1272
        %1274 = vmatprep.mubr.f32.mxu0 0.0
        %v1275 = vand.u32 %v324, 4294901760
        %1276 = vmatmul.mubr.f32.gmra.mrb[0].mxu0 %v1275
        %v1277 = vpop.f32.mrb[0].mxu0
        %v1278 = vadd.f32 %v1193, %v1277
        %v1279 = vpop.f32.mrb[0].mxu0
        %v1280 = vadd.f32 %v1195, %v1279
        %1281 = vdwg.mxu0
        %v1282 = vand.u32 %v333, 4294901760
        %1283 = vmatprep.subr.mxu0 %v1282
        %v1284 = vand.u32 %v331, 4294901760
        %1285 = vmatpush1.msra.mxu0 %v1284
        %1286 = vmatprep.subr.mxu0 0.0
        %1287 = vmatpush1.msra.mxu0 0.0
        %1288 = vmatprep.subr.mxu0 0.0
        %1289 = vmatpush1.msra.mxu0 0.0
        %1290 = vmatprep.subr.mxu0 0.0
        %1291 = vmatpush1.msra.mxu0 0.0
        %1292 = vmatprep.subr.mxu0 0.0
        %1293 = vmatpush1.msra.mxu0 0.0
        %1294 = vmatprep.subr.mxu0 0.0
        %1295 = vmatpush1.msra.mxu0 0.0
        %1296 = vmatprep.subr.mxu0 0.0
        %1297 = vmatpush1.msra.mxu0 0.0
        %1298 = vmatprep.subr.mxu0 0.0
        %1299 = vmatpush1.msra.mxu0 0.0
        %1300 = vmatprep.subr.mxu0 0.0
        %1301 = vmatpush1.msra.mxu0 0.0
        %1302 = vmatprep.subr.mxu0 0.0
        %1303 = vmatpush1.msra.mxu0 0.0
        %1304 = vmatprep.subr.mxu0 0.0
        %1305 = vmatpush1.msra.mxu0 0.0
        %1306 = vmatprep.subr.mxu0 0.0
        %1307 = vmatpush1.msra.mxu0 0.0
        %1308 = vmatprep.subr.mxu0 0.0
        %1309 = vmatpush1.msra.mxu0 0.0
        %1310 = vmatprep.subr.mxu0 0.0
        %1311 = vmatpush1.msra.mxu0 0.0
        %1312 = vmatprep.subr.mxu0 0.0
        %1313 = vmatpush1.msra.mxu0 0.0
        %1314 = vmatprep.subr.mxu0 0.0
        %1315 = vmatpush1.msra.mxu0 0.0
        %1316 = vmatprep.subr.mxu0 0.0
        %1317 = vmatpush1.msra.mxu0 0.0
        %1318 = vmatprep.subr.mxu0 0.0
        %1319 = vmatpush1.msra.mxu0 0.0
        %1320 = vmatprep.subr.mxu0 0.0
        %1321 = vmatpush1.msra.mxu0 0.0
        %1322 = vmatprep.subr.mxu0 0.0
        %1323 = vmatpush1.msra.mxu0 0.0
        %1324 = vmatprep.subr.mxu0 0.0
        %1325 = vmatpush1.msra.mxu0 0.0
        %1326 = vmatprep.subr.mxu0 0.0
        %1327 = vmatpush1.msra.mxu0 0.0
        %1328 = vmatprep.subr.mxu0 0.0
        %1329 = vmatpush1.msra.mxu0 0.0
        %1330 = vmatprep.subr.mxu0 0.0
        %1331 = vmatpush1.msra.mxu0 0.0
        %1332 = vmatprep.subr.mxu0 0.0
        %1333 = vmatpush1.msra.mxu0 0.0
        %1334 = vmatprep.subr.mxu0 0.0
        %1335 = vmatpush1.msra.mxu0 0.0
        %1336 = vmatprep.subr.mxu0 0.0
        %1337 = vmatpush1.msra.mxu0 0.0
        %1338 = vmatprep.subr.mxu0 0.0
        %1339 = vmatpush1.msra.mxu0 0.0
        %1340 = vmatprep.subr.mxu0 0.0
        %1341 = vmatpush1.msra.mxu0 0.0
        %1342 = vmatprep.subr.mxu0 0.0
        %1343 = vmatpush1.msra.mxu0 0.0
        %1344 = vmatprep.subr.mxu0 0.0
        %1345 = vmatpush1.msra.mxu0 0.0
        %1346 = vmatprep.subr.mxu0 0.0
        %1347 = vmatpush1.msra.mxu0 0.0
        %1348 = vmatprep.mubr.f32.mxu0 0.0
        %v1349 = vand.u32 %v321, 4294901760
        %1350 = vmatmul.mubr.f32.gmra.mrb[0].mxu0 %v1349
        %v1351 = vpop.f32.mrb[0].mxu0
        %v1352 = vadd.f32 %v1271, %v1351
        %v1353 = vpop.f32.mrb[0].mxu0
        %v1354 = vadd.f32 %v1273, %v1353
        %1355 = vmatprep.mubr.f32.mxu0 0.0
        %v1356 = vand.u32 %v324, 4294901760
        %1357 = vmatmul.mubr.f32.gmra.mrb[0].mxu0 %v1356
        %v1358 = vpop.f32.mrb[0].mxu0
        %v1359 = vadd.f32 %v1278, %v1358
        %v1360 = vpop.f32.mrb[0].mxu0
        %v1361 = vadd.f32 %v1280, %v1360
        %1362 = vdwg.mxu0
        %v1363 = vmax.f32 %v838, 0.0
        %v1364 = vmax.f32 %v840, 0.0
        %v1365 = vmax.f32 %v1352, 0.0
        %v1366 = vmax.f32 %v1354, 0.0
        %v1367 = vmax.f32 %v845, 0.0
        %v1368 = vmax.f32 %v847, 0.0
        %v1369 = vmax.f32 %v1359, 0.0
        %v1370 = vmax.f32 %v1361, 0.0
        %1372 = vset.pattern.permute.xlu0 0
        %1373 = vperm.xlu0 %1372, %v286
        %v1374 = vpop.permute.xlu0 %1373
        %1377 = vset.pattern.permute.xlu0 0
        %1378 = vperm.xlu0 %1377, %v287
        %v1379 = vpop.permute.xlu0 %1378
        %vm1381 = vcmask 130048
        %v1383 = vsel %vm1381, %v284, 0
        %v1386 = vsel %vm1381, %v285, 0
        %v1388 = vand.u32 %v1364, 4294901760
        %1389 = vmatprep.subr.mxu0 %v1388
        %v1390 = vand.u32 %v1363, 4294901760
        %1391 = vmatpush1.msra.mxu0 %v1390
        %v1392 = vand.u32 %v1368, 4294901760
        %1393 = vmatprep.subr.mxu0 %v1392
        %v1394 = vand.u32 %v1367, 4294901760
        %1395 = vmatpush1.msra.mxu0 %v1394
        %1396 = vmatprep.subr.mxu0 0.0
        %1397 = vmatpush1.msra.mxu0 0.0
        %1398 = vmatprep.subr.mxu0 0.0
        %1399 = vmatpush1.msra.mxu0 0.0
        %1400 = vmatprep.subr.mxu0 0.0
        %1401 = vmatpush1.msra.mxu0 0.0
        %1402 = vmatprep.subr.mxu0 0.0
        %1403 = vmatpush1.msra.mxu0 0.0
        %1404 = vmatprep.subr.mxu0 0.0
        %1405 = vmatpush1.msra.mxu0 0.0
        %1406 = vmatprep.subr.mxu0 0.0
        %1407 = vmatpush1.msra.mxu0 0.0
        %1408 = vmatprep.subr.mxu0 0.0
        %1409 = vmatpush1.msra.mxu0 0.0
        %1410 = vmatprep.subr.mxu0 0.0
        %1411 = vmatpush1.msra.mxu0 0.0
        %1412 = vmatprep.subr.mxu0 0.0
        %1413 = vmatpush1.msra.mxu0 0.0
        %1414 = vmatprep.subr.mxu0 0.0
        %1415 = vmatpush1.msra.mxu0 0.0
        %1416 = vmatprep.subr.mxu0 0.0
        %1417 = vmatpush1.msra.mxu0 0.0
        %1418 = vmatprep.subr.mxu0 0.0
        %1419 = vmatpush1.msra.mxu0 0.0
        %1420 = vmatprep.subr.mxu0 0.0
        %1421 = vmatpush1.msra.mxu0 0.0
        %1422 = vmatprep.subr.mxu0 0.0
        %1423 = vmatpush1.msra.mxu0 0.0
        %1424 = vmatprep.subr.mxu0 0.0
        %1425 = vmatpush1.msra.mxu0 0.0
        %1426 = vmatprep.subr.mxu0 0.0
        %1427 = vmatpush1.msra.mxu0 0.0
        %1428 = vmatprep.subr.mxu0 0.0
        %1429 = vmatpush1.msra.mxu0 0.0
        %1430 = vmatprep.subr.mxu0 0.0
        %1431 = vmatpush1.msra.mxu0 0.0
        %1432 = vmatprep.subr.mxu0 0.0
        %1433 = vmatpush1.msra.mxu0 0.0
        %1434 = vmatprep.subr.mxu0 0.0
        %1435 = vmatpush1.msra.mxu0 0.0
        %1436 = vmatprep.subr.mxu0 0.0
        %1437 = vmatpush1.msra.mxu0 0.0
        %1438 = vmatprep.subr.mxu0 0.0
        %1439 = vmatpush1.msra.mxu0 0.0
        %1440 = vmatprep.subr.mxu0 0.0
        %1441 = vmatpush1.msra.mxu0 0.0
        %1442 = vmatprep.subr.mxu0 0.0
        %1443 = vmatpush1.msra.mxu0 0.0
        %1444 = vmatprep.subr.mxu0 0.0
        %1445 = vmatpush1.msra.mxu0 0.0
        %1446 = vmatprep.subr.mxu0 0.0
        %1447 = vmatpush1.msra.mxu0 0.0
        %1448 = vmatprep.subr.mxu0 0.0
        %1449 = vmatpush1.msra.mxu0 0.0
        %1450 = vmatprep.subr.mxu0 0.0
        %1451 = vmatpush1.msra.mxu0 0.0
        %1452 = vmatprep.subr.mxu0 0.0
        %1453 = vmatpush1.msra.mxu0 0.0
        %1454 = vmatprep.subr.mxu0 0.0
        %1455 = vmatpush1.msra.mxu0 0.0
        %1456 = vmatprep.mubr.f32.mxu0 0.0
        %v1457 = vand.u32 %v1383, 4294901760
        %v1458 = vsub.f32 %v1383, %v1457
        %v1459 = vand.u32 %v1458, 4294901760
        %v1460 = vsub.f32 %v1458, %v1459
        %v1461 = vand.u32 %v1460, 4294901760
        %1462 = vmatmul.mubr.f32.gmra.mrb[0].mxu0 %v1461
        %v1463 = vpop.f32.mrb[0].mxu0
        %v1464 = vadd.f32 %v1374, %v1463
        %v1465 = vpop.f32.mrb[0].mxu0
        %v1466 = vadd.f32 %v1374, %v1465
        %1467 = vmatprep.mubr.f32.mxu0 0.0
        %v1468 = vand.u32 %v1386, 4294901760
        %v1469 = vsub.f32 %v1386, %v1468
        %v1470 = vand.u32 %v1469, 4294901760
        %v1471 = vsub.f32 %v1469, %v1470
        %v1472 = vand.u32 %v1471, 4294901760
        %1473 = vmatmul.mubr.f32.gmra.mrb[0].mxu0 %v1472
        %v1474 = vpop.f32.mrb[0].mxu0
        %v1475 = vadd.f32 %v1379, %v1474
        %v1476 = vpop.f32.mrb[0].mxu0
        %v1477 = vadd.f32 %v1379, %v1476
        %1478 = vdwg.mxu0
        %v1479 = vand.u32 %v1364, 4294901760
        %v1480 = vsub.f32 %v1364, %v1479
        %v1481 = vand.u32 %v1480, 4294901760
        %v1482 = vsub.f32 %v1480, %v1481
        %v1483 = vand.u32 %v1482, 4294901760
        %1484 = vmatprep.subr.mxu0 %v1483
        %v1485 = vand.u32 %v1363, 4294901760
        %v1486 = vsub.f32 %v1363, %v1485
        %v1487 = vand.u32 %v1486, 4294901760
        %v1488 = vsub.f32 %v1486, %v1487
        %v1489 = vand.u32 %v1488, 4294901760
        %1490 = vmatpush1.msra.mxu0 %v1489
        %v1491 = vand.u32 %v1368, 4294901760
        %v1492 = vsub.f32 %v1368, %v1491
        %v1493 = vand.u32 %v1492, 4294901760
        %v1494 = vsub.f32 %v1492, %v1493
        %v1495 = vand.u32 %v1494, 4294901760
        %1496 = vmatprep.subr.mxu0 %v1495
        %v1497 = vand.u32 %v1367, 4294901760
        %v1498 = vsub.f32 %v1367, %v1497
        %v1499 = vand.u32 %v1498, 4294901760
        %v1500 = vsub.f32 %v1498, %v1499
        %v1501 = vand.u32 %v1500, 4294901760
        %1502 = vmatpush1.msra.mxu0 %v1501
        %1503 = vmatprep.subr.mxu0 0.0
        %1504 = vmatpush1.msra.mxu0 0.0
        %1505 = vmatprep.subr.mxu0 0.0
        %1506 = vmatpush1.msra.mxu0 0.0
        %1507 = vmatprep.subr.mxu0 0.0
        %1508 = vmatpush1.msra.mxu0 0.0
        %1509 = vmatprep.subr.mxu0 0.0
        %1510 = vmatpush1.msra.mxu0 0.0
        %1511 = vmatprep.subr.mxu0 0.0
        %1512 = vmatpush1.msra.mxu0 0.0
        %1513 = vmatprep.subr.mxu0 0.0
        %1514 = vmatpush1.msra.mxu0 0.0
        %1515 = vmatprep.subr.mxu0 0.0
        %1516 = vmatpush1.msra.mxu0 0.0
        %1517 = vmatprep.subr.mxu0 0.0
        %1518 = vmatpush1.msra.mxu0 0.0
        %1519 = vmatprep.subr.mxu0 0.0
        %1520 = vmatpush1.msra.mxu0 0.0
        %1521 = vmatprep.subr.mxu0 0.0
        %1522 = vmatpush1.msra.mxu0 0.0
        %1523 = vmatprep.subr.mxu0 0.0
        %1524 = vmatpush1.msra.mxu0 0.0
        %1525 = vmatprep.subr.mxu0 0.0
        %1526 = vmatpush1.msra.mxu0 0.0
        %1527 = vmatprep.subr.mxu0 0.0
        %1528 = vmatpush1.msra.mxu0 0.0
        %1529 = vmatprep.subr.mxu0 0.0
        %1530 = vmatpush1.msra.mxu0 0.0
        %1531 = vmatprep.subr.mxu0 0.0
        %1532 = vmatpush1.msra.mxu0 0.0
        %1533 = vmatprep.subr.mxu0 0.0
        %1534 = vmatpush1.msra.mxu0 0.0
        %1535 = vmatprep.subr.mxu0 0.0
        %1536 = vmatpush1.msra.mxu0 0.0
        %1537 = vmatprep.subr.mxu0 0.0
        %1538 = vmatpush1.msra.mxu0 0.0
        %1539 = vmatprep.subr.mxu0 0.0
        %1540 = vmatpush1.msra.mxu0 0.0
        %1541 = vmatprep.subr.mxu0 0.0
        %1542 = vmatpush1.msra.mxu0 0.0
        %1543 = vmatprep.subr.mxu0 0.0
        %1544 = vmatpush1.msra.mxu0 0.0
        %1545 = vmatprep.subr.mxu0 0.0
        %1546 = vmatpush1.msra.mxu0 0.0
        %1547 = vmatprep.subr.mxu0 0.0
        %1548 = vmatpush1.msra.mxu0 0.0
        %1549 = vmatprep.subr.mxu0 0.0
        %1550 = vmatpush1.msra.mxu0 0.0
        %1551 = vmatprep.subr.mxu0 0.0
        %1552 = vmatpush1.msra.mxu0 0.0
        %1553 = vmatprep.subr.mxu0 0.0
        %1554 = vmatpush1.msra.mxu0 0.0
        %1555 = vmatprep.subr.mxu0 0.0
        %1556 = vmatpush1.msra.mxu0 0.0
        %1557 = vmatprep.subr.mxu0 0.0
        %1558 = vmatpush1.msra.mxu0 0.0
        %1559 = vmatprep.subr.mxu0 0.0
        %1560 = vmatpush1.msra.mxu0 0.0
        %1561 = vmatprep.subr.mxu0 0.0
        %1562 = vmatpush1.msra.mxu0 0.0
        %1563 = vmatprep.mubr.f32.mxu0 0.0
        %v1564 = vand.u32 %v1383, 4294901760
        %1565 = vmatmul.mubr.f32.gmra.mrb[0].mxu0 %v1564
        %v1566 = vpop.f32.mrb[0].mxu0
        %v1567 = vadd.f32 %v1464, %v1566
        %v1568 = vpop.f32.mrb[0].mxu0
        %v1569 = vadd.f32 %v1466, %v1568
        %1570 = vmatprep.mubr.f32.mxu0 0.0
        %v1571 = vand.u32 %v1386, 4294901760
        %1572 = vmatmul.mubr.f32.gmra.mrb[0].mxu0 %v1571
        %v1573 = vpop.f32.mrb[0].mxu0
        %v1574 = vadd.f32 %v1475, %v1573
        %v1575 = vpop.f32.mrb[0].mxu0
        %v1576 = vadd.f32 %v1477, %v1575
        %1577 = vdwg.mxu0
        %v1578 = vand.u32 %v1364, 4294901760
        %v1579 = vsub.f32 %v1364, %v1578
        %1580 = vmatprep.subr.mxu0 %v1579
        %v1581 = vand.u32 %v1363, 4294901760
        %v1582 = vsub.f32 %v1363, %v1581
        %1583 = vmatpush1.msra.mxu0 %v1582
        %v1584 = vand.u32 %v1368, 4294901760
        %v1585 = vsub.f32 %v1368, %v1584
        %1586 = vmatprep.subr.mxu0 %v1585
        %v1587 = vand.u32 %v1367, 4294901760
        %v1588 = vsub.f32 %v1367, %v1587
        %1589 = vmatpush1.msra.mxu0 %v1588
        %1590 = vmatprep.subr.mxu0 0.0
        %1591 = vmatpush1.msra.mxu0 0.0
        %1592 = vmatprep.subr.mxu0 0.0
        %1593 = vmatpush1.msra.mxu0 0.0
        %1594 = vmatprep.subr.mxu0 0.0
        %1595 = vmatpush1.msra.mxu0 0.0
        %1596 = vmatprep.subr.mxu0 0.0
        %1597 = vmatpush1.msra.mxu0 0.0
        %1598 = vmatprep.subr.mxu0 0.0
        %1599 = vmatpush1.msra.mxu0 0.0
        %1600 = vmatprep.subr.mxu0 0.0
        %1601 = vmatpush1.msra.mxu0 0.0
        %1602 = vmatprep.subr.mxu0 0.0
        %1603 = vmatpush1.msra.mxu0 0.0
        %1604 = vmatprep.subr.mxu0 0.0
        %1605 = vmatpush1.msra.mxu0 0.0
        %1606 = vmatprep.subr.mxu0 0.0
        %1607 = vmatpush1.msra.mxu0 0.0
        %1608 = vmatprep.subr.mxu0 0.0
        %1609 = vmatpush1.msra.mxu0 0.0
        %1610 = vmatprep.subr.mxu0 0.0
        %1611 = vmatpush1.msra.mxu0 0.0
        %1612 = vmatprep.subr.mxu0 0.0
        %1613 = vmatpush1.msra.mxu0 0.0
        %1614 = vmatprep.subr.mxu0 0.0
        %1615 = vmatpush1.msra.mxu0 0.0
        %1616 = vmatprep.subr.mxu0 0.0
        %1617 = vmatpush1.msra.mxu0 0.0
        %1618 = vmatprep.subr.mxu0 0.0
        %1619 = vmatpush1.msra.mxu0 0.0
        %1620 = vmatprep.subr.mxu0 0.0
        %1621 = vmatpush1.msra.mxu0 0.0
        %1622 = vmatprep.subr.mxu0 0.0
        %1623 = vmatpush1.msra.mxu0 0.0
        %1624 = vmatprep.subr.mxu0 0.0
        %1625 = vmatpush1.msra.mxu0 0.0
        %1626 = vmatprep.subr.mxu0 0.0
        %1627 = vmatpush1.msra.mxu0 0.0
        %1628 = vmatprep.subr.mxu0 0.0
        %1629 = vmatpush1.msra.mxu0 0.0
        %1630 = vmatprep.subr.mxu0 0.0
        %1631 = vmatpush1.msra.mxu0 0.0
        %1632 = vmatprep.subr.mxu0 0.0
        %1633 = vmatpush1.msra.mxu0 0.0
        %1634 = vmatprep.subr.mxu0 0.0
        %1635 = vmatpush1.msra.mxu0 0.0
        %1636 = vmatprep.subr.mxu0 0.0
        %1637 = vmatpush1.msra.mxu0 0.0
        %1638 = vmatprep.subr.mxu0 0.0
        %1639 = vmatpush1.msra.mxu0 0.0
        %1640 = vmatprep.subr.mxu0 0.0
        %1641 = vmatpush1.msra.mxu0 0.0
        %1642 = vmatprep.subr.mxu0 0.0
        %1643 = vmatpush1.msra.mxu0 0.0
        %1644 = vmatprep.subr.mxu0 0.0
        %1645 = vmatpush1.msra.mxu0 0.0
        %1646 = vmatprep.subr.mxu0 0.0
        %1647 = vmatpush1.msra.mxu0 0.0
        %1648 = vmatprep.subr.mxu0 0.0
        %1649 = vmatpush1.msra.mxu0 0.0
        %1650 = vmatprep.mubr.f32.mxu0 0.0
        %v1651 = vand.u32 %v1383, 4294901760
        %v1652 = vsub.f32 %v1383, %v1651
        %1653 = vmatmul.mubr.f32.gmra.mrb[0].mxu0 %v1652
        %v1654 = vpop.f32.mrb[0].mxu0
        %v1655 = vadd.f32 %v1567, %v1654
        %v1656 = vpop.f32.mrb[0].mxu0
        %v1657 = vadd.f32 %v1569, %v1656
        %1658 = vmatprep.mubr.f32.mxu0 0.0
        %v1659 = vand.u32 %v1386, 4294901760
        %v1660 = vsub.f32 %v1386, %v1659
        %1661 = vmatmul.mubr.f32.gmra.mrb[0].mxu0 %v1660
        %v1662 = vpop.f32.mrb[0].mxu0
        %v1663 = vadd.f32 %v1574, %v1662
        %v1664 = vpop.f32.mrb[0].mxu0
        %v1665 = vadd.f32 %v1576, %v1664
        %1666 = vdwg.mxu0
        %v1667 = vand.u32 %v1364, 4294901760
        %1668 = vmatprep.subr.mxu0 %v1667
        %v1669 = vand.u32 %v1363, 4294901760
        %1670 = vmatpush1.msra.mxu0 %v1669
        %v1671 = vand.u32 %v1368, 4294901760
        %1672 = vmatprep.subr.mxu0 %v1671
        %v1673 = vand.u32 %v1367, 4294901760
        %1674 = vmatpush1.msra.mxu0 %v1673
        %1675 = vmatprep.subr.mxu0 0.0
        %1676 = vmatpush1.msra.mxu0 0.0
        %1677 = vmatprep.subr.mxu0 0.0
        %1678 = vmatpush1.msra.mxu0 0.0
        %1679 = vmatprep.subr.mxu0 0.0
        %1680 = vmatpush1.msra.mxu0 0.0
        %1681 = vmatprep.subr.mxu0 0.0
        %1682 = vmatpush1.msra.mxu0 0.0
        %1683 = vmatprep.subr.mxu0 0.0
        %1684 = vmatpush1.msra.mxu0 0.0
        %1685 = vmatprep.subr.mxu0 0.0
        %1686 = vmatpush1.msra.mxu0 0.0
        %1687 = vmatprep.subr.mxu0 0.0
        %1688 = vmatpush1.msra.mxu0 0.0
        %1689 = vmatprep.subr.mxu0 0.0
        %1690 = vmatpush1.msra.mxu0 0.0
        %1691 = vmatprep.subr.mxu0 0.0
        %1692 = vmatpush1.msra.mxu0 0.0
        %1693 = vmatprep.subr.mxu0 0.0
        %1694 = vmatpush1.msra.mxu0 0.0
        %1695 = vmatprep.subr.mxu0 0.0
        %1696 = vmatpush1.msra.mxu0 0.0
        %1697 = vmatprep.subr.mxu0 0.0
        %1698 = vmatpush1.msra.mxu0 0.0
        %1699 = vmatprep.subr.mxu0 0.0
        %1700 = vmatpush1.msra.mxu0 0.0
        %1701 = vmatprep.subr.mxu0 0.0
        %1702 = vmatpush1.msra.mxu0 0.0
        %1703 = vmatprep.subr.mxu0 0.0
        %1704 = vmatpush1.msra.mxu0 0.0
        %1705 = vmatprep.subr.mxu0 0.0
        %1706 = vmatpush1.msra.mxu0 0.0
        %1707 = vmatprep.subr.mxu0 0.0
        %1708 = vmatpush1.msra.mxu0 0.0
        %1709 = vmatprep.subr.mxu0 0.0
        %1710 = vmatpush1.msra.mxu0 0.0
        %1711 = vmatprep.subr.mxu0 0.0
        %1712 = vmatpush1.msra.mxu0 0.0
        %1713 = vmatprep.subr.mxu0 0.0
        %1714 = vmatpush1.msra.mxu0 0.0
        %1715 = vmatprep.subr.mxu0 0.0
        %1716 = vmatpush1.msra.mxu0 0.0
        %1717 = vmatprep.subr.mxu0 0.0
        %1718 = vmatpush1.msra.mxu0 0.0
        %1719 = vmatprep.subr.mxu0 0.0
        %1720 = vmatpush1.msra.mxu0 0.0
        %1721 = vmatprep.subr.mxu0 0.0
        %1722 = vmatpush1.msra.mxu0 0.0
        %1723 = vmatprep.subr.mxu0 0.0
        %1724 = vmatpush1.msra.mxu0 0.0
        %1725 = vmatprep.subr.mxu0 0.0
        %1726 = vmatpush1.msra.mxu0 0.0
        %1727 = vmatprep.subr.mxu0 0.0
        %1728 = vmatpush1.msra.mxu0 0.0
        %1729 = vmatprep.subr.mxu0 0.0
        %1730 = vmatpush1.msra.mxu0 0.0
        %1731 = vmatprep.subr.mxu0 0.0
        %1732 = vmatpush1.msra.mxu0 0.0
        %1733 = vmatprep.subr.mxu0 0.0
        %1734 = vmatpush1.msra.mxu0 0.0
        %1735 = vmatprep.mubr.f32.mxu0 0.0
        %v1736 = vand.u32 %v1383, 4294901760
        %v1737 = vsub.f32 %v1383, %v1736
        %v1738 = vand.u32 %v1737, 4294901760
        %1739 = vmatmul.mubr.f32.gmra.mrb[0].mxu0 %v1738
        %v1740 = vpop.f32.mrb[0].mxu0
        %v1741 = vadd.f32 %v1655, %v1740
        %v1742 = vpop.f32.mrb[0].mxu0
        %v1743 = vadd.f32 %v1657, %v1742
        %1744 = vmatprep.mubr.f32.mxu0 0.0
        %v1745 = vand.u32 %v1386, 4294901760
        %v1746 = vsub.f32 %v1386, %v1745
        %v1747 = vand.u32 %v1746, 4294901760
        %1748 = vmatmul.mubr.f32.gmra.mrb[0].mxu0 %v1747
        %v1749 = vpop.f32.mrb[0].mxu0
        %v1750 = vadd.f32 %v1663, %v1749
        %v1751 = vpop.f32.mrb[0].mxu0
        %v1752 = vadd.f32 %v1665, %v1751
        %1753 = vdwg.mxu0
        %v1754 = vand.u32 %v1364, 4294901760
        %v1755 = vsub.f32 %v1364, %v1754
        %v1756 = vand.u32 %v1755, 4294901760
        %1757 = vmatprep.subr.mxu0 %v1756
        %v1758 = vand.u32 %v1363, 4294901760
        %v1759 = vsub.f32 %v1363, %v1758
        %v1760 = vand.u32 %v1759, 4294901760
        %1761 = vmatpush1.msra.mxu0 %v1760
        %v1762 = vand.u32 %v1368, 4294901760
        %v1763 = vsub.f32 %v1368, %v1762
        %v1764 = vand.u32 %v1763, 4294901760
        %1765 = vmatprep.subr.mxu0 %v1764
        %v1766 = vand.u32 %v1367, 4294901760
        %v1767 = vsub.f32 %v1367, %v1766
        %v1768 = vand.u32 %v1767, 4294901760
        %1769 = vmatpush1.msra.mxu0 %v1768
        %1770 = vmatprep.subr.mxu0 0.0
        %1771 = vmatpush1.msra.mxu0 0.0
        %1772 = vmatprep.subr.mxu0 0.0
        %1773 = vmatpush1.msra.mxu0 0.0
        %1774 = vmatprep.subr.mxu0 0.0
        %1775 = vmatpush1.msra.mxu0 0.0
        %1776 = vmatprep.subr.mxu0 0.0
        %1777 = vmatpush1.msra.mxu0 0.0
        %1778 = vmatprep.subr.mxu0 0.0
        %1779 = vmatpush1.msra.mxu0 0.0
        %1780 = vmatprep.subr.mxu0 0.0
        %1781 = vmatpush1.msra.mxu0 0.0
        %1782 = vmatprep.subr.mxu0 0.0
        %1783 = vmatpush1.msra.mxu0 0.0
        %1784 = vmatprep.subr.mxu0 0.0
        %1785 = vmatpush1.msra.mxu0 0.0
        %1786 = vmatprep.subr.mxu0 0.0
        %1787 = vmatpush1.msra.mxu0 0.0
        %1788 = vmatprep.subr.mxu0 0.0
        %1789 = vmatpush1.msra.mxu0 0.0
        %1790 = vmatprep.subr.mxu0 0.0
        %1791 = vmatpush1.msra.mxu0 0.0
        %1792 = vmatprep.subr.mxu0 0.0
        %1793 = vmatpush1.msra.mxu0 0.0
        %1794 = vmatprep.subr.mxu0 0.0
        %1795 = vmatpush1.msra.mxu0 0.0
        %1796 = vmatprep.subr.mxu0 0.0
        %1797 = vmatpush1.msra.mxu0 0.0
        %1798 = vmatprep.subr.mxu0 0.0
        %1799 = vmatpush1.msra.mxu0 0.0
        %1800 = vmatprep.subr.mxu0 0.0
        %1801 = vmatpush1.msra.mxu0 0.0
        %1802 = vmatprep.subr.mxu0 0.0
        %1803 = vmatpush1.msra.mxu0 0.0
        %1804 = vmatprep.subr.mxu0 0.0
        %1805 = vmatpush1.msra.mxu0 0.0
        %1806 = vmatprep.subr.mxu0 0.0
        %1807 = vmatpush1.msra.mxu0 0.0
        %1808 = vmatprep.subr.mxu0 0.0
        %1809 = vmatpush1.msra.mxu0 0.0
        %1810 = vmatprep.subr.mxu0 0.0
        %1811 = vmatpush1.msra.mxu0 0.0
        %1812 = vmatprep.subr.mxu0 0.0
        %1813 = vmatpush1.msra.mxu0 0.0
        %1814 = vmatprep.subr.mxu0 0.0
        %1815 = vmatpush1.msra.mxu0 0.0
        %1816 = vmatprep.subr.mxu0 0.0
        %1817 = vmatpush1.msra.mxu0 0.0
        %1818 = vmatprep.subr.mxu0 0.0
        %1819 = vmatpush1.msra.mxu0 0.0
        %1820 = vmatprep.subr.mxu0 0.0
        %1821 = vmatpush1.msra.mxu0 0.0
        %1822 = vmatprep.subr.mxu0 0.0
        %1823 = vmatpush1.msra.mxu0 0.0
        %1824 = vmatprep.subr.mxu0 0.0
        %1825 = vmatpush1.msra.mxu0 0.0
        %1826 = vmatprep.subr.mxu0 0.0
        %1827 = vmatpush1.msra.mxu0 0.0
        %1828 = vmatprep.subr.mxu0 0.0
        %1829 = vmatpush1.msra.mxu0 0.0
        %1830 = vmatprep.mubr.f32.mxu0 0.0
        %v1831 = vand.u32 %v1383, 4294901760
        %1832 = vmatmul.mubr.f32.gmra.mrb[0].mxu0 %v1831
        %v1833 = vpop.f32.mrb[0].mxu0
        %v1834 = vadd.f32 %v1741, %v1833
        %v1835 = vpop.f32.mrb[0].mxu0
        %v1836 = vadd.f32 %v1743, %v1835
        %1837 = vmatprep.mubr.f32.mxu0 0.0
        %v1838 = vand.u32 %v1386, 4294901760
        %1839 = vmatmul.mubr.f32.gmra.mrb[0].mxu0 %v1838
        %v1840 = vpop.f32.mrb[0].mxu0
        %v1841 = vadd.f32 %v1750, %v1840
        %v1842 = vpop.f32.mrb[0].mxu0
        %v1843 = vadd.f32 %v1752, %v1842
        %1844 = vdwg.mxu0
        %v1845 = vand.u32 %v1364, 4294901760
        %1846 = vmatprep.subr.mxu0 %v1845
        %v1847 = vand.u32 %v1363, 4294901760
        %1848 = vmatpush1.msra.mxu0 %v1847
        %v1849 = vand.u32 %v1368, 4294901760
        %1850 = vmatprep.subr.mxu0 %v1849
        %v1851 = vand.u32 %v1367, 4294901760
        %1852 = vmatpush1.msra.mxu0 %v1851
        %1853 = vmatprep.subr.mxu0 0.0
        %1854 = vmatpush1.msra.mxu0 0.0
        %1855 = vmatprep.subr.mxu0 0.0
        %1856 = vmatpush1.msra.mxu0 0.0
        %1857 = vmatprep.subr.mxu0 0.0
        %1858 = vmatpush1.msra.mxu0 0.0
        %1859 = vmatprep.subr.mxu0 0.0
        %1860 = vmatpush1.msra.mxu0 0.0
        %1861 = vmatprep.subr.mxu0 0.0
        %1862 = vmatpush1.msra.mxu0 0.0
        %1863 = vmatprep.subr.mxu0 0.0
        %1864 = vmatpush1.msra.mxu0 0.0
        %1865 = vmatprep.subr.mxu0 0.0
        %1866 = vmatpush1.msra.mxu0 0.0
        %1867 = vmatprep.subr.mxu0 0.0
        %1868 = vmatpush1.msra.mxu0 0.0
        %1869 = vmatprep.subr.mxu0 0.0
        %1870 = vmatpush1.msra.mxu0 0.0
        %1871 = vmatprep.subr.mxu0 0.0
        %1872 = vmatpush1.msra.mxu0 0.0
        %1873 = vmatprep.subr.mxu0 0.0
        %1874 = vmatpush1.msra.mxu0 0.0
        %1875 = vmatprep.subr.mxu0 0.0
        %1876 = vmatpush1.msra.mxu0 0.0
        %1877 = vmatprep.subr.mxu0 0.0
        %1878 = vmatpush1.msra.mxu0 0.0
        %1879 = vmatprep.subr.mxu0 0.0
        %1880 = vmatpush1.msra.mxu0 0.0
        %1881 = vmatprep.subr.mxu0 0.0
        %1882 = vmatpush1.msra.mxu0 0.0
        %1883 = vmatprep.subr.mxu0 0.0
        %1884 = vmatpush1.msra.mxu0 0.0
        %1885 = vmatprep.subr.mxu0 0.0
        %1886 = vmatpush1.msra.mxu0 0.0
        %1887 = vmatprep.subr.mxu0 0.0
        %1888 = vmatpush1.msra.mxu0 0.0
        %1889 = vmatprep.subr.mxu0 0.0
        %1890 = vmatpush1.msra.mxu0 0.0
        %1891 = vmatprep.subr.mxu0 0.0
        %1892 = vmatpush1.msra.mxu0 0.0
        %1893 = vmatprep.subr.mxu0 0.0
        %1894 = vmatpush1.msra.mxu0 0.0
        %1895 = vmatprep.subr.mxu0 0.0
        %1896 = vmatpush1.msra.mxu0 0.0
        %1897 = vmatprep.subr.mxu0 0.0
        %1898 = vmatpush1.msra.mxu0 0.0
        %1899 = vmatprep.subr.mxu0 0.0
        %1900 = vmatpush1.msra.mxu0 0.0
        %1901 = vmatprep.subr.mxu0 0.0
        %1902 = vmatpush1.msra.mxu0 0.0
        %1903 = vmatprep.subr.mxu0 0.0
        %1904 = vmatpush1.msra.mxu0 0.0
        %1905 = vmatprep.subr.mxu0 0.0
        %1906 = vmatpush1.msra.mxu0 0.0
        %1907 = vmatprep.subr.mxu0 0.0
        %1908 = vmatpush1.msra.mxu0 0.0
        %1909 = vmatprep.subr.mxu0 0.0
        %1910 = vmatpush1.msra.mxu0 0.0
        %1911 = vmatprep.subr.mxu0 0.0
        %1912 = vmatpush1.msra.mxu0 0.0
        %1913 = vmatprep.mubr.f32.mxu0 0.0
        %v1914 = vand.u32 %v1383, 4294901760
        %1915 = vmatmul.mubr.f32.gmra.mrb[0].mxu0 %v1914
        %v1916 = vpop.f32.mrb[0].mxu0
        %v1917 = vadd.f32 %v1834, %v1916
        %v1918 = vpop.f32.mrb[0].mxu0
        %v1919 = vadd.f32 %v1836, %v1918
        %1920 = vmatprep.mubr.f32.mxu0 0.0
        %v1921 = vand.u32 %v1386, 4294901760
        %1922 = vmatmul.mubr.f32.gmra.mrb[0].mxu0 %v1921
        %v1923 = vpop.f32.mrb[0].mxu0
        %v1924 = vadd.f32 %v1841, %v1923
        %v1925 = vpop.f32.mrb[0].mxu0
        %v1926 = vadd.f32 %v1843, %v1925
        %1927 = vdwg.mxu0
        %v1928 = vand.u32 %v1366, 4294901760
        %1929 = vmatprep.subr.mxu0 %v1928
        %v1930 = vand.u32 %v1365, 4294901760
        %1931 = vmatpush1.msra.mxu0 %v1930
        %v1932 = vand.u32 %v1370, 4294901760
        %1933 = vmatprep.subr.mxu0 %v1932
        %v1934 = vand.u32 %v1369, 4294901760
        %1935 = vmatpush1.msra.mxu0 %v1934
        %1936 = vmatprep.subr.mxu0 0.0
        %1937 = vmatpush1.msra.mxu0 0.0
        %1938 = vmatprep.subr.mxu0 0.0
        %1939 = vmatpush1.msra.mxu0 0.0
        %1940 = vmatprep.subr.mxu0 0.0
        %1941 = vmatpush1.msra.mxu0 0.0
        %1942 = vmatprep.subr.mxu0 0.0
        %1943 = vmatpush1.msra.mxu0 0.0
        %1944 = vmatprep.subr.mxu0 0.0
        %1945 = vmatpush1.msra.mxu0 0.0
        %1946 = vmatprep.subr.mxu0 0.0
        %1947 = vmatpush1.msra.mxu0 0.0
        %1948 = vmatprep.subr.mxu0 0.0
        %1949 = vmatpush1.msra.mxu0 0.0
        %1950 = vmatprep.subr.mxu0 0.0
        %1951 = vmatpush1.msra.mxu0 0.0
        %1952 = vmatprep.subr.mxu0 0.0
        %1953 = vmatpush1.msra.mxu0 0.0
        %1954 = vmatprep.subr.mxu0 0.0
        %1955 = vmatpush1.msra.mxu0 0.0
        %1956 = vmatprep.subr.mxu0 0.0
        %1957 = vmatpush1.msra.mxu0 0.0
        %1958 = vmatprep.subr.mxu0 0.0
        %1959 = vmatpush1.msra.mxu0 0.0
        %1960 = vmatprep.subr.mxu0 0.0
        %1961 = vmatpush1.msra.mxu0 0.0
        %1962 = vmatprep.subr.mxu0 0.0
        %1963 = vmatpush1.msra.mxu0 0.0
        %1964 = vmatprep.subr.mxu0 0.0
        %1965 = vmatpush1.msra.mxu0 0.0
        %1966 = vmatprep.subr.mxu0 0.0
        %1967 = vmatpush1.msra.mxu0 0.0
        %1968 = vmatprep.subr.mxu0 0.0
        %1969 = vmatpush1.msra.mxu0 0.0
        %1970 = vmatprep.subr.mxu0 0.0
        %1971 = vmatpush1.msra.mxu0 0.0
        %1972 = vmatprep.subr.mxu0 0.0
        %1973 = vmatpush1.msra.mxu0 0.0
        %1974 = vmatprep.subr.mxu0 0.0
        %1975 = vmatpush1.msra.mxu0 0.0
        %1976 = vmatprep.subr.mxu0 0.0
        %1977 = vmatpush1.msra.mxu0 0.0
        %1978 = vmatprep.subr.mxu0 0.0
        %1979 = vmatpush1.msra.mxu0 0.0
        %1980 = vmatprep.subr.mxu0 0.0
        %1981 = vmatpush1.msra.mxu0 0.0
        %1982 = vmatprep.subr.mxu0 0.0
        %1983 = vmatpush1.msra.mxu0 0.0
        %1984 = vmatprep.subr.mxu0 0.0
        %1985 = vmatpush1.msra.mxu0 0.0
        %1986 = vmatprep.subr.mxu0 0.0
        %1987 = vmatpush1.msra.mxu0 0.0
        %1988 = vmatprep.subr.mxu0 0.0
        %1989 = vmatpush1.msra.mxu0 0.0
        %1990 = vmatprep.subr.mxu0 0.0
        %1991 = vmatpush1.msra.mxu0 0.0
        %1992 = vmatprep.subr.mxu0 0.0
        %1993 = vmatpush1.msra.mxu0 0.0
        %1994 = vmatprep.subr.mxu0 0.0
        %1995 = vmatpush1.msra.mxu0 0.0
        %1996 = vmatprep.mubr.f32.mxu0 0.0
        %v1997 = vand.u32 %v1383, 4294901760
        %v1998 = vsub.f32 %v1383, %v1997
        %v1999 = vand.u32 %v1998, 4294901760
        %v2000 = vsub.f32 %v1998, %v1999
        %v2001 = vand.u32 %v2000, 4294901760
        %2002 = vmatmul.mubr.f32.gmra.mrb[0].mxu0 %v2001
        %v2003 = vpop.f32.mrb[0].mxu0
        %v2004 = vadd.f32 %v1374, %v2003
        %v2005 = vpop.f32.mrb[0].mxu0
        %v2006 = vadd.f32 %v1374, %v2005
        %2007 = vmatprep.mubr.f32.mxu0 0.0
        %v2008 = vand.u32 %v1386, 4294901760
        %v2009 = vsub.f32 %v1386, %v2008
        %v2010 = vand.u32 %v2009, 4294901760
        %v2011 = vsub.f32 %v2009, %v2010
        %v2012 = vand.u32 %v2011, 4294901760
        %2013 = vmatmul.mubr.f32.gmra.mrb[0].mxu0 %v2012
        %v2014 = vpop.f32.mrb[0].mxu0
        %v2015 = vadd.f32 %v1379, %v2014
        %v2016 = vpop.f32.mrb[0].mxu0
        %v2017 = vadd.f32 %v1379, %v2016
        %2018 = vdwg.mxu0
        %v2019 = vand.u32 %v1366, 4294901760
        %v2020 = vsub.f32 %v1366, %v2019
        %v2021 = vand.u32 %v2020, 4294901760
        %v2022 = vsub.f32 %v2020, %v2021
        %v2023 = vand.u32 %v2022, 4294901760
        %2024 = vmatprep.subr.mxu0 %v2023
        %v2025 = vand.u32 %v1365, 4294901760
        %v2026 = vsub.f32 %v1365, %v2025
        %v2027 = vand.u32 %v2026, 4294901760
        %v2028 = vsub.f32 %v2026, %v2027
        %v2029 = vand.u32 %v2028, 4294901760
        %2030 = vmatpush1.msra.mxu0 %v2029
        %v2031 = vand.u32 %v1370, 4294901760
        %v2032 = vsub.f32 %v1370, %v2031
        %v2033 = vand.u32 %v2032, 4294901760
        %v2034 = vsub.f32 %v2032, %v2033
        %v2035 = vand.u32 %v2034, 4294901760
        %2036 = vmatprep.subr.mxu0 %v2035
        %v2037 = vand.u32 %v1369, 4294901760
        %v2038 = vsub.f32 %v1369, %v2037
        %v2039 = vand.u32 %v2038, 4294901760
        %v2040 = vsub.f32 %v2038, %v2039
        %v2041 = vand.u32 %v2040, 4294901760
        %2042 = vmatpush1.msra.mxu0 %v2041
        %2043 = vmatprep.subr.mxu0 0.0
        %2044 = vmatpush1.msra.mxu0 0.0
        %2045 = vmatprep.subr.mxu0 0.0
        %2046 = vmatpush1.msra.mxu0 0.0
        %2047 = vmatprep.subr.mxu0 0.0
        %2048 = vmatpush1.msra.mxu0 0.0
        %2049 = vmatprep.subr.mxu0 0.0
        %2050 = vmatpush1.msra.mxu0 0.0
        %2051 = vmatprep.subr.mxu0 0.0
        %2052 = vmatpush1.msra.mxu0 0.0
        %2053 = vmatprep.subr.mxu0 0.0
        %2054 = vmatpush1.msra.mxu0 0.0
        %2055 = vmatprep.subr.mxu0 0.0
        %2056 = vmatpush1.msra.mxu0 0.0
        %2057 = vmatprep.subr.mxu0 0.0
        %2058 = vmatpush1.msra.mxu0 0.0
        %2059 = vmatprep.subr.mxu0 0.0
        %2060 = vmatpush1.msra.mxu0 0.0
        %2061 = vmatprep.subr.mxu0 0.0
        %2062 = vmatpush1.msra.mxu0 0.0
        %2063 = vmatprep.subr.mxu0 0.0
        %2064 = vmatpush1.msra.mxu0 0.0
        %2065 = vmatprep.subr.mxu0 0.0
        %2066 = vmatpush1.msra.mxu0 0.0
        %2067 = vmatprep.subr.mxu0 0.0
        %2068 = vmatpush1.msra.mxu0 0.0
        %2069 = vmatprep.subr.mxu0 0.0
        %2070 = vmatpush1.msra.mxu0 0.0
        %2071 = vmatprep.subr.mxu0 0.0
        %2072 = vmatpush1.msra.mxu0 0.0
        %2073 = vmatprep.subr.mxu0 0.0
        %2074 = vmatpush1.msra.mxu0 0.0
        %2075 = vmatprep.subr.mxu0 0.0
        %2076 = vmatpush1.msra.mxu0 0.0
        %2077 = vmatprep.subr.mxu0 0.0
        %2078 = vmatpush1.msra.mxu0 0.0
        %2079 = vmatprep.subr.mxu0 0.0
        %2080 = vmatpush1.msra.mxu0 0.0
        %2081 = vmatprep.subr.mxu0 0.0
        %2082 = vmatpush1.msra.mxu0 0.0
        %2083 = vmatprep.subr.mxu0 0.0
        %2084 = vmatpush1.msra.mxu0 0.0
        %2085 = vmatprep.subr.mxu0 0.0
        %2086 = vmatpush1.msra.mxu0 0.0
        %2087 = vmatprep.subr.mxu0 0.0
        %2088 = vmatpush1.msra.mxu0 0.0
        %2089 = vmatprep.subr.mxu0 0.0
        %2090 = vmatpush1.msra.mxu0 0.0
        %2091 = vmatprep.subr.mxu0 0.0
        %2092 = vmatpush1.msra.mxu0 0.0
        %2093 = vmatprep.subr.mxu0 0.0
        %2094 = vmatpush1.msra.mxu0 0.0
        %2095 = vmatprep.subr.mxu0 0.0
        %2096 = vmatpush1.msra.mxu0 0.0
        %2097 = vmatprep.subr.mxu0 0.0
        %2098 = vmatpush1.msra.mxu0 0.0
        %2099 = vmatprep.subr.mxu0 0.0
        %2100 = vmatpush1.msra.mxu0 0.0
        %2101 = vmatprep.subr.mxu0 0.0
        %2102 = vmatpush1.msra.mxu0 0.0
        %2103 = vmatprep.mubr.f32.mxu0 0.0
        %v2104 = vand.u32 %v1383, 4294901760
        %2105 = vmatmul.mubr.f32.gmra.mrb[0].mxu0 %v2104
        %v2106 = vpop.f32.mrb[0].mxu0
        %v2107 = vadd.f32 %v2004, %v2106
        %v2108 = vpop.f32.mrb[0].mxu0
        %v2109 = vadd.f32 %v2006, %v2108
        %2110 = vmatprep.mubr.f32.mxu0 0.0
        %v2111 = vand.u32 %v1386, 4294901760
        %2112 = vmatmul.mubr.f32.gmra.mrb[0].mxu0 %v2111
        %v2113 = vpop.f32.mrb[0].mxu0
        %v2114 = vadd.f32 %v2015, %v2113
        %v2115 = vpop.f32.mrb[0].mxu0
        %v2116 = vadd.f32 %v2017, %v2115
        %2117 = vdwg.mxu0
        %v2118 = vand.u32 %v1366, 4294901760
        %v2119 = vsub.f32 %v1366, %v2118
        %2120 = vmatprep.subr.mxu0 %v2119
        %v2121 = vand.u32 %v1365, 4294901760
        %v2122 = vsub.f32 %v1365, %v2121
        %2123 = vmatpush1.msra.mxu0 %v2122
        %v2124 = vand.u32 %v1370, 4294901760
        %v2125 = vsub.f32 %v1370, %v2124
        %2126 = vmatprep.subr.mxu0 %v2125
        %v2127 = vand.u32 %v1369, 4294901760
        %v2128 = vsub.f32 %v1369, %v2127
        %2129 = vmatpush1.msra.mxu0 %v2128
        %2130 = vmatprep.subr.mxu0 0.0
        %2131 = vmatpush1.msra.mxu0 0.0
        %2132 = vmatprep.subr.mxu0 0.0
        %2133 = vmatpush1.msra.mxu0 0.0
        %2134 = vmatprep.subr.mxu0 0.0
        %2135 = vmatpush1.msra.mxu0 0.0
        %2136 = vmatprep.subr.mxu0 0.0
        %2137 = vmatpush1.msra.mxu0 0.0
        %2138 = vmatprep.subr.mxu0 0.0
        %2139 = vmatpush1.msra.mxu0 0.0
        %2140 = vmatprep.subr.mxu0 0.0
        %2141 = vmatpush1.msra.mxu0 0.0
        %2142 = vmatprep.subr.mxu0 0.0
        %2143 = vmatpush1.msra.mxu0 0.0
        %2144 = vmatprep.subr.mxu0 0.0
        %2145 = vmatpush1.msra.mxu0 0.0
        %2146 = vmatprep.subr.mxu0 0.0
        %2147 = vmatpush1.msra.mxu0 0.0
        %2148 = vmatprep.subr.mxu0 0.0
        %2149 = vmatpush1.msra.mxu0 0.0
        %2150 = vmatprep.subr.mxu0 0.0
        %2151 = vmatpush1.msra.mxu0 0.0
        %2152 = vmatprep.subr.mxu0 0.0
        %2153 = vmatpush1.msra.mxu0 0.0
        %2154 = vmatprep.subr.mxu0 0.0
        %2155 = vmatpush1.msra.mxu0 0.0
        %2156 = vmatprep.subr.mxu0 0.0
        %2157 = vmatpush1.msra.mxu0 0.0
        %2158 = vmatprep.subr.mxu0 0.0
        %2159 = vmatpush1.msra.mxu0 0.0
        %2160 = vmatprep.subr.mxu0 0.0
        %2161 = vmatpush1.msra.mxu0 0.0
        %2162 = vmatprep.subr.mxu0 0.0
        %2163 = vmatpush1.msra.mxu0 0.0
        %2164 = vmatprep.subr.mxu0 0.0
        %2165 = vmatpush1.msra.mxu0 0.0
        %2166 = vmatprep.subr.mxu0 0.0
        %2167 = vmatpush1.msra.mxu0 0.0
        %2168 = vmatprep.subr.mxu0 0.0
        %2169 = vmatpush1.msra.mxu0 0.0
        %2170 = vmatprep.subr.mxu0 0.0
        %2171 = vmatpush1.msra.mxu0 0.0
        %2172 = vmatprep.subr.mxu0 0.0
        %2173 = vmatpush1.msra.mxu0 0.0
        %2174 = vmatprep.subr.mxu0 0.0
        %2175 = vmatpush1.msra.mxu0 0.0
        %2176 = vmatprep.subr.mxu0 0.0
        %2177 = vmatpush1.msra.mxu0 0.0
        %2178 = vmatprep.subr.mxu0 0.0
        %2179 = vmatpush1.msra.mxu0 0.0
        %2180 = vmatprep.subr.mxu0 0.0
        %2181 = vmatpush1.msra.mxu0 0.0
        %2182 = vmatprep.subr.mxu0 0.0
        %2183 = vmatpush1.msra.mxu0 0.0
        %2184 = vmatprep.subr.mxu0 0.0
        %2185 = vmatpush1.msra.mxu0 0.0
        %2186 = vmatprep.subr.mxu0 0.0
        %2187 = vmatpush1.msra.mxu0 0.0
        %2188 = vmatprep.subr.mxu0 0.0
        %2189 = vmatpush1.msra.mxu0 0.0
        %2190 = vmatprep.mubr.f32.mxu0 0.0
        %v2191 = vand.u32 %v1383, 4294901760
        %v2192 = vsub.f32 %v1383, %v2191
        %2193 = vmatmul.mubr.f32.gmra.mrb[0].mxu0 %v2192
        %v2194 = vpop.f32.mrb[0].mxu0
        %v2195 = vadd.f32 %v2107, %v2194
        %v2196 = vpop.f32.mrb[0].mxu0
        %v2197 = vadd.f32 %v2109, %v2196
        %2198 = vmatprep.mubr.f32.mxu0 0.0
        %v2199 = vand.u32 %v1386, 4294901760
        %v2200 = vsub.f32 %v1386, %v2199
        %2201 = vmatmul.mubr.f32.gmra.mrb[0].mxu0 %v2200
        %v2202 = vpop.f32.mrb[0].mxu0
        %v2203 = vadd.f32 %v2114, %v2202
        %v2204 = vpop.f32.mrb[0].mxu0
        %v2205 = vadd.f32 %v2116, %v2204
        %2206 = vdwg.mxu0
        %v2207 = vand.u32 %v1366, 4294901760
        %2208 = vmatprep.subr.mxu0 %v2207
        %v2209 = vand.u32 %v1365, 4294901760
        %2210 = vmatpush1.msra.mxu0 %v2209
        %v2211 = vand.u32 %v1370, 4294901760
        %2212 = vmatprep.subr.mxu0 %v2211
        %v2213 = vand.u32 %v1369, 4294901760
        %2214 = vmatpush1.msra.mxu0 %v2213
        %2215 = vmatprep.subr.mxu0 0.0
        %2216 = vmatpush1.msra.mxu0 0.0
        %2217 = vmatprep.subr.mxu0 0.0
        %2218 = vmatpush1.msra.mxu0 0.0
        %2219 = vmatprep.subr.mxu0 0.0
        %2220 = vmatpush1.msra.mxu0 0.0
        %2221 = vmatprep.subr.mxu0 0.0
        %2222 = vmatpush1.msra.mxu0 0.0
        %2223 = vmatprep.subr.mxu0 0.0
        %2224 = vmatpush1.msra.mxu0 0.0
        %2225 = vmatprep.subr.mxu0 0.0
        %2226 = vmatpush1.msra.mxu0 0.0
        %2227 = vmatprep.subr.mxu0 0.0
        %2228 = vmatpush1.msra.mxu0 0.0
        %2229 = vmatprep.subr.mxu0 0.0
        %2230 = vmatpush1.msra.mxu0 0.0
        %2231 = vmatprep.subr.mxu0 0.0
        %2232 = vmatpush1.msra.mxu0 0.0
        %2233 = vmatprep.subr.mxu0 0.0
        %2234 = vmatpush1.msra.mxu0 0.0
        %2235 = vmatprep.subr.mxu0 0.0
        %2236 = vmatpush1.msra.mxu0 0.0
        %2237 = vmatprep.subr.mxu0 0.0
        %2238 = vmatpush1.msra.mxu0 0.0
        %2239 = vmatprep.subr.mxu0 0.0
        %2240 = vmatpush1.msra.mxu0 0.0
        %2241 = vmatprep.subr.mxu0 0.0
        %2242 = vmatpush1.msra.mxu0 0.0
        %2243 = vmatprep.subr.mxu0 0.0
        %2244 = vmatpush1.msra.mxu0 0.0
        %2245 = vmatprep.subr.mxu0 0.0
        %2246 = vmatpush1.msra.mxu0 0.0
        %2247 = vmatprep.subr.mxu0 0.0
        %2248 = vmatpush1.msra.mxu0 0.0
        %2249 = vmatprep.subr.mxu0 0.0
        %2250 = vmatpush1.msra.mxu0 0.0
        %2251 = vmatprep.subr.mxu0 0.0
        %2252 = vmatpush1.msra.mxu0 0.0
        %2253 = vmatprep.subr.mxu0 0.0
        %2254 = vmatpush1.msra.mxu0 0.0
        %2255 = vmatprep.subr.mxu0 0.0
        %2256 = vmatpush1.msra.mxu0 0.0
        %2257 = vmatprep.subr.mxu0 0.0
        %2258 = vmatpush1.msra.mxu0 0.0
        %2259 = vmatprep.subr.mxu0 0.0
        %2260 = vmatpush1.msra.mxu0 0.0
        %2261 = vmatprep.subr.mxu0 0.0
        %2262 = vmatpush1.msra.mxu0 0.0
        %2263 = vmatprep.subr.mxu0 0.0
        %2264 = vmatpush1.msra.mxu0 0.0
        %2265 = vmatprep.subr.mxu0 0.0
        %2266 = vmatpush1.msra.mxu0 0.0
        %2267 = vmatprep.subr.mxu0 0.0
        %2268 = vmatpush1.msra.mxu0 0.0
        %2269 = vmatprep.subr.mxu0 0.0
        %2270 = vmatpush1.msra.mxu0 0.0
        %2271 = vmatprep.subr.mxu0 0.0
        %2272 = vmatpush1.msra.mxu0 0.0
        %2273 = vmatprep.subr.mxu0 0.0
        %2274 = vmatpush1.msra.mxu0 0.0
        %2275 = vmatprep.mubr.f32.mxu0 0.0
        %v2276 = vand.u32 %v1383, 4294901760
        %v2277 = vsub.f32 %v1383, %v2276
        %v2278 = vand.u32 %v2277, 4294901760
        %2279 = vmatmul.mubr.f32.gmra.mrb[0].mxu0 %v2278
        %v2280 = vpop.f32.mrb[0].mxu0
        %v2281 = vadd.f32 %v2195, %v2280
        %v2282 = vpop.f32.mrb[0].mxu0
        %v2283 = vadd.f32 %v2197, %v2282
        %2284 = vmatprep.mubr.f32.mxu0 0.0
        %v2285 = vand.u32 %v1386, 4294901760
        %v2286 = vsub.f32 %v1386, %v2285
        %v2287 = vand.u32 %v2286, 4294901760
        %2288 = vmatmul.mubr.f32.gmra.mrb[0].mxu0 %v2287
        %v2289 = vpop.f32.mrb[0].mxu0
        %v2290 = vadd.f32 %v2203, %v2289
        %v2291 = vpop.f32.mrb[0].mxu0
        %v2292 = vadd.f32 %v2205, %v2291
        %2293 = vdwg.mxu0
        %v2294 = vand.u32 %v1366, 4294901760
        %v2295 = vsub.f32 %v1366, %v2294
        %v2296 = vand.u32 %v2295, 4294901760
        %2297 = vmatprep.subr.mxu0 %v2296
        %v2298 = vand.u32 %v1365, 4294901760
        %v2299 = vsub.f32 %v1365, %v2298
        %v2300 = vand.u32 %v2299, 4294901760
        %2301 = vmatpush1.msra.mxu0 %v2300
        %v2302 = vand.u32 %v1370, 4294901760
        %v2303 = vsub.f32 %v1370, %v2302
        %v2304 = vand.u32 %v2303, 4294901760
        %2305 = vmatprep.subr.mxu0 %v2304
        %v2306 = vand.u32 %v1369, 4294901760
        %v2307 = vsub.f32 %v1369, %v2306
        %v2308 = vand.u32 %v2307, 4294901760
        %2309 = vmatpush1.msra.mxu0 %v2308
        %2310 = vmatprep.subr.mxu0 0.0
        %2311 = vmatpush1.msra.mxu0 0.0
        %2312 = vmatprep.subr.mxu0 0.0
        %2313 = vmatpush1.msra.mxu0 0.0
        %2314 = vmatprep.subr.mxu0 0.0
        %2315 = vmatpush1.msra.mxu0 0.0
        %2316 = vmatprep.subr.mxu0 0.0
        %2317 = vmatpush1.msra.mxu0 0.0
        %2318 = vmatprep.subr.mxu0 0.0
        %2319 = vmatpush1.msra.mxu0 0.0
        %2320 = vmatprep.subr.mxu0 0.0
        %2321 = vmatpush1.msra.mxu0 0.0
        %2322 = vmatprep.subr.mxu0 0.0
        %2323 = vmatpush1.msra.mxu0 0.0
        %2324 = vmatprep.subr.mxu0 0.0
        %2325 = vmatpush1.msra.mxu0 0.0
        %2326 = vmatprep.subr.mxu0 0.0
        %2327 = vmatpush1.msra.mxu0 0.0
        %2328 = vmatprep.subr.mxu0 0.0
        %2329 = vmatpush1.msra.mxu0 0.0
        %2330 = vmatprep.subr.mxu0 0.0
        %2331 = vmatpush1.msra.mxu0 0.0
        %2332 = vmatprep.subr.mxu0 0.0
        %2333 = vmatpush1.msra.mxu0 0.0
        %2334 = vmatprep.subr.mxu0 0.0
        %2335 = vmatpush1.msra.mxu0 0.0
        %2336 = vmatprep.subr.mxu0 0.0
        %2337 = vmatpush1.msra.mxu0 0.0
        %2338 = vmatprep.subr.mxu0 0.0
        %2339 = vmatpush1.msra.mxu0 0.0
        %2340 = vmatprep.subr.mxu0 0.0
        %2341 = vmatpush1.msra.mxu0 0.0
        %2342 = vmatprep.subr.mxu0 0.0
        %2343 = vmatpush1.msra.mxu0 0.0
        %2344 = vmatprep.subr.mxu0 0.0
        %2345 = vmatpush1.msra.mxu0 0.0
        %2346 = vmatprep.subr.mxu0 0.0
        %2347 = vmatpush1.msra.mxu0 0.0
        %2348 = vmatprep.subr.mxu0 0.0
        %2349 = vmatpush1.msra.mxu0 0.0
        %2350 = vmatprep.subr.mxu0 0.0
        %2351 = vmatpush1.msra.mxu0 0.0
        %2352 = vmatprep.subr.mxu0 0.0
        %2353 = vmatpush1.msra.mxu0 0.0
        %2354 = vmatprep.subr.mxu0 0.0
        %2355 = vmatpush1.msra.mxu0 0.0
        %2356 = vmatprep.subr.mxu0 0.0
        %2357 = vmatpush1.msra.mxu0 0.0
        %2358 = vmatprep.subr.mxu0 0.0
        %2359 = vmatpush1.msra.mxu0 0.0
        %2360 = vmatprep.subr.mxu0 0.0
        %2361 = vmatpush1.msra.mxu0 0.0
        %2362 = vmatprep.subr.mxu0 0.0
        %2363 = vmatpush1.msra.mxu0 0.0
        %2364 = vmatprep.subr.mxu0 0.0
        %2365 = vmatpush1.msra.mxu0 0.0
        %2366 = vmatprep.subr.mxu0 0.0
        %2367 = vmatpush1.msra.mxu0 0.0
        %2368 = vmatprep.subr.mxu0 0.0
        %2369 = vmatpush1.msra.mxu0 0.0
        %2370 = vmatprep.mubr.f32.mxu0 0.0
        %v2371 = vand.u32 %v1383, 4294901760
        %2372 = vmatmul.mubr.f32.gmra.mrb[0].mxu0 %v2371
        %v2373 = vpop.f32.mrb[0].mxu0
        %v2374 = vadd.f32 %v2281, %v2373
        %v2375 = vpop.f32.mrb[0].mxu0
        %v2376 = vadd.f32 %v2283, %v2375
        %2377 = vmatprep.mubr.f32.mxu0 0.0
        %v2378 = vand.u32 %v1386, 4294901760
        %2379 = vmatmul.mubr.f32.gmra.mrb[0].mxu0 %v2378
        %v2380 = vpop.f32.mrb[0].mxu0
        %v2381 = vadd.f32 %v2290, %v2380
        %v2382 = vpop.f32.mrb[0].mxu0
        %v2383 = vadd.f32 %v2292, %v2382
        %2384 = vdwg.mxu0
        %v2385 = vand.u32 %v1366, 4294901760
        %2386 = vmatprep.subr.mxu0 %v2385
        %v2387 = vand.u32 %v1365, 4294901760
        %2388 = vmatpush1.msra.mxu0 %v2387
        %v2389 = vand.u32 %v1370, 4294901760
        %2390 = vmatprep.subr.mxu0 %v2389
        %v2391 = vand.u32 %v1369, 4294901760
        %2392 = vmatpush1.msra.mxu0 %v2391
        %2393 = vmatprep.subr.mxu0 0.0
        %2394 = vmatpush1.msra.mxu0 0.0
        %2395 = vmatprep.subr.mxu0 0.0
        %2396 = vmatpush1.msra.mxu0 0.0
        %2397 = vmatprep.subr.mxu0 0.0
        %2398 = vmatpush1.msra.mxu0 0.0
        %2399 = vmatprep.subr.mxu0 0.0
        %2400 = vmatpush1.msra.mxu0 0.0
        %2401 = vmatprep.subr.mxu0 0.0
        %2402 = vmatpush1.msra.mxu0 0.0
        %2403 = vmatprep.subr.mxu0 0.0
        %2404 = vmatpush1.msra.mxu0 0.0
        %2405 = vmatprep.subr.mxu0 0.0
        %2406 = vmatpush1.msra.mxu0 0.0
        %2407 = vmatprep.subr.mxu0 0.0
        %2408 = vmatpush1.msra.mxu0 0.0
        %2409 = vmatprep.subr.mxu0 0.0
        %2410 = vmatpush1.msra.mxu0 0.0
        %2411 = vmatprep.subr.mxu0 0.0
        %2412 = vmatpush1.msra.mxu0 0.0
        %2413 = vmatprep.subr.mxu0 0.0
        %2414 = vmatpush1.msra.mxu0 0.0
        %2415 = vmatprep.subr.mxu0 0.0
        %2416 = vmatpush1.msra.mxu0 0.0
        %2417 = vmatprep.subr.mxu0 0.0
        %2418 = vmatpush1.msra.mxu0 0.0
        %2419 = vmatprep.subr.mxu0 0.0
        %2420 = vmatpush1.msra.mxu0 0.0
        %2421 = vmatprep.subr.mxu0 0.0
        %2422 = vmatpush1.msra.mxu0 0.0
        %2423 = vmatprep.subr.mxu0 0.0
        %2424 = vmatpush1.msra.mxu0 0.0
        %2425 = vmatprep.subr.mxu0 0.0
        %2426 = vmatpush1.msra.mxu0 0.0
        %2427 = vmatprep.subr.mxu0 0.0
        %2428 = vmatpush1.msra.mxu0 0.0
        %2429 = vmatprep.subr.mxu0 0.0
        %2430 = vmatpush1.msra.mxu0 0.0
        %2431 = vmatprep.subr.mxu0 0.0
        %2432 = vmatpush1.msra.mxu0 0.0
        %2433 = vmatprep.subr.mxu0 0.0
        %2434 = vmatpush1.msra.mxu0 0.0
        %2435 = vmatprep.subr.mxu0 0.0
        %2436 = vmatpush1.msra.mxu0 0.0
        %2437 = vmatprep.subr.mxu0 0.0
        %2438 = vmatpush1.msra.mxu0 0.0
        %2439 = vmatprep.subr.mxu0 0.0
        %2440 = vmatpush1.msra.mxu0 0.0
        %2441 = vmatprep.subr.mxu0 0.0
        %2442 = vmatpush1.msra.mxu0 0.0
        %2443 = vmatprep.subr.mxu0 0.0
        %2444 = vmatpush1.msra.mxu0 0.0
        %2445 = vmatprep.subr.mxu0 0.0
        %2446 = vmatpush1.msra.mxu0 0.0
        %2447 = vmatprep.subr.mxu0 0.0
        %2448 = vmatpush1.msra.mxu0 0.0
        %2449 = vmatprep.subr.mxu0 0.0
        %2450 = vmatpush1.msra.mxu0 0.0
        %2451 = vmatprep.subr.mxu0 0.0
        %2452 = vmatpush1.msra.mxu0 0.0
        %2453 = vmatprep.mubr.f32.mxu0 0.0
        %v2454 = vand.u32 %v1383, 4294901760
        %2455 = vmatmul.mubr.f32.gmra.mrb[0].mxu0 %v2454
        %v2456 = vpop.f32.mrb[0].mxu0
        %v2457 = vadd.f32 %v2374, %v2456
        %v2458 = vpop.f32.mrb[0].mxu0
        %v2459 = vadd.f32 %v2376, %v2458
        %2460 = vmatprep.mubr.f32.mxu0 0.0
        %v2461 = vand.u32 %v1386, 4294901760
        %2462 = vmatmul.mubr.f32.gmra.mrb[0].mxu0 %v2461
        %v2463 = vpop.f32.mrb[0].mxu0
        %v2464 = vadd.f32 %v2381, %v2463
        %v2465 = vpop.f32.mrb[0].mxu0
        %v2466 = vadd.f32 %v2383, %v2465
        %2467 = vdwg.mxu0
        %v2468 = vmax.f32 %v1917, 0.0
        %v2469 = vmax.f32 %v1919, 0.0
        %v2470 = vmax.f32 %v2457, 0.0
        %v2471 = vmax.f32 %v2459, 0.0
        %v2472 = vmax.f32 %v1924, 0.0
        %v2473 = vmax.f32 %v1926, 0.0
        %v2474 = vmax.f32 %v2464, 0.0
        %v2475 = vmax.f32 %v2466, 0.0
        %2477 = vset.pattern.permute.xlu0 0
        %2478 = vperm.xlu0 %2477, %v289
        %v2479 = vpop.permute.xlu0 %2478
        %v2482 = vsel %vm1381, %v288, 0
        %v2484 = vand.u32 %v2469, 4294901760
        %2485 = vmatprep.subr.mxu0 %v2484
        %v2486 = vand.u32 %v2468, 4294901760
        %2487 = vmatpush1.msra.mxu0 %v2486
        %v2488 = vand.u32 %v2473, 4294901760
        %2489 = vmatprep.subr.mxu0 %v2488
        %v2490 = vand.u32 %v2472, 4294901760
        %2491 = vmatpush1.msra.mxu0 %v2490
        %2492 = vmatprep.subr.mxu0 0.0
        %2493 = vmatpush1.msra.mxu0 0.0
        %2494 = vmatprep.subr.mxu0 0.0
        %2495 = vmatpush1.msra.mxu0 0.0
        %2496 = vmatprep.subr.mxu0 0.0
        %2497 = vmatpush1.msra.mxu0 0.0
        %2498 = vmatprep.subr.mxu0 0.0
        %2499 = vmatpush1.msra.mxu0 0.0
        %2500 = vmatprep.subr.mxu0 0.0
        %2501 = vmatpush1.msra.mxu0 0.0
        %2502 = vmatprep.subr.mxu0 0.0
        %2503 = vmatpush1.msra.mxu0 0.0
        %2504 = vmatprep.subr.mxu0 0.0
        %2505 = vmatpush1.msra.mxu0 0.0
        %2506 = vmatprep.subr.mxu0 0.0
        %2507 = vmatpush1.msra.mxu0 0.0
        %2508 = vmatprep.subr.mxu0 0.0
        %2509 = vmatpush1.msra.mxu0 0.0
        %2510 = vmatprep.subr.mxu0 0.0
        %2511 = vmatpush1.msra.mxu0 0.0
        %2512 = vmatprep.subr.mxu0 0.0
        %2513 = vmatpush1.msra.mxu0 0.0
        %2514 = vmatprep.subr.mxu0 0.0
        %2515 = vmatpush1.msra.mxu0 0.0
        %2516 = vmatprep.subr.mxu0 0.0
        %2517 = vmatpush1.msra.mxu0 0.0
        %2518 = vmatprep.subr.mxu0 0.0
        %2519 = vmatpush1.msra.mxu0 0.0
        %2520 = vmatprep.subr.mxu0 0.0
        %2521 = vmatpush1.msra.mxu0 0.0
        %2522 = vmatprep.subr.mxu0 0.0
        %2523 = vmatpush1.msra.mxu0 0.0
        %2524 = vmatprep.subr.mxu0 0.0
        %2525 = vmatpush1.msra.mxu0 0.0
        %2526 = vmatprep.subr.mxu0 0.0
        %2527 = vmatpush1.msra.mxu0 0.0
        %2528 = vmatprep.subr.mxu0 0.0
        %2529 = vmatpush1.msra.mxu0 0.0
        %2530 = vmatprep.subr.mxu0 0.0
        %2531 = vmatpush1.msra.mxu0 0.0
        %2532 = vmatprep.subr.mxu0 0.0
        %2533 = vmatpush1.msra.mxu0 0.0
        %2534 = vmatprep.subr.mxu0 0.0
        %2535 = vmatpush1.msra.mxu0 0.0
        %2536 = vmatprep.subr.mxu0 0.0
        %2537 = vmatpush1.msra.mxu0 0.0
        %2538 = vmatprep.subr.mxu0 0.0
        %2539 = vmatpush1.msra.mxu0 0.0
        %2540 = vmatprep.subr.mxu0 0.0
        %2541 = vmatpush1.msra.mxu0 0.0
        %2542 = vmatprep.subr.mxu0 0.0
        %2543 = vmatpush1.msra.mxu0 0.0
        %2544 = vmatprep.subr.mxu0 0.0
        %2545 = vmatpush1.msra.mxu0 0.0
        %2546 = vmatprep.subr.mxu0 0.0
        %2547 = vmatpush1.msra.mxu0 0.0
        %2548 = vmatprep.subr.mxu0 0.0
        %2549 = vmatpush1.msra.mxu0 0.0
        %2550 = vmatprep.subr.mxu0 0.0
        %2551 = vmatpush1.msra.mxu0 0.0
        %2552 = vmatprep.mubr.f32.mxu0 0.0
        %v2553 = vand.u32 %v2482, 4294901760
        %v2554 = vsub.f32 %v2482, %v2553
        %v2555 = vand.u32 %v2554, 4294901760
        %v2556 = vsub.f32 %v2554, %v2555
        %v2557 = vand.u32 %v2556, 4294901760
        %2558 = vmatmul.mubr.f32.gmra.mrb[0].mxu0 %v2557
        %v2559 = vpop.f32.mrb[0].mxu0
        %v2560 = vadd.f32 %v2479, %v2559
        %v2561 = vpop.f32.mrb[0].mxu0
        %v2562 = vadd.f32 %v2479, %v2561
        %2563 = vdwg.mxu0
        %v2564 = vand.u32 %v2469, 4294901760
        %v2565 = vsub.f32 %v2469, %v2564
        %v2566 = vand.u32 %v2565, 4294901760
        %v2567 = vsub.f32 %v2565, %v2566
        %v2568 = vand.u32 %v2567, 4294901760
        %2569 = vmatprep.subr.mxu0 %v2568
        %v2570 = vand.u32 %v2468, 4294901760
        %v2571 = vsub.f32 %v2468, %v2570
        %v2572 = vand.u32 %v2571, 4294901760
        %v2573 = vsub.f32 %v2571, %v2572
        %v2574 = vand.u32 %v2573, 4294901760
        %2575 = vmatpush1.msra.mxu0 %v2574
        %v2576 = vand.u32 %v2473, 4294901760
        %v2577 = vsub.f32 %v2473, %v2576
        %v2578 = vand.u32 %v2577, 4294901760
        %v2579 = vsub.f32 %v2577, %v2578
        %v2580 = vand.u32 %v2579, 4294901760
        %2581 = vmatprep.subr.mxu0 %v2580
        %v2582 = vand.u32 %v2472, 4294901760
        %v2583 = vsub.f32 %v2472, %v2582
        %v2584 = vand.u32 %v2583, 4294901760
        %v2585 = vsub.f32 %v2583, %v2584
        %v2586 = vand.u32 %v2585, 4294901760
        %2587 = vmatpush1.msra.mxu0 %v2586
        %2588 = vmatprep.subr.mxu0 0.0
        %2589 = vmatpush1.msra.mxu0 0.0
        %2590 = vmatprep.subr.mxu0 0.0
        %2591 = vmatpush1.msra.mxu0 0.0
        %2592 = vmatprep.subr.mxu0 0.0
        %2593 = vmatpush1.msra.mxu0 0.0
        %2594 = vmatprep.subr.mxu0 0.0
        %2595 = vmatpush1.msra.mxu0 0.0
        %2596 = vmatprep.subr.mxu0 0.0
        %2597 = vmatpush1.msra.mxu0 0.0
        %2598 = vmatprep.subr.mxu0 0.0
        %2599 = vmatpush1.msra.mxu0 0.0
        %2600 = vmatprep.subr.mxu0 0.0
        %2601 = vmatpush1.msra.mxu0 0.0
        %2602 = vmatprep.subr.mxu0 0.0
        %2603 = vmatpush1.msra.mxu0 0.0
        %2604 = vmatprep.subr.mxu0 0.0
        %2605 = vmatpush1.msra.mxu0 0.0
        %2606 = vmatprep.subr.mxu0 0.0
        %2607 = vmatpush1.msra.mxu0 0.0
        %2608 = vmatprep.subr.mxu0 0.0
        %2609 = vmatpush1.msra.mxu0 0.0
        %2610 = vmatprep.subr.mxu0 0.0
        %2611 = vmatpush1.msra.mxu0 0.0
        %2612 = vmatprep.subr.mxu0 0.0
        %2613 = vmatpush1.msra.mxu0 0.0
        %2614 = vmatprep.subr.mxu0 0.0
        %2615 = vmatpush1.msra.mxu0 0.0
        %2616 = vmatprep.subr.mxu0 0.0
        %2617 = vmatpush1.msra.mxu0 0.0
        %2618 = vmatprep.subr.mxu0 0.0
        %2619 = vmatpush1.msra.mxu0 0.0
        %2620 = vmatprep.subr.mxu0 0.0
        %2621 = vmatpush1.msra.mxu0 0.0
        %2622 = vmatprep.subr.mxu0 0.0
        %2623 = vmatpush1.msra.mxu0 0.0
        %2624 = vmatprep.subr.mxu0 0.0
        %2625 = vmatpush1.msra.mxu0 0.0
        %2626 = vmatprep.subr.mxu0 0.0
        %2627 = vmatpush1.msra.mxu0 0.0
        %2628 = vmatprep.subr.mxu0 0.0
        %2629 = vmatpush1.msra.mxu0 0.0
        %2630 = vmatprep.subr.mxu0 0.0
        %2631 = vmatpush1.msra.mxu0 0.0
        %2632 = vmatprep.subr.mxu0 0.0
        %2633 = vmatpush1.msra.mxu0 0.0
        %2634 = vmatprep.subr.mxu0 0.0
        %2635 = vmatpush1.msra.mxu0 0.0
        %2636 = vmatprep.subr.mxu0 0.0
        %2637 = vmatpush1.msra.mxu0 0.0
        %2638 = vmatprep.subr.mxu0 0.0
        %2639 = vmatpush1.msra.mxu0 0.0
        %2640 = vmatprep.subr.mxu0 0.0
        %2641 = vmatpush1.msra.mxu0 0.0
        %2642 = vmatprep.subr.mxu0 0.0
        %2643 = vmatpush1.msra.mxu0 0.0
        %2644 = vmatprep.subr.mxu0 0.0
        %2645 = vmatpush1.msra.mxu0 0.0
        %2646 = vmatprep.subr.mxu0 0.0
        %2647 = vmatpush1.msra.mxu0 0.0
        %2648 = vmatprep.mubr.f32.mxu0 0.0
        %v2649 = vand.u32 %v2482, 4294901760
        %2650 = vmatmul.mubr.f32.gmra.mrb[0].mxu0 %v2649
        %v2651 = vpop.f32.mrb[0].mxu0
        %v2652 = vadd.f32 %v2560, %v2651
        %v2653 = vpop.f32.mrb[0].mxu0
        %v2654 = vadd.f32 %v2562, %v2653
        %2655 = vdwg.mxu0
        %v2656 = vand.u32 %v2469, 4294901760
        %v2657 = vsub.f32 %v2469, %v2656
        %2658 = vmatprep.subr.mxu0 %v2657
        %v2659 = vand.u32 %v2468, 4294901760
        %v2660 = vsub.f32 %v2468, %v2659
        %2661 = vmatpush1.msra.mxu0 %v2660
        %v2662 = vand.u32 %v2473, 4294901760
        %v2663 = vsub.f32 %v2473, %v2662
        %2664 = vmatprep.subr.mxu0 %v2663
        %v2665 = vand.u32 %v2472, 4294901760
        %v2666 = vsub.f32 %v2472, %v2665
        %2667 = vmatpush1.msra.mxu0 %v2666
        %2668 = vmatprep.subr.mxu0 0.0
        %2669 = vmatpush1.msra.mxu0 0.0
        %2670 = vmatprep.subr.mxu0 0.0
        %2671 = vmatpush1.msra.mxu0 0.0
        %2672 = vmatprep.subr.mxu0 0.0
        %2673 = vmatpush1.msra.mxu0 0.0
        %2674 = vmatprep.subr.mxu0 0.0
        %2675 = vmatpush1.msra.mxu0 0.0
        %2676 = vmatprep.subr.mxu0 0.0
        %2677 = vmatpush1.msra.mxu0 0.0
        %2678 = vmatprep.subr.mxu0 0.0
        %2679 = vmatpush1.msra.mxu0 0.0
        %2680 = vmatprep.subr.mxu0 0.0
        %2681 = vmatpush1.msra.mxu0 0.0
        %2682 = vmatprep.subr.mxu0 0.0
        %2683 = vmatpush1.msra.mxu0 0.0
        %2684 = vmatprep.subr.mxu0 0.0
        %2685 = vmatpush1.msra.mxu0 0.0
        %2686 = vmatprep.subr.mxu0 0.0
        %2687 = vmatpush1.msra.mxu0 0.0
        %2688 = vmatprep.subr.mxu0 0.0
        %2689 = vmatpush1.msra.mxu0 0.0
        %2690 = vmatprep.subr.mxu0 0.0
        %2691 = vmatpush1.msra.mxu0 0.0
        %2692 = vmatprep.subr.mxu0 0.0
        %2693 = vmatpush1.msra.mxu0 0.0
        %2694 = vmatprep.subr.mxu0 0.0
        %2695 = vmatpush1.msra.mxu0 0.0
        %2696 = vmatprep.subr.mxu0 0.0
        %2697 = vmatpush1.msra.mxu0 0.0
        %2698 = vmatprep.subr.mxu0 0.0
        %2699 = vmatpush1.msra.mxu0 0.0
        %2700 = vmatprep.subr.mxu0 0.0
        %2701 = vmatpush1.msra.mxu0 0.0
        %2702 = vmatprep.subr.mxu0 0.0
        %2703 = vmatpush1.msra.mxu0 0.0
        %2704 = vmatprep.subr.mxu0 0.0
        %2705 = vmatpush1.msra.mxu0 0.0
        %2706 = vmatprep.subr.mxu0 0.0
        %2707 = vmatpush1.msra.mxu0 0.0
        %2708 = vmatprep.subr.mxu0 0.0
        %2709 = vmatpush1.msra.mxu0 0.0
        %2710 = vmatprep.subr.mxu0 0.0
        %2711 = vmatpush1.msra.mxu0 0.0
        %2712 = vmatprep.subr.mxu0 0.0
        %2713 = vmatpush1.msra.mxu0 0.0
        %2714 = vmatprep.subr.mxu0 0.0
        %2715 = vmatpush1.msra.mxu0 0.0
        %2716 = vmatprep.subr.mxu0 0.0
        %2717 = vmatpush1.msra.mxu0 0.0
        %2718 = vmatprep.subr.mxu0 0.0
        %2719 = vmatpush1.msra.mxu0 0.0
        %2720 = vmatprep.subr.mxu0 0.0
        %2721 = vmatpush1.msra.mxu0 0.0
        %2722 = vmatprep.subr.mxu0 0.0
        %2723 = vmatpush1.msra.mxu0 0.0
        %2724 = vmatprep.subr.mxu0 0.0
        %2725 = vmatpush1.msra.mxu0 0.0
        %2726 = vmatprep.subr.mxu0 0.0
        %2727 = vmatpush1.msra.mxu0 0.0
        %2728 = vmatprep.mubr.f32.mxu0 0.0
        %v2729 = vand.u32 %v2482, 4294901760
        %v2730 = vsub.f32 %v2482, %v2729
        %2731 = vmatmul.mubr.f32.gmra.mrb[0].mxu0 %v2730
        %v2732 = vpop.f32.mrb[0].mxu0
        %v2733 = vadd.f32 %v2652, %v2732
        %v2734 = vpop.f32.mrb[0].mxu0
        %v2735 = vadd.f32 %v2654, %v2734
        %2736 = vdwg.mxu0
        %v2737 = vand.u32 %v2469, 4294901760
        %2738 = vmatprep.subr.mxu0 %v2737
        %v2739 = vand.u32 %v2468, 4294901760
        %2740 = vmatpush1.msra.mxu0 %v2739
        %v2741 = vand.u32 %v2473, 4294901760
        %2742 = vmatprep.subr.mxu0 %v2741
        %v2743 = vand.u32 %v2472, 4294901760
        %2744 = vmatpush1.msra.mxu0 %v2743
        %2745 = vmatprep.subr.mxu0 0.0
        %2746 = vmatpush1.msra.mxu0 0.0
        %2747 = vmatprep.subr.mxu0 0.0
        %2748 = vmatpush1.msra.mxu0 0.0
        %2749 = vmatprep.subr.mxu0 0.0
        %2750 = vmatpush1.msra.mxu0 0.0
        %2751 = vmatprep.subr.mxu0 0.0
        %2752 = vmatpush1.msra.mxu0 0.0
        %2753 = vmatprep.subr.mxu0 0.0
        %2754 = vmatpush1.msra.mxu0 0.0
        %2755 = vmatprep.subr.mxu0 0.0
        %2756 = vmatpush1.msra.mxu0 0.0
        %2757 = vmatprep.subr.mxu0 0.0
        %2758 = vmatpush1.msra.mxu0 0.0
        %2759 = vmatprep.subr.mxu0 0.0
        %2760 = vmatpush1.msra.mxu0 0.0
        %2761 = vmatprep.subr.mxu0 0.0
        %2762 = vmatpush1.msra.mxu0 0.0
        %2763 = vmatprep.subr.mxu0 0.0
        %2764 = vmatpush1.msra.mxu0 0.0
        %2765 = vmatprep.subr.mxu0 0.0
        %2766 = vmatpush1.msra.mxu0 0.0
        %2767 = vmatprep.subr.mxu0 0.0
        %2768 = vmatpush1.msra.mxu0 0.0
        %2769 = vmatprep.subr.mxu0 0.0
        %2770 = vmatpush1.msra.mxu0 0.0
        %2771 = vmatprep.subr.mxu0 0.0
        %2772 = vmatpush1.msra.mxu0 0.0
        %2773 = vmatprep.subr.mxu0 0.0
        %2774 = vmatpush1.msra.mxu0 0.0
        %2775 = vmatprep.subr.mxu0 0.0
        %2776 = vmatpush1.msra.mxu0 0.0
        %2777 = vmatprep.subr.mxu0 0.0
        %2778 = vmatpush1.msra.mxu0 0.0
        %2779 = vmatprep.subr.mxu0 0.0
        %2780 = vmatpush1.msra.mxu0 0.0
        %2781 = vmatprep.subr.mxu0 0.0
        %2782 = vmatpush1.msra.mxu0 0.0
        %2783 = vmatprep.subr.mxu0 0.0
        %2784 = vmatpush1.msra.mxu0 0.0
        %2785 = vmatprep.subr.mxu0 0.0
        %2786 = vmatpush1.msra.mxu0 0.0
        %2787 = vmatprep.subr.mxu0 0.0
        %2788 = vmatpush1.msra.mxu0 0.0
        %2789 = vmatprep.subr.mxu0 0.0
        %2790 = vmatpush1.msra.mxu0 0.0
        %2791 = vmatprep.subr.mxu0 0.0
        %2792 = vmatpush1.msra.mxu0 0.0
        %2793 = vmatprep.subr.mxu0 0.0
        %2794 = vmatpush1.msra.mxu0 0.0
        %2795 = vmatprep.subr.mxu0 0.0
        %2796 = vmatpush1.msra.mxu0 0.0
        %2797 = vmatprep.subr.mxu0 0.0
        %2798 = vmatpush1.msra.mxu0 0.0
        %2799 = vmatprep.subr.mxu0 0.0
        %2800 = vmatpush1.msra.mxu0 0.0
        %2801 = vmatprep.subr.mxu0 0.0
        %2802 = vmatpush1.msra.mxu0 0.0
        %2803 = vmatprep.subr.mxu0 0.0
        %2804 = vmatpush1.msra.mxu0 0.0
        %2805 = vmatprep.mubr.f32.mxu0 0.0
        %v2806 = vand.u32 %v2482, 4294901760
        %v2807 = vsub.f32 %v2482, %v2806
        %v2808 = vand.u32 %v2807, 4294901760
        %2809 = vmatmul.mubr.f32.gmra.mrb[0].mxu0 %v2808
        %v2810 = vpop.f32.mrb[0].mxu0
        %v2811 = vadd.f32 %v2733, %v2810
        %v2812 = vpop.f32.mrb[0].mxu0
        %v2813 = vadd.f32 %v2735, %v2812
        %2814 = vdwg.mxu0
        %v2815 = vand.u32 %v2469, 4294901760
        %v2816 = vsub.f32 %v2469, %v2815
        %v2817 = vand.u32 %v2816, 4294901760
        %2818 = vmatprep.subr.mxu0 %v2817
        %v2819 = vand.u32 %v2468, 4294901760
        %v2820 = vsub.f32 %v2468, %v2819
        %v2821 = vand.u32 %v2820, 4294901760
        %2822 = vmatpush1.msra.mxu0 %v2821
        %v2823 = vand.u32 %v2473, 4294901760
        %v2824 = vsub.f32 %v2473, %v2823
        %v2825 = vand.u32 %v2824, 4294901760
        %2826 = vmatprep.subr.mxu0 %v2825
        %v2827 = vand.u32 %v2472, 4294901760
        %v2828 = vsub.f32 %v2472, %v2827
        %v2829 = vand.u32 %v2828, 4294901760
        %2830 = vmatpush1.msra.mxu0 %v2829
        %2831 = vmatprep.subr.mxu0 0.0
        %2832 = vmatpush1.msra.mxu0 0.0
        %2833 = vmatprep.subr.mxu0 0.0
        %2834 = vmatpush1.msra.mxu0 0.0
        %2835 = vmatprep.subr.mxu0 0.0
        %2836 = vmatpush1.msra.mxu0 0.0
        %2837 = vmatprep.subr.mxu0 0.0
        %2838 = vmatpush1.msra.mxu0 0.0
        %2839 = vmatprep.subr.mxu0 0.0
        %2840 = vmatpush1.msra.mxu0 0.0
        %2841 = vmatprep.subr.mxu0 0.0
        %2842 = vmatpush1.msra.mxu0 0.0
        %2843 = vmatprep.subr.mxu0 0.0
        %2844 = vmatpush1.msra.mxu0 0.0
        %2845 = vmatprep.subr.mxu0 0.0
        %2846 = vmatpush1.msra.mxu0 0.0
        %2847 = vmatprep.subr.mxu0 0.0
        %2848 = vmatpush1.msra.mxu0 0.0
        %2849 = vmatprep.subr.mxu0 0.0
        %2850 = vmatpush1.msra.mxu0 0.0
        %2851 = vmatprep.subr.mxu0 0.0
        %2852 = vmatpush1.msra.mxu0 0.0
        %2853 = vmatprep.subr.mxu0 0.0
        %2854 = vmatpush1.msra.mxu0 0.0
        %2855 = vmatprep.subr.mxu0 0.0
        %2856 = vmatpush1.msra.mxu0 0.0
        %2857 = vmatprep.subr.mxu0 0.0
        %2858 = vmatpush1.msra.mxu0 0.0
        %2859 = vmatprep.subr.mxu0 0.0
        %2860 = vmatpush1.msra.mxu0 0.0
        %2861 = vmatprep.subr.mxu0 0.0
        %2862 = vmatpush1.msra.mxu0 0.0
        %2863 = vmatprep.subr.mxu0 0.0
        %2864 = vmatpush1.msra.mxu0 0.0
        %2865 = vmatprep.subr.mxu0 0.0
        %2866 = vmatpush1.msra.mxu0 0.0
        %2867 = vmatprep.subr.mxu0 0.0
        %2868 = vmatpush1.msra.mxu0 0.0
        %2869 = vmatprep.subr.mxu0 0.0
        %2870 = vmatpush1.msra.mxu0 0.0
        %2871 = vmatprep.subr.mxu0 0.0
        %2872 = vmatpush1.msra.mxu0 0.0
        %2873 = vmatprep.subr.mxu0 0.0
        %2874 = vmatpush1.msra.mxu0 0.0
        %2875 = vmatprep.subr.mxu0 0.0
        %2876 = vmatpush1.msra.mxu0 0.0
        %2877 = vmatprep.subr.mxu0 0.0
        %2878 = vmatpush1.msra.mxu0 0.0
        %2879 = vmatprep.subr.mxu0 0.0
        %2880 = vmatpush1.msra.mxu0 0.0
        %2881 = vmatprep.subr.mxu0 0.0
        %2882 = vmatpush1.msra.mxu0 0.0
        %2883 = vmatprep.subr.mxu0 0.0
        %2884 = vmatpush1.msra.mxu0 0.0
        %2885 = vmatprep.subr.mxu0 0.0
        %2886 = vmatpush1.msra.mxu0 0.0
        %2887 = vmatprep.subr.mxu0 0.0
        %2888 = vmatpush1.msra.mxu0 0.0
        %2889 = vmatprep.subr.mxu0 0.0
        %2890 = vmatpush1.msra.mxu0 0.0
        %2891 = vmatprep.mubr.f32.mxu0 0.0
        %v2892 = vand.u32 %v2482, 4294901760
        %2893 = vmatmul.mubr.f32.gmra.mrb[0].mxu0 %v2892
        %v2894 = vpop.f32.mrb[0].mxu0
        %v2895 = vadd.f32 %v2811, %v2894
        %v2896 = vpop.f32.mrb[0].mxu0
        %v2897 = vadd.f32 %v2813, %v2896
        %2898 = vdwg.mxu0
        %v2899 = vand.u32 %v2469, 4294901760
        %2900 = vmatprep.subr.mxu0 %v2899
        %v2901 = vand.u32 %v2468, 4294901760
        %2902 = vmatpush1.msra.mxu0 %v2901
        %v2903 = vand.u32 %v2473, 4294901760
        %2904 = vmatprep.subr.mxu0 %v2903
        %v2905 = vand.u32 %v2472, 4294901760
        %2906 = vmatpush1.msra.mxu0 %v2905
        %2907 = vmatprep.subr.mxu0 0.0
        %2908 = vmatpush1.msra.mxu0 0.0
        %2909 = vmatprep.subr.mxu0 0.0
        %2910 = vmatpush1.msra.mxu0 0.0
        %2911 = vmatprep.subr.mxu0 0.0
        %2912 = vmatpush1.msra.mxu0 0.0
        %2913 = vmatprep.subr.mxu0 0.0
        %2914 = vmatpush1.msra.mxu0 0.0
        %2915 = vmatprep.subr.mxu0 0.0
        %2916 = vmatpush1.msra.mxu0 0.0
        %2917 = vmatprep.subr.mxu0 0.0
        %2918 = vmatpush1.msra.mxu0 0.0
        %2919 = vmatprep.subr.mxu0 0.0
        %2920 = vmatpush1.msra.mxu0 0.0
        %2921 = vmatprep.subr.mxu0 0.0
        %2922 = vmatpush1.msra.mxu0 0.0
        %2923 = vmatprep.subr.mxu0 0.0
        %2924 = vmatpush1.msra.mxu0 0.0
        %2925 = vmatprep.subr.mxu0 0.0
        %2926 = vmatpush1.msra.mxu0 0.0
        %2927 = vmatprep.subr.mxu0 0.0
        %2928 = vmatpush1.msra.mxu0 0.0
        %2929 = vmatprep.subr.mxu0 0.0
        %2930 = vmatpush1.msra.mxu0 0.0
        %2931 = vmatprep.subr.mxu0 0.0
        %2932 = vmatpush1.msra.mxu0 0.0
        %2933 = vmatprep.subr.mxu0 0.0
        %2934 = vmatpush1.msra.mxu0 0.0
        %2935 = vmatprep.subr.mxu0 0.0
        %2936 = vmatpush1.msra.mxu0 0.0
        %2937 = vmatprep.subr.mxu0 0.0
        %2938 = vmatpush1.msra.mxu0 0.0
        %2939 = vmatprep.subr.mxu0 0.0
        %2940 = vmatpush1.msra.mxu0 0.0
        %2941 = vmatprep.subr.mxu0 0.0
        %2942 = vmatpush1.msra.mxu0 0.0
        %2943 = vmatprep.subr.mxu0 0.0
        %2944 = vmatpush1.msra.mxu0 0.0
        %2945 = vmatprep.subr.mxu0 0.0
        %2946 = vmatpush1.msra.mxu0 0.0
        %2947 = vmatprep.subr.mxu0 0.0
        %2948 = vmatpush1.msra.mxu0 0.0
        %2949 = vmatprep.subr.mxu0 0.0
        %2950 = vmatpush1.msra.mxu0 0.0
        %2951 = vmatprep.subr.mxu0 0.0
        %2952 = vmatpush1.msra.mxu0 0.0
        %2953 = vmatprep.subr.mxu0 0.0
        %2954 = vmatpush1.msra.mxu0 0.0
        %2955 = vmatprep.subr.mxu0 0.0
        %2956 = vmatpush1.msra.mxu0 0.0
        %2957 = vmatprep.subr.mxu0 0.0
        %2958 = vmatpush1.msra.mxu0 0.0
        %2959 = vmatprep.subr.mxu0 0.0
        %2960 = vmatpush1.msra.mxu0 0.0
        %2961 = vmatprep.subr.mxu0 0.0
        %2962 = vmatpush1.msra.mxu0 0.0
        %2963 = vmatprep.subr.mxu0 0.0
        %2964 = vmatpush1.msra.mxu0 0.0
        %2965 = vmatprep.subr.mxu0 0.0
        %2966 = vmatpush1.msra.mxu0 0.0
        %2967 = vmatprep.mubr.f32.mxu0 0.0
        %v2968 = vand.u32 %v2482, 4294901760
        %2969 = vmatmul.mubr.f32.gmra.mrb[0].mxu0 %v2968
        %v2970 = vpop.f32.mrb[0].mxu0
        %v2971 = vadd.f32 %v2895, %v2970
        %v2972 = vpop.f32.mrb[0].mxu0
        %v2973 = vadd.f32 %v2897, %v2972
        %2974 = vdwg.mxu0
        %v2975 = vand.u32 %v2471, 4294901760
        %2976 = vmatprep.subr.mxu0 %v2975
        %v2977 = vand.u32 %v2470, 4294901760
        %2978 = vmatpush1.msra.mxu0 %v2977
        %v2979 = vand.u32 %v2475, 4294901760
        %2980 = vmatprep.subr.mxu0 %v2979
        %v2981 = vand.u32 %v2474, 4294901760
        %2982 = vmatpush1.msra.mxu0 %v2981
        %2983 = vmatprep.subr.mxu0 0.0
        %2984 = vmatpush1.msra.mxu0 0.0
        %2985 = vmatprep.subr.mxu0 0.0
        %2986 = vmatpush1.msra.mxu0 0.0
        %2987 = vmatprep.subr.mxu0 0.0
        %2988 = vmatpush1.msra.mxu0 0.0
        %2989 = vmatprep.subr.mxu0 0.0
        %2990 = vmatpush1.msra.mxu0 0.0
        %2991 = vmatprep.subr.mxu0 0.0
        %2992 = vmatpush1.msra.mxu0 0.0
        %2993 = vmatprep.subr.mxu0 0.0
        %2994 = vmatpush1.msra.mxu0 0.0
        %2995 = vmatprep.subr.mxu0 0.0
        %2996 = vmatpush1.msra.mxu0 0.0
        %2997 = vmatprep.subr.mxu0 0.0
        %2998 = vmatpush1.msra.mxu0 0.0
        %2999 = vmatprep.subr.mxu0 0.0
        %3000 = vmatpush1.msra.mxu0 0.0
        %3001 = vmatprep.subr.mxu0 0.0
        %3002 = vmatpush1.msra.mxu0 0.0
        %3003 = vmatprep.subr.mxu0 0.0
        %3004 = vmatpush1.msra.mxu0 0.0
        %3005 = vmatprep.subr.mxu0 0.0
        %3006 = vmatpush1.msra.mxu0 0.0
        %3007 = vmatprep.subr.mxu0 0.0
        %3008 = vmatpush1.msra.mxu0 0.0
        %3009 = vmatprep.subr.mxu0 0.0
        %3010 = vmatpush1.msra.mxu0 0.0
        %3011 = vmatprep.subr.mxu0 0.0
        %3012 = vmatpush1.msra.mxu0 0.0
        %3013 = vmatprep.subr.mxu0 0.0
        %3014 = vmatpush1.msra.mxu0 0.0
        %3015 = vmatprep.subr.mxu0 0.0
        %3016 = vmatpush1.msra.mxu0 0.0
        %3017 = vmatprep.subr.mxu0 0.0
        %3018 = vmatpush1.msra.mxu0 0.0
        %3019 = vmatprep.subr.mxu0 0.0
        %3020 = vmatpush1.msra.mxu0 0.0
        %3021 = vmatprep.subr.mxu0 0.0
        %3022 = vmatpush1.msra.mxu0 0.0
        %3023 = vmatprep.subr.mxu0 0.0
        %3024 = vmatpush1.msra.mxu0 0.0
        %3025 = vmatprep.subr.mxu0 0.0
        %3026 = vmatpush1.msra.mxu0 0.0
        %3027 = vmatprep.subr.mxu0 0.0
        %3028 = vmatpush1.msra.mxu0 0.0
        %3029 = vmatprep.subr.mxu0 0.0
        %3030 = vmatpush1.msra.mxu0 0.0
        %3031 = vmatprep.subr.mxu0 0.0
        %3032 = vmatpush1.msra.mxu0 0.0
        %3033 = vmatprep.subr.mxu0 0.0
        %3034 = vmatpush1.msra.mxu0 0.0
        %3035 = vmatprep.subr.mxu0 0.0
        %3036 = vmatpush1.msra.mxu0 0.0
        %3037 = vmatprep.subr.mxu0 0.0
        %3038 = vmatpush1.msra.mxu0 0.0
        %3039 = vmatprep.subr.mxu0 0.0
        %3040 = vmatpush1.msra.mxu0 0.0
        %3041 = vmatprep.subr.mxu0 0.0
        %3042 = vmatpush1.msra.mxu0 0.0
        %3043 = vmatprep.mubr.f32.mxu0 0.0
        %v3044 = vand.u32 %v2482, 4294901760
        %v3045 = vsub.f32 %v2482, %v3044
        %v3046 = vand.u32 %v3045, 4294901760
        %v3047 = vsub.f32 %v3045, %v3046
        %v3048 = vand.u32 %v3047, 4294901760
        %3049 = vmatmul.mubr.f32.gmra.mrb[0].mxu0 %v3048
        %v3050 = vpop.f32.mrb[0].mxu0
        %v3051 = vadd.f32 %v2479, %v3050
        %v3052 = vpop.f32.mrb[0].mxu0
        %v3053 = vadd.f32 %v2479, %v3052
        %3054 = vdwg.mxu0
        %v3055 = vand.u32 %v2471, 4294901760
        %v3056 = vsub.f32 %v2471, %v3055
        %v3057 = vand.u32 %v3056, 4294901760
        %v3058 = vsub.f32 %v3056, %v3057
        %v3059 = vand.u32 %v3058, 4294901760
        %3060 = vmatprep.subr.mxu0 %v3059
        %v3061 = vand.u32 %v2470, 4294901760
        %v3062 = vsub.f32 %v2470, %v3061
        %v3063 = vand.u32 %v3062, 4294901760
        %v3064 = vsub.f32 %v3062, %v3063
        %v3065 = vand.u32 %v3064, 4294901760
        %3066 = vmatpush1.msra.mxu0 %v3065
        %v3067 = vand.u32 %v2475, 4294901760
        %v3068 = vsub.f32 %v2475, %v3067
        %v3069 = vand.u32 %v3068, 4294901760
        %v3070 = vsub.f32 %v3068, %v3069
        %v3071 = vand.u32 %v3070, 4294901760
        %3072 = vmatprep.subr.mxu0 %v3071
        %v3073 = vand.u32 %v2474, 4294901760
        %v3074 = vsub.f32 %v2474, %v3073
        %v3075 = vand.u32 %v3074, 4294901760
        %v3076 = vsub.f32 %v3074, %v3075
        %v3077 = vand.u32 %v3076, 4294901760
        %3078 = vmatpush1.msra.mxu0 %v3077
        %3079 = vmatprep.subr.mxu0 0.0
        %3080 = vmatpush1.msra.mxu0 0.0
        %3081 = vmatprep.subr.mxu0 0.0
        %3082 = vmatpush1.msra.mxu0 0.0
        %3083 = vmatprep.subr.mxu0 0.0
        %3084 = vmatpush1.msra.mxu0 0.0
        %3085 = vmatprep.subr.mxu0 0.0
        %3086 = vmatpush1.msra.mxu0 0.0
        %3087 = vmatprep.subr.mxu0 0.0
        %3088 = vmatpush1.msra.mxu0 0.0
        %3089 = vmatprep.subr.mxu0 0.0
        %3090 = vmatpush1.msra.mxu0 0.0
        %3091 = vmatprep.subr.mxu0 0.0
        %3092 = vmatpush1.msra.mxu0 0.0
        %3093 = vmatprep.subr.mxu0 0.0
        %3094 = vmatpush1.msra.mxu0 0.0
        %3095 = vmatprep.subr.mxu0 0.0
        %3096 = vmatpush1.msra.mxu0 0.0
        %3097 = vmatprep.subr.mxu0 0.0
        %3098 = vmatpush1.msra.mxu0 0.0
        %3099 = vmatprep.subr.mxu0 0.0
        %3100 = vmatpush1.msra.mxu0 0.0
        %3101 = vmatprep.subr.mxu0 0.0
        %3102 = vmatpush1.msra.mxu0 0.0
        %3103 = vmatprep.subr.mxu0 0.0
        %3104 = vmatpush1.msra.mxu0 0.0
        %3105 = vmatprep.subr.mxu0 0.0
        %3106 = vmatpush1.msra.mxu0 0.0
        %3107 = vmatprep.subr.mxu0 0.0
        %3108 = vmatpush1.msra.mxu0 0.0
        %3109 = vmatprep.subr.mxu0 0.0
        %3110 = vmatpush1.msra.mxu0 0.0
        %3111 = vmatprep.subr.mxu0 0.0
        %3112 = vmatpush1.msra.mxu0 0.0
        %3113 = vmatprep.subr.mxu0 0.0
        %3114 = vmatpush1.msra.mxu0 0.0
        %3115 = vmatprep.subr.mxu0 0.0
        %3116 = vmatpush1.msra.mxu0 0.0
        %3117 = vmatprep.subr.mxu0 0.0
        %3118 = vmatpush1.msra.mxu0 0.0
        %3119 = vmatprep.subr.mxu0 0.0
        %3120 = vmatpush1.msra.mxu0 0.0
        %3121 = vmatprep.subr.mxu0 0.0
        %3122 = vmatpush1.msra.mxu0 0.0
        %3123 = vmatprep.subr.mxu0 0.0
        %3124 = vmatpush1.msra.mxu0 0.0
        %3125 = vmatprep.subr.mxu0 0.0
        %3126 = vmatpush1.msra.mxu0 0.0
        %3127 = vmatprep.subr.mxu0 0.0
        %3128 = vmatpush1.msra.mxu0 0.0
        %3129 = vmatprep.subr.mxu0 0.0
        %3130 = vmatpush1.msra.mxu0 0.0
        %3131 = vmatprep.subr.mxu0 0.0
        %3132 = vmatpush1.msra.mxu0 0.0
        %3133 = vmatprep.subr.mxu0 0.0
        %3134 = vmatpush1.msra.mxu0 0.0
        %3135 = vmatprep.subr.mxu0 0.0
        %3136 = vmatpush1.msra.mxu0 0.0
        %3137 = vmatprep.subr.mxu0 0.0
        %3138 = vmatpush1.msra.mxu0 0.0
        %3139 = vmatprep.mubr.f32.mxu0 0.0
        %v3140 = vand.u32 %v2482, 4294901760
        %3141 = vmatmul.mubr.f32.gmra.mrb[0].mxu0 %v3140
        %v3142 = vpop.f32.mrb[0].mxu0
        %v3143 = vadd.f32 %v3051, %v3142
        %v3144 = vpop.f32.mrb[0].mxu0
        %v3145 = vadd.f32 %v3053, %v3144
        %3146 = vdwg.mxu0
        %v3147 = vand.u32 %v2471, 4294901760
        %v3148 = vsub.f32 %v2471, %v3147
        %3149 = vmatprep.subr.mxu0 %v3148
        %v3150 = vand.u32 %v2470, 4294901760
        %v3151 = vsub.f32 %v2470, %v3150
        %3152 = vmatpush1.msra.mxu0 %v3151
        %v3153 = vand.u32 %v2475, 4294901760
        %v3154 = vsub.f32 %v2475, %v3153
        %3155 = vmatprep.subr.mxu0 %v3154
        %v3156 = vand.u32 %v2474, 4294901760
        %v3157 = vsub.f32 %v2474, %v3156
        %3158 = vmatpush1.msra.mxu0 %v3157
        %3159 = vmatprep.subr.mxu0 0.0
        %3160 = vmatpush1.msra.mxu0 0.0
        %3161 = vmatprep.subr.mxu0 0.0
        %3162 = vmatpush1.msra.mxu0 0.0
        %3163 = vmatprep.subr.mxu0 0.0
        %3164 = vmatpush1.msra.mxu0 0.0
        %3165 = vmatprep.subr.mxu0 0.0
        %3166 = vmatpush1.msra.mxu0 0.0
        %3167 = vmatprep.subr.mxu0 0.0
        %3168 = vmatpush1.msra.mxu0 0.0
        %3169 = vmatprep.subr.mxu0 0.0
        %3170 = vmatpush1.msra.mxu0 0.0
        %3171 = vmatprep.subr.mxu0 0.0
        %3172 = vmatpush1.msra.mxu0 0.0
        %3173 = vmatprep.subr.mxu0 0.0
        %3174 = vmatpush1.msra.mxu0 0.0
        %3175 = vmatprep.subr.mxu0 0.0
        %3176 = vmatpush1.msra.mxu0 0.0
        %3177 = vmatprep.subr.mxu0 0.0
        %3178 = vmatpush1.msra.mxu0 0.0
        %3179 = vmatprep.subr.mxu0 0.0
        %3180 = vmatpush1.msra.mxu0 0.0
        %3181 = vmatprep.subr.mxu0 0.0
        %3182 = vmatpush1.msra.mxu0 0.0
        %3183 = vmatprep.subr.mxu0 0.0
        %3184 = vmatpush1.msra.mxu0 0.0
        %3185 = vmatprep.subr.mxu0 0.0
        %3186 = vmatpush1.msra.mxu0 0.0
        %3187 = vmatprep.subr.mxu0 0.0
        %3188 = vmatpush1.msra.mxu0 0.0
        %3189 = vmatprep.subr.mxu0 0.0
        %3190 = vmatpush1.msra.mxu0 0.0
        %3191 = vmatprep.subr.mxu0 0.0
        %3192 = vmatpush1.msra.mxu0 0.0
        %3193 = vmatprep.subr.mxu0 0.0
        %3194 = vmatpush1.msra.mxu0 0.0
        %3195 = vmatprep.subr.mxu0 0.0
        %3196 = vmatpush1.msra.mxu0 0.0
        %3197 = vmatprep.subr.mxu0 0.0
        %3198 = vmatpush1.msra.mxu0 0.0
        %3199 = vmatprep.subr.mxu0 0.0
        %3200 = vmatpush1.msra.mxu0 0.0
        %3201 = vmatprep.subr.mxu0 0.0
        %3202 = vmatpush1.msra.mxu0 0.0
        %3203 = vmatprep.subr.mxu0 0.0
        %3204 = vmatpush1.msra.mxu0 0.0
        %3205 = vmatprep.subr.mxu0 0.0
        %3206 = vmatpush1.msra.mxu0 0.0
        %3207 = vmatprep.subr.mxu0 0.0
        %3208 = vmatpush1.msra.mxu0 0.0
        %3209 = vmatprep.subr.mxu0 0.0
        %3210 = vmatpush1.msra.mxu0 0.0
        %3211 = vmatprep.subr.mxu0 0.0
        %3212 = vmatpush1.msra.mxu0 0.0
        %3213 = vmatprep.subr.mxu0 0.0
        %3214 = vmatpush1.msra.mxu0 0.0
        %3215 = vmatprep.subr.mxu0 0.0
        %3216 = vmatpush1.msra.mxu0 0.0
        %3217 = vmatprep.subr.mxu0 0.0
        %3218 = vmatpush1.msra.mxu0 0.0
        %3219 = vmatprep.mubr.f32.mxu0 0.0
        %v3220 = vand.u32 %v2482, 4294901760
        %v3221 = vsub.f32 %v2482, %v3220
        %3222 = vmatmul.mubr.f32.gmra.mrb[0].mxu0 %v3221
        %v3223 = vpop.f32.mrb[0].mxu0
        %v3224 = vadd.f32 %v3143, %v3223
        %v3225 = vpop.f32.mrb[0].mxu0
        %v3226 = vadd.f32 %v3145, %v3225
        %3227 = vdwg.mxu0
        %v3228 = vand.u32 %v2471, 4294901760
        %3229 = vmatprep.subr.mxu0 %v3228
        %v3230 = vand.u32 %v2470, 4294901760
        %3231 = vmatpush1.msra.mxu0 %v3230
        %v3232 = vand.u32 %v2475, 4294901760
        %3233 = vmatprep.subr.mxu0 %v3232
        %v3234 = vand.u32 %v2474, 4294901760
        %3235 = vmatpush1.msra.mxu0 %v3234
        %3236 = vmatprep.subr.mxu0 0.0
        %3237 = vmatpush1.msra.mxu0 0.0
        %3238 = vmatprep.subr.mxu0 0.0
        %3239 = vmatpush1.msra.mxu0 0.0
        %3240 = vmatprep.subr.mxu0 0.0
        %3241 = vmatpush1.msra.mxu0 0.0
        %3242 = vmatprep.subr.mxu0 0.0
        %3243 = vmatpush1.msra.mxu0 0.0
        %3244 = vmatprep.subr.mxu0 0.0
        %3245 = vmatpush1.msra.mxu0 0.0
        %3246 = vmatprep.subr.mxu0 0.0
        %3247 = vmatpush1.msra.mxu0 0.0
        %3248 = vmatprep.subr.mxu0 0.0
        %3249 = vmatpush1.msra.mxu0 0.0
        %3250 = vmatprep.subr.mxu0 0.0
        %3251 = vmatpush1.msra.mxu0 0.0
        %3252 = vmatprep.subr.mxu0 0.0
        %3253 = vmatpush1.msra.mxu0 0.0
        %3254 = vmatprep.subr.mxu0 0.0
        %3255 = vmatpush1.msra.mxu0 0.0
        %3256 = vmatprep.subr.mxu0 0.0
        %3257 = vmatpush1.msra.mxu0 0.0
        %3258 = vmatprep.subr.mxu0 0.0
        %3259 = vmatpush1.msra.mxu0 0.0
        %3260 = vmatprep.subr.mxu0 0.0
        %3261 = vmatpush1.msra.mxu0 0.0
        %3262 = vmatprep.subr.mxu0 0.0
        %3263 = vmatpush1.msra.mxu0 0.0
        %3264 = vmatprep.subr.mxu0 0.0
        %3265 = vmatpush1.msra.mxu0 0.0
        %3266 = vmatprep.subr.mxu0 0.0
        %3267 = vmatpush1.msra.mxu0 0.0
        %3268 = vmatprep.subr.mxu0 0.0
        %3269 = vmatpush1.msra.mxu0 0.0
        %3270 = vmatprep.subr.mxu0 0.0
        %3271 = vmatpush1.msra.mxu0 0.0
        %3272 = vmatprep.subr.mxu0 0.0
        %3273 = vmatpush1.msra.mxu0 0.0
        %3274 = vmatprep.subr.mxu0 0.0
        %3275 = vmatpush1.msra.mxu0 0.0
        %3276 = vmatprep.subr.mxu0 0.0
        %3277 = vmatpush1.msra.mxu0 0.0
        %3278 = vmatprep.subr.mxu0 0.0
        %3279 = vmatpush1.msra.mxu0 0.0
        %3280 = vmatprep.subr.mxu0 0.0
        %3281 = vmatpush1.msra.mxu0 0.0
        %3282 = vmatprep.subr.mxu0 0.0
        %3283 = vmatpush1.msra.mxu0 0.0
        %3284 = vmatprep.subr.mxu0 0.0
        %3285 = vmatpush1.msra.mxu0 0.0
        %3286 = vmatprep.subr.mxu0 0.0
        %3287 = vmatpush1.msra.mxu0 0.0
        %3288 = vmatprep.subr.mxu0 0.0
        %3289 = vmatpush1.msra.mxu0 0.0
        %3290 = vmatprep.subr.mxu0 0.0
        %3291 = vmatpush1.msra.mxu0 0.0
        %3292 = vmatprep.subr.mxu0 0.0
        %3293 = vmatpush1.msra.mxu0 0.0
        %3294 = vmatprep.subr.mxu0 0.0
        %3295 = vmatpush1.msra.mxu0 0.0
        %3296 = vmatprep.mubr.f32.mxu0 0.0
        %v3297 = vand.u32 %v2482, 4294901760
        %v3298 = vsub.f32 %v2482, %v3297
        %v3299 = vand.u32 %v3298, 4294901760
        %3300 = vmatmul.mubr.f32.gmra.mrb[0].mxu0 %v3299
        %v3301 = vpop.f32.mrb[0].mxu0
        %v3302 = vadd.f32 %v3224, %v3301
        %v3303 = vpop.f32.mrb[0].mxu0
        %v3304 = vadd.f32 %v3226, %v3303
        %3305 = vdwg.mxu0
        %v3306 = vand.u32 %v2471, 4294901760
        %v3307 = vsub.f32 %v2471, %v3306
        %v3308 = vand.u32 %v3307, 4294901760
        %3309 = vmatprep.subr.mxu0 %v3308
        %v3310 = vand.u32 %v2470, 4294901760
        %v3311 = vsub.f32 %v2470, %v3310
        %v3312 = vand.u32 %v3311, 4294901760
        %3313 = vmatpush1.msra.mxu0 %v3312
        %v3314 = vand.u32 %v2475, 4294901760
        %v3315 = vsub.f32 %v2475, %v3314
        %v3316 = vand.u32 %v3315, 4294901760
        %3317 = vmatprep.subr.mxu0 %v3316
        %v3318 = vand.u32 %v2474, 4294901760
        %v3319 = vsub.f32 %v2474, %v3318
        %v3320 = vand.u32 %v3319, 4294901760
        %3321 = vmatpush1.msra.mxu0 %v3320
        %3322 = vmatprep.subr.mxu0 0.0
        %3323 = vmatpush1.msra.mxu0 0.0
        %3324 = vmatprep.subr.mxu0 0.0
        %3325 = vmatpush1.msra.mxu0 0.0
        %3326 = vmatprep.subr.mxu0 0.0
        %3327 = vmatpush1.msra.mxu0 0.0
        %3328 = vmatprep.subr.mxu0 0.0
        %3329 = vmatpush1.msra.mxu0 0.0
        %3330 = vmatprep.subr.mxu0 0.0
        %3331 = vmatpush1.msra.mxu0 0.0
        %3332 = vmatprep.subr.mxu0 0.0
        %3333 = vmatpush1.msra.mxu0 0.0
        %3334 = vmatprep.subr.mxu0 0.0
        %3335 = vmatpush1.msra.mxu0 0.0
        %3336 = vmatprep.subr.mxu0 0.0
        %3337 = vmatpush1.msra.mxu0 0.0
        %3338 = vmatprep.subr.mxu0 0.0
        %3339 = vmatpush1.msra.mxu0 0.0
        %3340 = vmatprep.subr.mxu0 0.0
        %3341 = vmatpush1.msra.mxu0 0.0
        %3342 = vmatprep.subr.mxu0 0.0
        %3343 = vmatpush1.msra.mxu0 0.0
        %3344 = vmatprep.subr.mxu0 0.0
        %3345 = vmatpush1.msra.mxu0 0.0
        %3346 = vmatprep.subr.mxu0 0.0
        %3347 = vmatpush1.msra.mxu0 0.0
        %3348 = vmatprep.subr.mxu0 0.0
        %3349 = vmatpush1.msra.mxu0 0.0
        %3350 = vmatprep.subr.mxu0 0.0
        %3351 = vmatpush1.msra.mxu0 0.0
        %3352 = vmatprep.subr.mxu0 0.0
        %3353 = vmatpush1.msra.mxu0 0.0
        %3354 = vmatprep.subr.mxu0 0.0
        %3355 = vmatpush1.msra.mxu0 0.0
        %3356 = vmatprep.subr.mxu0 0.0
        %3357 = vmatpush1.msra.mxu0 0.0
        %3358 = vmatprep.subr.mxu0 0.0
        %3359 = vmatpush1.msra.mxu0 0.0
        %3360 = vmatprep.subr.mxu0 0.0
        %3361 = vmatpush1.msra.mxu0 0.0
        %3362 = vmatprep.subr.mxu0 0.0
        %3363 = vmatpush1.msra.mxu0 0.0
        %3364 = vmatprep.subr.mxu0 0.0
        %3365 = vmatpush1.msra.mxu0 0.0
        %3366 = vmatprep.subr.mxu0 0.0
        %3367 = vmatpush1.msra.mxu0 0.0
        %3368 = vmatprep.subr.mxu0 0.0
        %3369 = vmatpush1.msra.mxu0 0.0
        %3370 = vmatprep.subr.mxu0 0.0
        %3371 = vmatpush1.msra.mxu0 0.0
        %3372 = vmatprep.subr.mxu0 0.0
        %3373 = vmatpush1.msra.mxu0 0.0
        %3374 = vmatprep.subr.mxu0 0.0
        %3375 = vmatpush1.msra.mxu0 0.0
        %3376 = vmatprep.subr.mxu0 0.0
        %3377 = vmatpush1.msra.mxu0 0.0
        %3378 = vmatprep.subr.mxu0 0.0
        %3379 = vmatpush1.msra.mxu0 0.0
        %3380 = vmatprep.subr.mxu0 0.0
        %3381 = vmatpush1.msra.mxu0 0.0
        %3382 = vmatprep.mubr.f32.mxu0 0.0
        %v3383 = vand.u32 %v2482, 4294901760
        %3384 = vmatmul.mubr.f32.gmra.mrb[0].mxu0 %v3383
        %v3385 = vpop.f32.mrb[0].mxu0
        %v3386 = vadd.f32 %v3302, %v3385
        %v3387 = vpop.f32.mrb[0].mxu0
        %v3388 = vadd.f32 %v3304, %v3387
        %3389 = vdwg.mxu0
        %v3390 = vand.u32 %v2471, 4294901760
        %3391 = vmatprep.subr.mxu0 %v3390
        %v3392 = vand.u32 %v2470, 4294901760
        %3393 = vmatpush1.msra.mxu0 %v3392
        %v3394 = vand.u32 %v2475, 4294901760
        %3395 = vmatprep.subr.mxu0 %v3394
        %v3396 = vand.u32 %v2474, 4294901760
        %3397 = vmatpush1.msra.mxu0 %v3396
        %3398 = vmatprep.subr.mxu0 0.0
        %3399 = vmatpush1.msra.mxu0 0.0
        %3400 = vmatprep.subr.mxu0 0.0
        %3401 = vmatpush1.msra.mxu0 0.0
        %3402 = vmatprep.subr.mxu0 0.0
        %3403 = vmatpush1.msra.mxu0 0.0
        %3404 = vmatprep.subr.mxu0 0.0
        %3405 = vmatpush1.msra.mxu0 0.0
        %3406 = vmatprep.subr.mxu0 0.0
        %3407 = vmatpush1.msra.mxu0 0.0
        %3408 = vmatprep.subr.mxu0 0.0
        %3409 = vmatpush1.msra.mxu0 0.0
        %3410 = vmatprep.subr.mxu0 0.0
        %3411 = vmatpush1.msra.mxu0 0.0
        %3412 = vmatprep.subr.mxu0 0.0
        %3413 = vmatpush1.msra.mxu0 0.0
        %3414 = vmatprep.subr.mxu0 0.0
        %3415 = vmatpush1.msra.mxu0 0.0
        %3416 = vmatprep.subr.mxu0 0.0
        %3417 = vmatpush1.msra.mxu0 0.0
        %3418 = vmatprep.subr.mxu0 0.0
        %3419 = vmatpush1.msra.mxu0 0.0
        %3420 = vmatprep.subr.mxu0 0.0
        %3421 = vmatpush1.msra.mxu0 0.0
        %3422 = vmatprep.subr.mxu0 0.0
        %3423 = vmatpush1.msra.mxu0 0.0
        %3424 = vmatprep.subr.mxu0 0.0
        %3425 = vmatpush1.msra.mxu0 0.0
        %3426 = vmatprep.subr.mxu0 0.0
        %3427 = vmatpush1.msra.mxu0 0.0
        %3428 = vmatprep.subr.mxu0 0.0
        %3429 = vmatpush1.msra.mxu0 0.0
        %3430 = vmatprep.subr.mxu0 0.0
        %3431 = vmatpush1.msra.mxu0 0.0
        %3432 = vmatprep.subr.mxu0 0.0
        %3433 = vmatpush1.msra.mxu0 0.0
        %3434 = vmatprep.subr.mxu0 0.0
        %3435 = vmatpush1.msra.mxu0 0.0
        %3436 = vmatprep.subr.mxu0 0.0
        %3437 = vmatpush1.msra.mxu0 0.0
        %3438 = vmatprep.subr.mxu0 0.0
        %3439 = vmatpush1.msra.mxu0 0.0
        %3440 = vmatprep.subr.mxu0 0.0
        %3441 = vmatpush1.msra.mxu0 0.0
        %3442 = vmatprep.subr.mxu0 0.0
        %3443 = vmatpush1.msra.mxu0 0.0
        %3444 = vmatprep.subr.mxu0 0.0
        %3445 = vmatpush1.msra.mxu0 0.0
        %3446 = vmatprep.subr.mxu0 0.0
        %3447 = vmatpush1.msra.mxu0 0.0
        %3448 = vmatprep.subr.mxu0 0.0
        %3449 = vmatpush1.msra.mxu0 0.0
        %3450 = vmatprep.subr.mxu0 0.0
        %3451 = vmatpush1.msra.mxu0 0.0
        %3452 = vmatprep.subr.mxu0 0.0
        %3453 = vmatpush1.msra.mxu0 0.0
        %3454 = vmatprep.subr.mxu0 0.0
        %3455 = vmatpush1.msra.mxu0 0.0
        %3456 = vmatprep.subr.mxu0 0.0
        %3457 = vmatpush1.msra.mxu0 0.0
        %3458 = vmatprep.mubr.f32.mxu0 0.0
        %v3459 = vand.u32 %v2482, 4294901760
        %3460 = vmatmul.mubr.f32.gmra.mrb[0].mxu0 %v3459
        %v3461 = vpop.f32.mrb[0].mxu0
        %v3462 = vadd.f32 %v3386, %v3461
        %v3463 = vpop.f32.mrb[0].mxu0
        %v3464 = vadd.f32 %v3388, %v3463
        %3465 = vdwg.mxu0
        %v3470 = vcombine.low %v2971, %v2973
        %v3471 = vcombine.low %v3462, %v3464
        %3474 = vst [vmem:[%s272] sm:$0x77] %v3470
        %3475 = vst [vmem:[%s272 + $0x8] sm:$0x77] %v3471
        %s3476 = sand.u32 %s181, 1
        %s3477 = scalar_lea.sflag [#allocation3], %s3476
        %s3478 = sand.u32 %s181, 1
        %s3479 = smul.addr %s3478, 16
        %s3480 = scalar_lea.vmem [#allocation2], %s3479
        // Predicated region
        $region49: #{tpu_custom_call.1} parent=47 // pred_check
          %p3481 = pneg %p191
        $region50: #{tpu_custom_call.1} parent=47 // pred_check_branch
          %3483 = sbr.rel (%p3481) target = $region52
        $region51: #{tpu_custom_call.1} parent=47 // pred_region
          %s3484 = smul.u32 4, %s21
          %s3486 = ssub.s32 256, 256
          %3487 = vsyncadd %s3477, %s3486
          %s3488 = smul.addr %s3484, 64
          %s3489 = scalar_lea.hbm %s7, %s3488
          %s3491 = sshll.u32 %s3480, 4
          %s3492 = int_to_ptr.vmem [resolvable:$true] %s3491
          %3494 = dma.vmem_to_hbm [thread:$0]  %s3492, 256, %s3489, %s3477
        $region52: #{tpu_custom_call.1} parent=47 // pred_fallthru
          _
      $region48: #{tpu_custom_call.1} parent=5 // pred_fallthru
        _
      %p3495 = scmp.le.s32.totalorder 2, %s16
      // Predicated region
      $region53: #{tpu_custom_call.1} parent=5 // pred_check
        %p3496 = pneg %p3495
      $region54: #{tpu_custom_call.1} parent=5 // pred_check_branch
        %3498 = sbr.rel (%p3496) target = $region56
      $region55: #{tpu_custom_call.1} parent=5 // pred_region
        %s3499 = ssub.s32 %s16, 2
        // Predicated region
        $region57: #{tpu_custom_call.1} parent=55 // pred_check
          %p3500 = pneg %p197
        $region58: #{tpu_custom_call.1} parent=55 // pred_check_branch
          %3502 = sbr.rel (%p3500) target = $region60
        $region59: #{tpu_custom_call.1} parent=55 // pred_region
          %s3503 = sand.u32 %s182, 1
          %s3504 = scalar_lea.sflag [#allocation3], %s3503
          %s3505 = sand.u32 %s182, 1
          %s3506 = smul.addr %s3505, 16
          %s3507 = scalar_lea.vmem [#allocation2], %s3506
          %3508 = dma.done %s3504, 256
        $region60: #{tpu_custom_call.1} parent=55 // pred_fallthru
          _
      $region56: #{tpu_custom_call.1} parent=5 // pred_fallthru
        _
    $region6: #{tpu_custom_call.1} parent=1 // loop_footer
      %s20 = sadd.s32 1, %s16
    $region7: #{tpu_custom_call.1} parent=1 // loop_footer_branch
      %15 = sbr.rel target = $region3
    $region8: #{tpu_custom_call.1} parent=1 // loop_exit
      _
    %3509 = vsyncpa [#allocation3], 1
    %s3510 = scalar_lea.sflag [#allocation3], 1
    %3511 = vsyncpa %s3510, 1

// kernel: tpu_custom_call.1
$region0: #{tpu_custom_call.1}
  #allocation0 [shape = 'u32[]', space=smem, size = 0x4, offset = 0x4, fixed_abs, tag = 'smem constant byte address 0x4 - core index']
  #allocation1 [shape = 'u32[144,128]{1,0:T(1,128)}', space=vmem, size = 0x12000, scoped, tag = 'internal scratch']
  %s0 = inlined_call_operand.vmem [shape: f32[2,1000], index: 0, kind: input, shape index: {}]
  %s1 = inlined_call_operand.vmem [shape: f32[16,2], index: 1, kind: input, shape index: {}]
  %s2 = inlined_call_operand.vmem [shape: f32[16,1], index: 2, kind: input, shape index: {}]
  %s3 = inlined_call_operand.vmem [shape: f32[16,16], index: 3, kind: input, shape index: {}]
  %s4 = inlined_call_operand.vmem [shape: f32[16,1], index: 4, kind: input, shape index: {}]
  %s5 = inlined_call_operand.vmem [shape: f32[3,16], index: 5, kind: input, shape index: {}]
  %s6 = inlined_call_operand.vmem [shape: f32[3,1], index: 6, kind: input, shape index: {}]
  %s7 = inlined_call_operand.hbm [shape: f32[3,1000], index: 7, kind: output, shape index: {}]
  %s8 = sld [smem:[#allocation0]]
  $region61: #{tpu_custom_call.1} parent=0
    _
  %s10 = ssub.s32 1, %s8
  %s11 = scalar_select 0, %s10, %s8
  $region1: #{tpu_custom_call.1} parent=0
    #allocation2 [shape = 'u8[16384]{0}', space=vmem, size = 0x4000, scoped, tag = 'output window, operand 0']
    #allocation3 [shape = 's32[2]{0}', space=sflag, size = 0x8, scoped, tag = 'scoped memory for tpu_custom_call.1']
    %12 = vsyncpa [#allocation3], 0
    %s13 = scalar_lea.sflag [#allocation3], 1
    %14 = vsyncpa %s13, 0
    loop: start=0, step=1, limit=4
    $region2: #{tpu_custom_call.1} parent=1 // loop_pre_header
      _
    $region3: #{tpu_custom_call.1} parent=1 // loop_header
      %s16 = sphi 0, %s20
      %p17 = scmp.ge.s32.totalorder %s16, 4
      %s26 = sphi 0, %s28
      %s29 = sphi 0, %s26
      %s30 = sphi 0, %s29
      %s46 = sphi 0, %s30
      %s50 = sphi 0, %s50
      %s52 = sphi 0, %s50
      %s53 = sphi 0, %s52
      %s67 = sphi 0, %s53
      %s71 = sphi 0, %s71
      %s73 = sphi 0, %s71
      %s74 = sphi 0, %s73
      %s88 = sphi 0, %s74
      %s92 = sphi 0, %s92
      %s94 = sphi 0, %s92
      %s95 = sphi 0, %s94
      %s109 = sphi 0, %s95
      %s113 = sphi 0, %s113
      %s115 = sphi 0, %s113
      %s116 = sphi 0, %s115
      %s130 = sphi 0, %s116
      %s134 = sphi 0, %s134
      %s136 = sphi 0, %s134
      %s137 = sphi 0, %s136
      %s151 = sphi 0, %s137
      %s155 = sphi 0, %s155
      %s157 = sphi 0, %s155
      %s158 = sphi 0, %s157
      %s172 = sphi 0, %s158
      %s178 = sphi 0, %s180
      %s181 = sphi 0, %s178
      %s182 = sphi 0, %s181
      %s198 = sphi 0, %s182
    $region4: #{tpu_custom_call.1} parent=1 // loop_header_branch
      %19 = sbr.rel (%p17) target = $region8
    $region5: #{tpu_custom_call.1} parent=1 // loop_body
      %s21 = ssub.s32 %s16, 1
      %s22 = ssub.s32 %s16, 2
      %s23 = sadd.s32 %s16, 1
      %s24 = ssub.s32 %s16, %s23
      %p25 = scmp.eq.s32.totalorder %s24, 0
      %s27 = sadd.s32 %s26, 1
      %s28 = scalar_select %p25, %s26, %s27
      %p31 = pneg %p25
      %p32 = scmp.eq.s32.totalorder %s16, 1
      %p33 = por %p31, %p32
      %p34 = scmp.ne.s32.totalorder %s26, %s29
      %p35 = scmp.eq.s32.totalorder %s16, 0
      %p36 = por %p34, %p35
      %p37 = scmp.ne.s32.totalorder %s26, %s29
      %p38 = scmp.eq.s32.totalorder %s21, 1
      %p39 = por %p37, %p38
      %p40 = scmp.ne.s32.totalorder %s29, %s30
      %p41 = scmp.eq.s32.totalorder %s21, 0
      %p42 = por %p40, %p41
      %p43 = scmp.ne.s32.totalorder %s29, %s30
      %p44 = scmp.eq.s32.totalorder %s22, 1
      %p45 = por %p43, %p44
      %p47 = scmp.ne.s32.totalorder %s30, %s46
      %p48 = scmp.eq.s32.totalorder %s22, 0
      %p49 = por %p47, %p48
      %s51 = sadd.s32 %s50, 1
      %p54 = scmp.eq.s32.totalorder %s16, 1
      %p55 = scmp.ne.s32.totalorder %s50, %s52
      %p56 = scmp.eq.s32.totalorder %s16, 0
      %p57 = por %p55, %p56
      %p58 = scmp.ne.s32.totalorder %s50, %s52
      %p59 = scmp.eq.s32.totalorder %s21, 1
      %p60 = por %p58, %p59
      %p61 = scmp.ne.s32.totalorder %s52, %s53
      %p62 = scmp.eq.s32.totalorder %s21, 0
      %p63 = por %p61, %p62
      %p64 = scmp.ne.s32.totalorder %s52, %s53
      %p65 = scmp.eq.s32.totalorder %s22, 1
      %p66 = por %p64, %p65
      %p68 = scmp.ne.s32.totalorder %s53, %s67
      %p69 = scmp.eq.s32.totalorder %s22, 0
      %p70 = por %p68, %p69
      %s72 = sadd.s32 %s71, 1
      %p75 = scmp.eq.s32.totalorder %s16, 1
      %p76 = scmp.ne.s32.totalorder %s71, %s73
      %p77 = scmp.eq.s32.totalorder %s16, 0
      %p78 = por %p76, %p77
      %p79 = scmp.ne.s32.totalorder %s71, %s73
      %p80 = scmp.eq.s32.totalorder %s21, 1
      %p81 = por %p79, %p80
      %p82 = scmp.ne.s32.totalorder %s73, %s74
      %p83 = scmp.eq.s32.totalorder %s21, 0
      %p84 = por %p82, %p83
      %p85 = scmp.ne.s32.totalorder %s73, %s74
      %p86 = scmp.eq.s32.totalorder %s22, 1
      %p87 = por %p85, %p86
      %p89 = scmp.ne.s32.totalorder %s74, %s88
      %p90 = scmp.eq.s32.totalorder %s22, 0
      %p91 = por %p89, %p90
      %s93 = sadd.s32 %s92, 1
      %p96 = scmp.eq.s32.totalorder %s16, 1
      %p97 = scmp.ne.s32.totalorder %s92, %s94
      %p98 = scmp.eq.s32.totalorder %s16, 0
      %p99 = por %p97, %p98
      %p100 = scmp.ne.s32.totalorder %s92, %s94
      %p101 = scmp.eq.s32.totalorder %s21, 1
      %p102 = por %p100, %p101
      %p103 = scmp.ne.s32.totalorder %s94, %s95
      %p104 = scmp.eq.s32.totalorder %s21, 0
      %p105 = por %p103, %p104
      %p106 = scmp.ne.s32.totalorder %s94, %s95
      %p107 = scmp.eq.s32.totalorder %s22, 1
      %p108 = por %p106, %p107
      %p110 = scmp.ne.s32.totalorder %s95, %s109
      %p111 = scmp.eq.s32.totalorder %s22, 0
      %p112 = por %p110, %p111
      %s114 = sadd.s32 %s113, 1
      %p117 = scmp.eq.s32.totalorder %s16, 1
      %p118 = scmp.ne.s32.totalorder %s113, %s115
      %p119 = scmp.eq.s32.totalorder %s16, 0
      %p120 = por %p118, %p119
      %p121 = scmp.ne.s32.totalorder %s113, %s115
      %p122 = scmp.eq.s32.totalorder %s21, 1
      %p123 = por %p121, %p122
      %p124 = scmp.ne.s32.totalorder %s115, %s116
      %p125 = scmp.eq.s32.totalorder %s21, 0
      %p126 = por %p124, %p125
      %p127 = scmp.ne.s32.totalorder %s115, %s116
      %p128 = scmp.eq.s32.totalorder %s22, 1
      %p129 = por %p127, %p128
      %p131 = scmp.ne.s32.totalorder %s116, %s130
      %p132 = scmp.eq.s32.totalorder %s22, 0
      %p133 = por %p131, %p132
      %s135 = sadd.s32 %s134, 1
      %p138 = scmp.eq.s32.totalorder %s16, 1
      %p139 = scmp.ne.s32.totalorder %s134, %s136
      %p140 = scmp.eq.s32.totalorder %s16, 0
      %p141 = por %p139, %p140
      %p142 = scmp.ne.s32.totalorder %s134, %s136
      %p143 = scmp.eq.s32.totalorder %s21, 1
      %p144 = por %p142, %p143
      %p145 = scmp.ne.s32.totalorder %s136, %s137
      %p146 = scmp.eq.s32.totalorder %s21, 0
      %p147 = por %p145, %p146
      %p148 = scmp.ne.s32.totalorder %s136, %s137
      %p149 = scmp.eq.s32.totalorder %s22, 1
      %p150 = por %p148, %p149
      %p152 = scmp.ne.s32.totalorder %s137, %s151
      %p153 = scmp.eq.s32.totalorder %s22, 0
      %p154 = por %p152, %p153
      %s156 = sadd.s32 %s155, 1
      %p159 = scmp.eq.s32.totalorder %s16, 1
      %p160 = scmp.ne.s32.totalorder %s155, %s157
      %p161 = scmp.eq.s32.totalorder %s16, 0
      %p162 = por %p160, %p161
      %p163 = scmp.ne.s32.totalorder %s155, %s157
      %p164 = scmp.eq.s32.totalorder %s21, 1
      %p165 = por %p163, %p164
      %p166 = scmp.ne.s32.totalorder %s157, %s158
      %p167 = scmp.eq.s32.totalorder %s21, 0
      %p168 = por %p166, %p167
      %p169 = scmp.ne.s32.totalorder %s157, %s158
      %p170 = scmp.eq.s32.totalorder %s22, 1
      %p171 = por %p169, %p170
      %p173 = scmp.ne.s32.totalorder %s158, %s172
      %p174 = scmp.eq.s32.totalorder %s22, 0
      %p175 = por %p173, %p174
      %s176 = ssub.s32 %s16, %s23
      %p177 = scmp.eq.s32.totalorder %s176, 0
      %s179 = sadd.s32 %s178, 1
      %s180 = scalar_select %p177, %s178, %s179
      %p183 = pneg %p177
      %p184 = scmp.eq.s32.totalorder %s16, 1
      %p185 = por %p183, %p184
      %p186 = scmp.ne.s32.totalorder %s178, %s181
      %p187 = scmp.eq.s32.totalorder %s16, 0
      %p188 = por %p186, %p187
      %p189 = scmp.ne.s32.totalorder %s178, %s181
      %p190 = scmp.eq.s32.totalorder %s21, 1
      %p191 = por %p189, %p190
      %p192 = scmp.ne.s32.totalorder %s181, %s182
      %p193 = scmp.eq.s32.totalorder %s21, 0
      %p194 = por %p192, %p193
      %p195 = scmp.ne.s32.totalorder %s181, %s182
      %p196 = scmp.eq.s32.totalorder %s22, 1
      %p197 = por %p195, %p196
      %p199 = scmp.ne.s32.totalorder %s182, %s198
      %p200 = scmp.eq.s32.totalorder %s22, 0
      %p201 = por %p199, %p200
      %p202 = scmp.le.s32.totalorder 1, %s16
      %p203 = scmp.lt.s32.totalorder %s16, 3
      %p204 = pnand %p202, %p203
      %p205 = pneg %p204
      // Predicated region
      $region9: #{tpu_custom_call.1} parent=5 // pred_check
        _
      $region10: #{tpu_custom_call.1} parent=5 // pred_check_branch
        %207 = sbr.rel (%p204) target = $region12
      $region11: #{tpu_custom_call.1} parent=5 // pred_region
        %s208 = ssub.s32 %s16, 1
        // Predicated region
        $region13: #{tpu_custom_call.1} parent=11 // pred_check
          %p209 = pneg %p63
        $region14: #{tpu_custom_call.1} parent=11 // pred_check_branch
          %211 = sbr.rel (%p209) target = $region16
        $region15: #{tpu_custom_call.1} parent=11 // pred_region
          _
        $region16: #{tpu_custom_call.1} parent=11 // pred_fallthru
          _
        // Predicated region
        $region17: #{tpu_custom_call.1} parent=11 // pred_check
          %p212 = pneg %p84
        $region18: #{tpu_custom_call.1} parent=11 // pred_check_branch
          %214 = sbr.rel (%p212) target = $region20
        $region19: #{tpu_custom_call.1} parent=11 // pred_region
          _
        $region20: #{tpu_custom_call.1} parent=11 // pred_fallthru
          _
        // Predicated region
        $region21: #{tpu_custom_call.1} parent=11 // pred_check
          %p215 = pneg %p105
        $region22: #{tpu_custom_call.1} parent=11 // pred_check_branch
          %217 = sbr.rel (%p215) target = $region24
        $region23: #{tpu_custom_call.1} parent=11 // pred_region
          _
        $region24: #{tpu_custom_call.1} parent=11 // pred_fallthru
          _
        // Predicated region
        $region25: #{tpu_custom_call.1} parent=11 // pred_check
          %p218 = pneg %p126
        $region26: #{tpu_custom_call.1} parent=11 // pred_check_branch
          %220 = sbr.rel (%p218) target = $region28
        $region27: #{tpu_custom_call.1} parent=11 // pred_region
          _
        $region28: #{tpu_custom_call.1} parent=11 // pred_fallthru
          _
        // Predicated region
        $region29: #{tpu_custom_call.1} parent=11 // pred_check
          %p221 = pneg %p147
        $region30: #{tpu_custom_call.1} parent=11 // pred_check_branch
          %223 = sbr.rel (%p221) target = $region32
        $region31: #{tpu_custom_call.1} parent=11 // pred_region
          _
        $region32: #{tpu_custom_call.1} parent=11 // pred_fallthru
          _
        // Predicated region
        $region33: #{tpu_custom_call.1} parent=11 // pred_check
          %p224 = pneg %p168
        $region34: #{tpu_custom_call.1} parent=11 // pred_check_branch
          %226 = sbr.rel (%p224) target = $region36
        $region35: #{tpu_custom_call.1} parent=11 // pred_region
          _
        $region36: #{tpu_custom_call.1} parent=11 // pred_fallthru
          _
      $region12: #{tpu_custom_call.1} parent=5 // pred_fallthru
        _
      %p227 = scmp.lt.s32.totalorder %s16, 2
      // Predicated region
      $region37: #{tpu_custom_call.1} parent=5 // pred_check
        %p228 = pneg %p227
      $region38: #{tpu_custom_call.1} parent=5 // pred_check_branch
        %230 = sbr.rel (%p228) target = $region40
      $region39: #{tpu_custom_call.1} parent=5 // pred_region
        // Predicated region
        $region41: #{tpu_custom_call.1} parent=39 // pred_check
          %p231 = pneg %p36
        $region42: #{tpu_custom_call.1} parent=39 // pred_check_branch
          %233 = sbr.rel (%p231) target = $region44
        $region43: #{tpu_custom_call.1} parent=39 // pred_region
          %s234 = smul.u32 4, %s16
          %p235 = scmp.lt.s32.totalorder %s234, 7
          %s236 = scalar_select %p235, %s234, 7
          %s237 = smul.addr %s236, 2
          %s238 = scalar_lea.vmem %s0, %s237
          %s239 = smul.u32 4, %s16
        $region44: #{tpu_custom_call.1} parent=39 // pred_fallthru
          _
      $region40: #{tpu_custom_call.1} parent=5 // pred_fallthru
        _
      %p240 = scmp.le.s32.totalorder 1, %s16
      %p241 = scmp.lt.s32.totalorder %s16, 3
      %p242 = pnand %p240, %p241
      %p243 = pneg %p242
      // Predicated region
      $region45: #{tpu_custom_call.1} parent=5 // pred_check
        _
      $region46: #{tpu_custom_call.1} parent=5 // pred_check_branch
        %245 = sbr.rel (%p242) target = $region48
      $region47: #{tpu_custom_call.1} parent=5 // pred_region
        %s246 = ssub.s32 %s16, 1
        %s247 = smul.u32 4, %s21
        %p248 = scmp.lt.s32.totalorder %s247, 7
        %s249 = scalar_select %p248, %s247, 7
        %s250 = smul.addr %s249, 2
        %s251 = scalar_lea.vmem %s0, %s250
        %p252 = pneg %p42
        %p253 = pneg %p39
        %p254 = pneg %p63
        %p255 = pneg %p60
        %p256 = pneg %p84
        %p257 = pneg %p81
        %p258 = pneg %p105
        %p259 = pneg %p102
        %p260 = pneg %p126
        %p261 = pneg %p123
        %p262 = pneg %p147
        %p263 = pneg %p144
        %p264 = pneg %p168
        %p265 = pneg %p165
        %p266 = pneg %p194
        %p267 = pneg %p191
        %s268 = sand.u32 %s181, 1
        %s269 = scalar_lea.sflag [#allocation3], %s268
        %s270 = sand.u32 %s181, 1
        %s271 = smul.addr %s270, 16
        %s272 = scalar_lea.vmem [#allocation2], %s271
        %s273 = smul.u32 4, %s21
        %p274 = scmp.lt.s32.totalorder %s273, 7
        %s275 = scalar_select %p274, %s273, 7
        %s276 = smul.addr %s275, 2
        %s277 = scalar_lea.vmem %s0, %s276
        %s278 = smul.u32 4, %s21
        %s279 = smul.u32 4, %s21
        %v280 = vld [vmem:[%s1] sm:$0xff]
        %v281 = vld [vmem:[%s1 + $0x8] sm:$0xff]
        %v282 = vld [vmem:[%s2] sm:$0xff]
        %v283 = vld [vmem:[%s2 + $0x8] sm:$0xff]
        %v284 = vld [vmem:[%s3] sm:$0xff]
        %v285 = vld [vmem:[%s3 + $0x8] sm:$0xff]
        %v286 = vld [vmem:[%s4] sm:$0xff]
        %v287 = vld [vmem:[%s4 + $0x8] sm:$0xff]
        %v288 = vld [vmem:[%s5] sm:$0x7]
        %v289 = vld [vmem:[%s6] sm:$0x7]
        %v290 = vld [vmem:[%s277] sm:$0xff]
        %292 = vset.pattern.permute.xlu0 0
        %293 = vperm.xlu0 %292, %v280
        %v294 = vpop.permute.xlu0 %293
        %297 = vset.pattern.permute.xlu0 0
        %298 = vperm.xlu0 %297, %v281
        %v299 = vpop.permute.xlu0 %298
        %v302 = vlaneseq
        %v303 = vshrl.u32 %v302, 7
        %v304 = vsub.s32 0, %v303
        %v305 = vrot.slane %v290, %v304
        %v306 = vlaneseq
        %v307 = vshrl.u32 %v306, 7
        %v308 = vsub.s32 2, %v307
        %v309 = vrot.slane %v290, %v308
        %v310 = vlaneseq
        %v311 = vshrl.u32 %v310, 7
        %v312 = vsub.s32 4, %v311
        %v313 = vrot.slane %v290, %v312
        %v314 = vlaneseq
        %v315 = vshrl.u32 %v314, 7
        %v316 = vsub.s32 6, %v315
        %v317 = vrot.slane %v290, %v316
        %v322 = vlaneseq
        %v323 = vshrl.u32 %v322, 7
        %v324 = vsub.s32 0, %v323
        %v325 = vrot.slane %v305, %v324
        %v326 = vlaneseq
        %v327 = vshrl.u32 %v326, 7
        %v328 = vsub.s32 0, %v327
        %v329 = vrot.slane %v309, %v328
        %v330 = vlaneseq
        %v331 = vshrl.u32 %v330, 7
        %v332 = vsub.s32 0, %v331
        %v333 = vrot.slane %v313, %v332
        %v334 = vlaneseq
        %v335 = vshrl.u32 %v334, 7
        %v336 = vsub.s32 0, %v335
        %v337 = vrot.slane %v317, %v336
        %v338 = vmul.f32 %v294, %v325
        %v339 = vmul.f32 %v294, %v329
        %v340 = vmul.f32 %v294, %v333
        %v341 = vmul.f32 %v294, %v337
        %v342 = vmul.f32 %v299, %v325
        %v343 = vmul.f32 %v299, %v329
        %v344 = vmul.f32 %v299, %v333
        %v345 = vmul.f32 %v299, %v337
        %346 = vset.pattern.permute.xlu0 1
        %347 = vperm.xlu0 %346, %v280
        %v348 = vpop.permute.xlu0 %347
        %350 = vset.pattern.permute.xlu0 1
        %351 = vperm.xlu0 %350, %v281
        %v352 = vpop.permute.xlu0 %351
        %v354 = vlaneseq
        %v355 = vshrl.u32 %v354, 7
        %v356 = vsub.s32 1, %v355
        %v357 = vrot.slane %v290, %v356
        %v358 = vlaneseq
        %v359 = vshrl.u32 %v358, 7
        %v360 = vsub.s32 3, %v359
        %v361 = vrot.slane %v290, %v360
        %v362 = vlaneseq
        %v363 = vshrl.u32 %v362, 7
        %v364 = vsub.s32 5, %v363
        %v365 = vrot.slane %v290, %v364
        %v366 = vlaneseq
        %v367 = vshrl.u32 %v366, 7
        %v368 = vsub.s32 7, %v367
        %v369 = vrot.slane %v290, %v368
        %v374 = vlaneseq
        %v375 = vshrl.u32 %v374, 7
        %v376 = vsub.s32 1, %v375
        %v377 = vrot.slane %v357, %v376
        %v378 = vlaneseq
        %v379 = vshrl.u32 %v378, 7
        %v380 = vsub.s32 1, %v379
        %v381 = vrot.slane %v361, %v380
        %v382 = vlaneseq
        %v383 = vshrl.u32 %v382, 7
        %v384 = vsub.s32 1, %v383
        %v385 = vrot.slane %v365, %v384
        %v386 = vlaneseq
        %v387 = vshrl.u32 %v386, 7
        %v388 = vsub.s32 1, %v387
        %v389 = vrot.slane %v369, %v388
        %v390 = vmul.f32 %v348, %v377
        %v391 = vmul.f32 %v348, %v381
        %v392 = vmul.f32 %v348, %v385
        %v393 = vmul.f32 %v348, %v389
        %v394 = vmul.f32 %v352, %v377
        %v395 = vmul.f32 %v352, %v381
        %v396 = vmul.f32 %v352, %v385
        %v397 = vmul.f32 %v352, %v389
        %v398 = vadd.f32 %v338, %v390
        %v399 = vadd.f32 %v339, %v391
        %v400 = vadd.f32 %v340, %v392
        %v401 = vadd.f32 %v341, %v393
        %v402 = vadd.f32 %v342, %v394
        %v403 = vadd.f32 %v343, %v395
        %v404 = vadd.f32 %v344, %v396
        %v405 = vadd.f32 %v345, %v397
        %407 = vset.pattern.permute.xlu0 0
        %408 = vperm.xlu0 %407, %v282
        %v409 = vpop.permute.xlu0 %408
        %412 = vset.pattern.permute.xlu0 0
        %413 = vperm.xlu0 %412, %v283
        %v414 = vpop.permute.xlu0 %413
        %v416 = vadd.f32 %v398, %v409
        %v417 = vadd.f32 %v399, %v409
        %v418 = vadd.f32 %v400, %v409
        %v419 = vadd.f32 %v401, %v409
        %v420 = vadd.f32 %v402, %v414
        %v421 = vadd.f32 %v403, %v414
        %v422 = vadd.f32 %v404, %v414
        %v423 = vadd.f32 %v405, %v414
        %v424 = vmax.f32 %v416, 0.0
        %v425 = vmax.f32 %v417, 0.0
        %v426 = vmax.f32 %v418, 0.0
        %v427 = vmax.f32 %v419, 0.0
        %v428 = vmax.f32 %v420, 0.0
        %v429 = vmax.f32 %v421, 0.0
        %v430 = vmax.f32 %v422, 0.0
        %v431 = vmax.f32 %v423, 0.0
        %433 = vset.pattern.permute.xlu0 0
        %434 = vperm.xlu0 %433, %v286
        %v435 = vpop.permute.xlu0 %434
        %438 = vset.pattern.permute.xlu0 0
        %439 = vperm.xlu0 %438, %v287
        %v440 = vpop.permute.xlu0 %439
        %vm442 = vcmask 130048
        %v444 = vsel %vm442, %v284, 0
        %v447 = vsel %vm442, %v285, 0
        %v449 = vand.u32 %v425, 4294901760
        %450 = vmatprep.subr.mxu0 %v449
        %v451 = vand.u32 %v424, 4294901760
        %452 = vmatpush1.msra.mxu0 %v451
        %v453 = vand.u32 %v429, 4294901760
        %454 = vmatprep.subr.mxu0 %v453
        %v455 = vand.u32 %v428, 4294901760
        %456 = vmatpush1.msra.mxu0 %v455
        %457 = vmatprep.subr.mxu0 0.0
        %458 = vmatpush1.msra.mxu0 0.0
        %459 = vmatprep.subr.mxu0 0.0
        %460 = vmatpush1.msra.mxu0 0.0
        %461 = vmatprep.subr.mxu0 0.0
        %462 = vmatpush1.msra.mxu0 0.0
        %463 = vmatprep.subr.mxu0 0.0
        %464 = vmatpush1.msra.mxu0 0.0
        %465 = vmatprep.subr.mxu0 0.0
        %466 = vmatpush1.msra.mxu0 0.0
        %467 = vmatprep.subr.mxu0 0.0
        %468 = vmatpush1.msra.mxu0 0.0
        %469 = vmatprep.subr.mxu0 0.0
        %470 = vmatpush1.msra.mxu0 0.0
        %471 = vmatprep.subr.mxu0 0.0
        %472 = vmatpush1.msra.mxu0 0.0
        %473 = vmatprep.subr.mxu0 0.0
        %474 = vmatpush1.msra.mxu0 0.0
        %475 = vmatprep.subr.mxu0 0.0
        %476 = vmatpush1.msra.mxu0 0.0
        %477 = vmatprep.subr.mxu0 0.0
        %478 = vmatpush1.msra.mxu0 0.0
        %479 = vmatprep.subr.mxu0 0.0
        %480 = vmatpush1.msra.mxu0 0.0
        %481 = vmatprep.subr.mxu0 0.0
        %482 = vmatpush1.msra.mxu0 0.0
        %483 = vmatprep.subr.mxu0 0.0
        %484 = vmatpush1.msra.mxu0 0.0
        %485 = vmatprep.subr.mxu0 0.0
        %486 = vmatpush1.msra.mxu0 0.0
        %487 = vmatprep.subr.mxu0 0.0
        %488 = vmatpush1.msra.mxu0 0.0
        %489 = vmatprep.subr.mxu0 0.0
        %490 = vmatpush1.msra.mxu0 0.0
        %491 = vmatprep.subr.mxu0 0.0
        %492 = vmatpush1.msra.mxu0 0.0
        %493 = vmatprep.subr.mxu0 0.0
        %494 = vmatpush1.msra.mxu0 0.0
        %495 = vmatprep.subr.mxu0 0.0
        %496 = vmatpush1.msra.mxu0 0.0
        %497 = vmatprep.subr.mxu0 0.0
        %498 = vmatpush1.msra.mxu0 0.0
        %499 = vmatprep.subr.mxu0 0.0
        %500 = vmatpush1.msra.mxu0 0.0
        %501 = vmatprep.subr.mxu0 0.0
        %502 = vmatpush1.msra.mxu0 0.0
        %503 = vmatprep.subr.mxu0 0.0
        %504 = vmatpush1.msra.mxu0 0.0
        %505 = vmatprep.subr.mxu0 0.0
        %506 = vmatpush1.msra.mxu0 0.0
        %507 = vmatprep.subr.mxu0 0.0
        %508 = vmatpush1.msra.mxu0 0.0
        %509 = vmatprep.subr.mxu0 0.0
        %510 = vmatpush1.msra.mxu0 0.0
        %511 = vmatprep.subr.mxu0 0.0
        %512 = vmatpush1.msra.mxu0 0.0
        %513 = vmatprep.subr.mxu0 0.0
        %514 = vmatpush1.msra.mxu0 0.0
        %515 = vmatprep.subr.mxu0 0.0
        %516 = vmatpush1.msra.mxu0 0.0
        %517 = vmatprep.mubr.f32.mxu0 0.0
        %v518 = vand.u32 %v444, 4294901760
        %v519 = vsub.f32 %v444, %v518
        %v520 = vand.u32 %v519, 4294901760
        %v521 = vsub.f32 %v519, %v520
        %v522 = vand.u32 %v521, 4294901760
        %523 = vmatmul.mubr.f32.gmra.mrb[0].mxu0 %v522
        %v524 = vpop.f32.mrb[0].mxu0
        %v525 = vadd.f32 %v435, %v524
        %v526 = vpop.f32.mrb[0].mxu0
        %v527 = vadd.f32 %v435, %v526
        %528 = vmatprep.mubr.f32.mxu0 0.0
        %v529 = vand.u32 %v447, 4294901760
        %v530 = vsub.f32 %v447, %v529
        %v531 = vand.u32 %v530, 4294901760
        %v532 = vsub.f32 %v530, %v531
        %v533 = vand.u32 %v532, 4294901760
        %534 = vmatmul.mubr.f32.gmra.mrb[0].mxu0 %v533
        %v535 = vpop.f32.mrb[0].mxu0
        %v536 = vadd.f32 %v440, %v535
        %v537 = vpop.f32.mrb[0].mxu0
        %v538 = vadd.f32 %v440, %v537
        %539 = vdwg.mxu0
        %v540 = vand.u32 %v425, 4294901760
        %v541 = vsub.f32 %v425, %v540
        %v542 = vand.u32 %v541, 4294901760
        %v543 = vsub.f32 %v541, %v542
        %v544 = vand.u32 %v543, 4294901760
        %545 = vmatprep.subr.mxu0 %v544
        %v546 = vand.u32 %v424, 4294901760
        %v547 = vsub.f32 %v424, %v546
        %v548 = vand.u32 %v547, 4294901760
        %v549 = vsub.f32 %v547, %v548
        %v550 = vand.u32 %v549, 4294901760
        %551 = vmatpush1.msra.mxu0 %v550
        %v552 = vand.u32 %v429, 4294901760
        %v553 = vsub.f32 %v429, %v552
        %v554 = vand.u32 %v553, 4294901760
        %v555 = vsub.f32 %v553, %v554
        %v556 = vand.u32 %v555, 4294901760
        %557 = vmatprep.subr.mxu0 %v556
        %v558 = vand.u32 %v428, 4294901760
        %v559 = vsub.f32 %v428, %v558
        %v560 = vand.u32 %v559, 4294901760
        %v561 = vsub.f32 %v559, %v560
        %v562 = vand.u32 %v561, 4294901760
        %563 = vmatpush1.msra.mxu0 %v562
        %564 = vmatprep.subr.mxu0 0.0
        %565 = vmatpush1.msra.mxu0 0.0
        %566 = vmatprep.subr.mxu0 0.0
        %567 = vmatpush1.msra.mxu0 0.0
        %568 = vmatprep.subr.mxu0 0.0
        %569 = vmatpush1.msra.mxu0 0.0
        %570 = vmatprep.subr.mxu0 0.0
        %571 = vmatpush1.msra.mxu0 0.0
        %572 = vmatprep.subr.mxu0 0.0
        %573 = vmatpush1.msra.mxu0 0.0
        %574 = vmatprep.subr.mxu0 0.0
        %575 = vmatpush1.msra.mxu0 0.0
        %576 = vmatprep.subr.mxu0 0.0
        %577 = vmatpush1.msra.mxu0 0.0
        %578 = vmatprep.subr.mxu0 0.0
        %579 = vmatpush1.msra.mxu0 0.0
        %580 = vmatprep.subr.mxu0 0.0
        %581 = vmatpush1.msra.mxu0 0.0
        %582 = vmatprep.subr.mxu0 0.0
        %583 = vmatpush1.msra.mxu0 0.0
        %584 = vmatprep.subr.mxu0 0.0
        %585 = vmatpush1.msra.mxu0 0.0
        %586 = vmatprep.subr.mxu0 0.0
        %587 = vmatpush1.msra.mxu0 0.0
        %588 = vmatprep.subr.mxu0 0.0
        %589 = vmatpush1.msra.mxu0 0.0
        %590 = vmatprep.subr.mxu0 0.0
        %591 = vmatpush1.msra.mxu0 0.0
        %592 = vmatprep.subr.mxu0 0.0
        %593 = vmatpush1.msra.mxu0 0.0
        %594 = vmatprep.subr.mxu0 0.0
        %595 = vmatpush1.msra.mxu0 0.0
        %596 = vmatprep.subr.mxu0 0.0
        %597 = vmatpush1.msra.mxu0 0.0
        %598 = vmatprep.subr.mxu0 0.0
        %599 = vmatpush1.msra.mxu0 0.0
        %600 = vmatprep.subr.mxu0 0.0
        %601 = vmatpush1.msra.mxu0 0.0
        %602 = vmatprep.subr.mxu0 0.0
        %603 = vmatpush1.msra.mxu0 0.0
        %604 = vmatprep.subr.mxu0 0.0
        %605 = vmatpush1.msra.mxu0 0.0
        %606 = vmatprep.subr.mxu0 0.0
        %607 = vmatpush1.msra.mxu0 0.0
        %608 = vmatprep.subr.mxu0 0.0
        %609 = vmatpush1.msra.mxu0 0.0
        %610 = vmatprep.subr.mxu0 0.0
        %611 = vmatpush1.msra.mxu0 0.0
        %612 = vmatprep.subr.mxu0 0.0
        %613 = vmatpush1.msra.mxu0 0.0
        %614 = vmatprep.subr.mxu0 0.0
        %615 = vmatpush1.msra.mxu0 0.0
        %616 = vmatprep.subr.mxu0 0.0
        %617 = vmatpush1.msra.mxu0 0.0
        %618 = vmatprep.subr.mxu0 0.0
        %619 = vmatpush1.msra.mxu0 0.0
        %620 = vmatprep.subr.mxu0 0.0
        %621 = vmatpush1.msra.mxu0 0.0
        %622 = vmatprep.subr.mxu0 0.0
        %623 = vmatpush1.msra.mxu0 0.0
        %624 = vmatprep.mubr.f32.mxu0 0.0
        %v625 = vand.u32 %v444, 4294901760
        %626 = vmatmul.mubr.f32.gmra.mrb[0].mxu0 %v625
        %v627 = vpop.f32.mrb[0].mxu0
        %v628 = vadd.f32 %v525, %v627
        %v629 = vpop.f32.mrb[0].mxu0
        %v630 = vadd.f32 %v527, %v629
        %631 = vmatprep.mubr.f32.mxu0 0.0
        %v632 = vand.u32 %v447, 4294901760
        %633 = vmatmul.mubr.f32.gmra.mrb[0].mxu0 %v632
        %v634 = vpop.f32.mrb[0].mxu0
        %v635 = vadd.f32 %v536, %v634
        %v636 = vpop.f32.mrb[0].mxu0
        %v637 = vadd.f32 %v538, %v636
        %638 = vdwg.mxu0
        %v639 = vand.u32 %v425, 4294901760
        %v640 = vsub.f32 %v425, %v639
        %641 = vmatprep.subr.mxu0 %v640
        %v642 = vand.u32 %v424, 4294901760
        %v643 = vsub.f32 %v424, %v642
        %644 = vmatpush1.msra.mxu0 %v643
        %v645 = vand.u32 %v429, 4294901760
        %v646 = vsub.f32 %v429, %v645
        %647 = vmatprep.subr.mxu0 %v646
        %v648 = vand.u32 %v428, 4294901760
        %v649 = vsub.f32 %v428, %v648
        %650 = vmatpush1.msra.mxu0 %v649
        %651 = vmatprep.subr.mxu0 0.0
        %652 = vmatpush1.msra.mxu0 0.0
        %653 = vmatprep.subr.mxu0 0.0
        %654 = vmatpush1.msra.mxu0 0.0
        %655 = vmatprep.subr.mxu0 0.0
        %656 = vmatpush1.msra.mxu0 0.0
        %657 = vmatprep.subr.mxu0 0.0
        %658 = vmatpush1.msra.mxu0 0.0
        %659 = vmatprep.subr.mxu0 0.0
        %660 = vmatpush1.msra.mxu0 0.0
        %661 = vmatprep.subr.mxu0 0.0
        %662 = vmatpush1.msra.mxu0 0.0
        %663 = vmatprep.subr.mxu0 0.0
        %664 = vmatpush1.msra.mxu0 0.0
        %665 = vmatprep.subr.mxu0 0.0
        %666 = vmatpush1.msra.mxu0 0.0
        %667 = vmatprep.subr.mxu0 0.0
        %668 = vmatpush1.msra.mxu0 0.0
        %669 = vmatprep.subr.mxu0 0.0
        %670 = vmatpush1.msra.mxu0 0.0
        %671 = vmatprep.subr.mxu0 0.0
        %672 = vmatpush1.msra.mxu0 0.0
        %673 = vmatprep.subr.mxu0 0.0
        %674 = vmatpush1.msra.mxu0 0.0
        %675 = vmatprep.subr.mxu0 0.0
        %676 = vmatpush1.msra.mxu0 0.0
        %677 = vmatprep.subr.mxu0 0.0
        %678 = vmatpush1.msra.mxu0 0.0
        %679 = vmatprep.subr.mxu0 0.0
        %680 = vmatpush1.msra.mxu0 0.0
        %681 = vmatprep.subr.mxu0 0.0
        %682 = vmatpush1.msra.mxu0 0.0
        %683 = vmatprep.subr.mxu0 0.0
        %684 = vmatpush1.msra.mxu0 0.0
        %685 = vmatprep.subr.mxu0 0.0
        %686 = vmatpush1.msra.mxu0 0.0
        %687 = vmatprep.subr.mxu0 0.0
        %688 = vmatpush1.msra.mxu0 0.0
        %689 = vmatprep.subr.mxu0 0.0
        %690 = vmatpush1.msra.mxu0 0.0
        %691 = vmatprep.subr.mxu0 0.0
        %692 = vmatpush1.msra.mxu0 0.0
        %693 = vmatprep.subr.mxu0 0.0
        %694 = vmatpush1.msra.mxu0 0.0
        %695 = vmatprep.subr.mxu0 0.0
        %696 = vmatpush1.msra.mxu0 0.0
        %697 = vmatprep.subr.mxu0 0.0
        %698 = vmatpush1.msra.mxu0 0.0
        %699 = vmatprep.subr.mxu0 0.0
        %700 = vmatpush1.msra.mxu0 0.0
        %701 = vmatprep.subr.mxu0 0.0
        %702 = vmatpush1.msra.mxu0 0.0
        %703 = vmatprep.subr.mxu0 0.0
        %704 = vmatpush1.msra.mxu0 0.0
        %705 = vmatprep.subr.mxu0 0.0
        %706 = vmatpush1.msra.mxu0 0.0
        %707 = vmatprep.subr.mxu0 0.0
        %708 = vmatpush1.msra.mxu0 0.0
        %709 = vmatprep.subr.mxu0 0.0
        %710 = vmatpush1.msra.mxu0 0.0
        %711 = vmatprep.mubr.f32.mxu0 0.0
        %v712 = vand.u32 %v444, 4294901760
        %v713 = vsub.f32 %v444, %v712
        %714 = vmatmul.mubr.f32.gmra.mrb[0].mxu0 %v713
        %v715 = vpop.f32.mrb[0].mxu0
        %v716 = vadd.f32 %v628, %v715
        %v717 = vpop.f32.mrb[0].mxu0
        %v718 = vadd.f32 %v630, %v717
        %719 = vmatprep.mubr.f32.mxu0 0.0
        %v720 = vand.u32 %v447, 4294901760
        %v721 = vsub.f32 %v447, %v720
        %722 = vmatmul.mubr.f32.gmra.mrb[0].mxu0 %v721
        %v723 = vpop.f32.mrb[0].mxu0
        %v724 = vadd.f32 %v635, %v723
        %v725 = vpop.f32.mrb[0].mxu0
        %v726 = vadd.f32 %v637, %v725
        %727 = vdwg.mxu0
        %v728 = vand.u32 %v425, 4294901760
        %729 = vmatprep.subr.mxu0 %v728
        %v730 = vand.u32 %v424, 4294901760
        %731 = vmatpush1.msra.mxu0 %v730
        %v732 = vand.u32 %v429, 4294901760
        %733 = vmatprep.subr.mxu0 %v732
        %v734 = vand.u32 %v428, 4294901760
        %735 = vmatpush1.msra.mxu0 %v734
        %736 = vmatprep.subr.mxu0 0.0
        %737 = vmatpush1.msra.mxu0 0.0
        %738 = vmatprep.subr.mxu0 0.0
        %739 = vmatpush1.msra.mxu0 0.0
        %740 = vmatprep.subr.mxu0 0.0
        %741 = vmatpush1.msra.mxu0 0.0
        %742 = vmatprep.subr.mxu0 0.0
        %743 = vmatpush1.msra.mxu0 0.0
        %744 = vmatprep.subr.mxu0 0.0
        %745 = vmatpush1.msra.mxu0 0.0
        %746 = vmatprep.subr.mxu0 0.0
        %747 = vmatpush1.msra.mxu0 0.0
        %748 = vmatprep.subr.mxu0 0.0
        %749 = vmatpush1.msra.mxu0 0.0
        %750 = vmatprep.subr.mxu0 0.0
        %751 = vmatpush1.msra.mxu0 0.0
        %752 = vmatprep.subr.mxu0 0.0
        %753 = vmatpush1.msra.mxu0 0.0
        %754 = vmatprep.subr.mxu0 0.0
        %755 = vmatpush1.msra.mxu0 0.0
        %756 = vmatprep.subr.mxu0 0.0
        %757 = vmatpush1.msra.mxu0 0.0
        %758 = vmatprep.subr.mxu0 0.0
        %759 = vmatpush1.msra.mxu0 0.0
        %760 = vmatprep.subr.mxu0 0.0
        %761 = vmatpush1.msra.mxu0 0.0
        %762 = vmatprep.subr.mxu0 0.0
        %763 = vmatpush1.msra.mxu0 0.0
        %764 = vmatprep.subr.mxu0 0.0
        %765 = vmatpush1.msra.mxu0 0.0
        %766 = vmatprep.subr.mxu0 0.0
        %767 = vmatpush1.msra.mxu0 0.0
        %768 = vmatprep.subr.mxu0 0.0
        %769 = vmatpush1.msra.mxu0 0.0
        %770 = vmatprep.subr.mxu0 0.0
        %771 = vmatpush1.msra.mxu0 0.0
        %772 = vmatprep.subr.mxu0 0.0
        %773 = vmatpush1.msra.mxu0 0.0
        %774 = vmatprep.subr.mxu0 0.0
        %775 = vmatpush1.msra.mxu0 0.0
        %776 = vmatprep.subr.mxu0 0.0
        %777 = vmatpush1.msra.mxu0 0.0
        %778 = vmatprep.subr.mxu0 0.0
        %779 = vmatpush1.msra.mxu0 0.0
        %780 = vmatprep.subr.mxu0 0.0
        %781 = vmatpush1.msra.mxu0 0.0
        %782 = vmatprep.subr.mxu0 0.0
        %783 = vmatpush1.msra.mxu0 0.0
        %784 = vmatprep.subr.mxu0 0.0
        %785 = vmatpush1.msra.mxu0 0.0
        %786 = vmatprep.subr.mxu0 0.0
        %787 = vmatpush1.msra.mxu0 0.0
        %788 = vmatprep.subr.mxu0 0.0
        %789 = vmatpush1.msra.mxu0 0.0
        %790 = vmatprep.subr.mxu0 0.0
        %791 = vmatpush1.msra.mxu0 0.0
        %792 = vmatprep.subr.mxu0 0.0
        %793 = vmatpush1.msra.mxu0 0.0
        %794 = vmatprep.subr.mxu0 0.0
        %795 = vmatpush1.msra.mxu0 0.0
        %796 = vmatprep.mubr.f32.mxu0 0.0
        %v797 = vand.u32 %v444, 4294901760
        %v798 = vsub.f32 %v444, %v797
        %v799 = vand.u32 %v798, 4294901760
        %800 = vmatmul.mubr.f32.gmra.mrb[0].mxu0 %v799
        %v801 = vpop.f32.mrb[0].mxu0
        %v802 = vadd.f32 %v716, %v801
        %v803 = vpop.f32.mrb[0].mxu0
        %v804 = vadd.f32 %v718, %v803
        %805 = vmatprep.mubr.f32.mxu0 0.0
        %v806 = vand.u32 %v447, 4294901760
        %v807 = vsub.f32 %v447, %v806
        %v808 = vand.u32 %v807, 4294901760
        %809 = vmatmul.mubr.f32.gmra.mrb[0].mxu0 %v808
        %v810 = vpop.f32.mrb[0].mxu0
        %v811 = vadd.f32 %v724, %v810
        %v812 = vpop.f32.mrb[0].mxu0
        %v813 = vadd.f32 %v726, %v812
        %814 = vdwg.mxu0
        %v815 = vand.u32 %v425, 4294901760
        %v816 = vsub.f32 %v425, %v815
        %v817 = vand.u32 %v816, 4294901760
        %818 = vmatprep.subr.mxu0 %v817
        %v819 = vand.u32 %v424, 4294901760
        %v820 = vsub.f32 %v424, %v819
        %v821 = vand.u32 %v820, 4294901760
        %822 = vmatpush1.msra.mxu0 %v821
        %v823 = vand.u32 %v429, 4294901760
        %v824 = vsub.f32 %v429, %v823
        %v825 = vand.u32 %v824, 4294901760
        %826 = vmatprep.subr.mxu0 %v825
        %v827 = vand.u32 %v428, 4294901760
        %v828 = vsub.f32 %v428, %v827
        %v829 = vand.u32 %v828, 4294901760
        %830 = vmatpush1.msra.mxu0 %v829
        %831 = vmatprep.subr.mxu0 0.0
        %832 = vmatpush1.msra.mxu0 0.0
        %833 = vmatprep.subr.mxu0 0.0
        %834 = vmatpush1.msra.mxu0 0.0
        %835 = vmatprep.subr.mxu0 0.0
        %836 = vmatpush1.msra.mxu0 0.0
        %837 = vmatprep.subr.mxu0 0.0
        %838 = vmatpush1.msra.mxu0 0.0
        %839 = vmatprep.subr.mxu0 0.0
        %840 = vmatpush1.msra.mxu0 0.0
        %841 = vmatprep.subr.mxu0 0.0
        %842 = vmatpush1.msra.mxu0 0.0
        %843 = vmatprep.subr.mxu0 0.0
        %844 = vmatpush1.msra.mxu0 0.0
        %845 = vmatprep.subr.mxu0 0.0
        %846 = vmatpush1.msra.mxu0 0.0
        %847 = vmatprep.subr.mxu0 0.0
        %848 = vmatpush1.msra.mxu0 0.0
        %849 = vmatprep.subr.mxu0 0.0
        %850 = vmatpush1.msra.mxu0 0.0
        %851 = vmatprep.subr.mxu0 0.0
        %852 = vmatpush1.msra.mxu0 0.0
        %853 = vmatprep.subr.mxu0 0.0
        %854 = vmatpush1.msra.mxu0 0.0
        %855 = vmatprep.subr.mxu0 0.0
        %856 = vmatpush1.msra.mxu0 0.0
        %857 = vmatprep.subr.mxu0 0.0
        %858 = vmatpush1.msra.mxu0 0.0
        %859 = vmatprep.subr.mxu0 0.0
        %860 = vmatpush1.msra.mxu0 0.0
        %861 = vmatprep.subr.mxu0 0.0
        %862 = vmatpush1.msra.mxu0 0.0
        %863 = vmatprep.subr.mxu0 0.0
        %864 = vmatpush1.msra.mxu0 0.0
        %865 = vmatprep.subr.mxu0 0.0
        %866 = vmatpush1.msra.mxu0 0.0
        %867 = vmatprep.subr.mxu0 0.0
        %868 = vmatpush1.msra.mxu0 0.0
        %869 = vmatprep.subr.mxu0 0.0
        %870 = vmatpush1.msra.mxu0 0.0
        %871 = vmatprep.subr.mxu0 0.0
        %872 = vmatpush1.msra.mxu0 0.0
        %873 = vmatprep.subr.mxu0 0.0
        %874 = vmatpush1.msra.mxu0 0.0
        %875 = vmatprep.subr.mxu0 0.0
        %876 = vmatpush1.msra.mxu0 0.0
        %877 = vmatprep.subr.mxu0 0.0
        %878 = vmatpush1.msra.mxu0 0.0
        %879 = vmatprep.subr.mxu0 0.0
        %880 = vmatpush1.msra.mxu0 0.0
        %881 = vmatprep.subr.mxu0 0.0
        %882 = vmatpush1.msra.mxu0 0.0
        %883 = vmatprep.subr.mxu0 0.0
        %884 = vmatpush1.msra.mxu0 0.0
        %885 = vmatprep.subr.mxu0 0.0
        %886 = vmatpush1.msra.mxu0 0.0
        %887 = vmatprep.subr.mxu0 0.0
        %888 = vmatpush1.msra.mxu0 0.0
        %889 = vmatprep.subr.mxu0 0.0
        %890 = vmatpush1.msra.mxu0 0.0
        %891 = vmatprep.mubr.f32.mxu0 0.0
        %v892 = vand.u32 %v444, 4294901760
        %893 = vmatmul.mubr.f32.gmra.mrb[0].mxu0 %v892
        %v894 = vpop.f32.mrb[0].mxu0
        %v895 = vadd.f32 %v802, %v894
        %v896 = vpop.f32.mrb[0].mxu0
        %v897 = vadd.f32 %v804, %v896
        %898 = vmatprep.mubr.f32.mxu0 0.0
        %v899 = vand.u32 %v447, 4294901760
        %900 = vmatmul.mubr.f32.gmra.mrb[0].mxu0 %v899
        %v901 = vpop.f32.mrb[0].mxu0
        %v902 = vadd.f32 %v811, %v901
        %v903 = vpop.f32.mrb[0].mxu0
        %v904 = vadd.f32 %v813, %v903
        %905 = vdwg.mxu0
        %v906 = vand.u32 %v425, 4294901760
        %907 = vmatprep.subr.mxu0 %v906
        %v908 = vand.u32 %v424, 4294901760
        %909 = vmatpush1.msra.mxu0 %v908
        %v910 = vand.u32 %v429, 4294901760
        %911 = vmatprep.subr.mxu0 %v910
        %v912 = vand.u32 %v428, 4294901760
        %913 = vmatpush1.msra.mxu0 %v912
        %914 = vmatprep.subr.mxu0 0.0
        %915 = vmatpush1.msra.mxu0 0.0
        %916 = vmatprep.subr.mxu0 0.0
        %917 = vmatpush1.msra.mxu0 0.0
        %918 = vmatprep.subr.mxu0 0.0
        %919 = vmatpush1.msra.mxu0 0.0
        %920 = vmatprep.subr.mxu0 0.0
        %921 = vmatpush1.msra.mxu0 0.0
        %922 = vmatprep.subr.mxu0 0.0
        %923 = vmatpush1.msra.mxu0 0.0
        %924 = vmatprep.subr.mxu0 0.0
        %925 = vmatpush1.msra.mxu0 0.0
        %926 = vmatprep.subr.mxu0 0.0
        %927 = vmatpush1.msra.mxu0 0.0
        %928 = vmatprep.subr.mxu0 0.0
        %929 = vmatpush1.msra.mxu0 0.0
        %930 = vmatprep.subr.mxu0 0.0
        %931 = vmatpush1.msra.mxu0 0.0
        %932 = vmatprep.subr.mxu0 0.0
        %933 = vmatpush1.msra.mxu0 0.0
        %934 = vmatprep.subr.mxu0 0.0
        %935 = vmatpush1.msra.mxu0 0.0
        %936 = vmatprep.subr.mxu0 0.0
        %937 = vmatpush1.msra.mxu0 0.0
        %938 = vmatprep.subr.mxu0 0.0
        %939 = vmatpush1.msra.mxu0 0.0
        %940 = vmatprep.subr.mxu0 0.0
        %941 = vmatpush1.msra.mxu0 0.0
        %942 = vmatprep.subr.mxu0 0.0
        %943 = vmatpush1.msra.mxu0 0.0
        %944 = vmatprep.subr.mxu0 0.0
        %945 = vmatpush1.msra.mxu0 0.0
        %946 = vmatprep.subr.mxu0 0.0
        %947 = vmatpush1.msra.mxu0 0.0
        %948 = vmatprep.subr.mxu0 0.0
        %949 = vmatpush1.msra.mxu0 0.0
        %950 = vmatprep.subr.mxu0 0.0
        %951 = vmatpush1.msra.mxu0 0.0
        %952 = vmatprep.subr.mxu0 0.0
        %953 = vmatpush1.msra.mxu0 0.0
        %954 = vmatprep.subr.mxu0 0.0
        %955 = vmatpush1.msra.mxu0 0.0
        %956 = vmatprep.subr.mxu0 0.0
        %957 = vmatpush1.msra.mxu0 0.0
        %958 = vmatprep.subr.mxu0 0.0
        %959 = vmatpush1.msra.mxu0 0.0
        %960 = vmatprep.subr.mxu0 0.0
        %961 = vmatpush1.msra.mxu0 0.0
        %962 = vmatprep.subr.mxu0 0.0
        %963 = vmatpush1.msra.mxu0 0.0
        %964 = vmatprep.subr.mxu0 0.0
        %965 = vmatpush1.msra.mxu0 0.0
        %966 = vmatprep.subr.mxu0 0.0
        %967 = vmatpush1.msra.mxu0 0.0
        %968 = vmatprep.subr.mxu0 0.0
        %969 = vmatpush1.msra.mxu0 0.0
        %970 = vmatprep.subr.mxu0 0.0
        %971 = vmatpush1.msra.mxu0 0.0
        %972 = vmatprep.subr.mxu0 0.0
        %973 = vmatpush1.msra.mxu0 0.0
        %974 = vmatprep.mubr.f32.mxu0 0.0
        %v975 = vand.u32 %v444, 4294901760
        %976 = vmatmul.mubr.f32.gmra.mrb[0].mxu0 %v975
        %v977 = vpop.f32.mrb[0].mxu0
        %v978 = vadd.f32 %v895, %v977
        %v979 = vpop.f32.mrb[0].mxu0
        %v980 = vadd.f32 %v897, %v979
        %981 = vmatprep.mubr.f32.mxu0 0.0
        %v982 = vand.u32 %v447, 4294901760
        %983 = vmatmul.mubr.f32.gmra.mrb[0].mxu0 %v982
        %v984 = vpop.f32.mrb[0].mxu0
        %v985 = vadd.f32 %v902, %v984
        %v986 = vpop.f32.mrb[0].mxu0
        %v987 = vadd.f32 %v904, %v986
        %988 = vdwg.mxu0
        %v989 = vand.u32 %v427, 4294901760
        %990 = vmatprep.subr.mxu0 %v989
        %v991 = vand.u32 %v426, 4294901760
        %992 = vmatpush1.msra.mxu0 %v991
        %v993 = vand.u32 %v431, 4294901760
        %994 = vmatprep.subr.mxu0 %v993
        %v995 = vand.u32 %v430, 4294901760
        %996 = vmatpush1.msra.mxu0 %v995
        %997 = vmatprep.subr.mxu0 0.0
        %998 = vmatpush1.msra.mxu0 0.0
        %999 = vmatprep.subr.mxu0 0.0
        %1000 = vmatpush1.msra.mxu0 0.0
        %1001 = vmatprep.subr.mxu0 0.0
        %1002 = vmatpush1.msra.mxu0 0.0
        %1003 = vmatprep.subr.mxu0 0.0
        %1004 = vmatpush1.msra.mxu0 0.0
        %1005 = vmatprep.subr.mxu0 0.0
        %1006 = vmatpush1.msra.mxu0 0.0
        %1007 = vmatprep.subr.mxu0 0.0
        %1008 = vmatpush1.msra.mxu0 0.0
        %1009 = vmatprep.subr.mxu0 0.0
        %1010 = vmatpush1.msra.mxu0 0.0
        %1011 = vmatprep.subr.mxu0 0.0
        %1012 = vmatpush1.msra.mxu0 0.0
        %1013 = vmatprep.subr.mxu0 0.0
        %1014 = vmatpush1.msra.mxu0 0.0
        %1015 = vmatprep.subr.mxu0 0.0
        %1016 = vmatpush1.msra.mxu0 0.0
        %1017 = vmatprep.subr.mxu0 0.0
        %1018 = vmatpush1.msra.mxu0 0.0
        %1019 = vmatprep.subr.mxu0 0.0
        %1020 = vmatpush1.msra.mxu0 0.0
        %1021 = vmatprep.subr.mxu0 0.0
        %1022 = vmatpush1.msra.mxu0 0.0
        %1023 = vmatprep.subr.mxu0 0.0
        %1024 = vmatpush1.msra.mxu0 0.0
        %1025 = vmatprep.subr.mxu0 0.0
        %1026 = vmatpush1.msra.mxu0 0.0
        %1027 = vmatprep.subr.mxu0 0.0
        %1028 = vmatpush1.msra.mxu0 0.0
        %1029 = vmatprep.subr.mxu0 0.0
        %1030 = vmatpush1.msra.mxu0 0.0
        %1031 = vmatprep.subr.mxu0 0.0
        %1032 = vmatpush1.msra.mxu0 0.0
        %1033 = vmatprep.subr.mxu0 0.0
        %1034 = vmatpush1.msra.mxu0 0.0
        %1035 = vmatprep.subr.mxu0 0.0
        %1036 = vmatpush1.msra.mxu0 0.0
        %1037 = vmatprep.subr.mxu0 0.0
        %1038 = vmatpush1.msra.mxu0 0.0
        %1039 = vmatprep.subr.mxu0 0.0
        %1040 = vmatpush1.msra.mxu0 0.0
        %1041 = vmatprep.subr.mxu0 0.0
        %1042 = vmatpush1.msra.mxu0 0.0
        %1043 = vmatprep.subr.mxu0 0.0
        %1044 = vmatpush1.msra.mxu0 0.0
        %1045 = vmatprep.subr.mxu0 0.0
        %1046 = vmatpush1.msra.mxu0 0.0
        %1047 = vmatprep.subr.mxu0 0.0
        %1048 = vmatpush1.msra.mxu0 0.0
        %1049 = vmatprep.subr.mxu0 0.0
        %1050 = vmatpush1.msra.mxu0 0.0
        %1051 = vmatprep.subr.mxu0 0.0
        %1052 = vmatpush1.msra.mxu0 0.0
        %1053 = vmatprep.subr.mxu0 0.0
        %1054 = vmatpush1.msra.mxu0 0.0
        %1055 = vmatprep.subr.mxu0 0.0
        %1056 = vmatpush1.msra.mxu0 0.0
        %1057 = vmatprep.mubr.f32.mxu0 0.0
        %v1058 = vand.u32 %v444, 4294901760
        %v1059 = vsub.f32 %v444, %v1058
        %v1060 = vand.u32 %v1059, 4294901760
        %v1061 = vsub.f32 %v1059, %v1060
        %v1062 = vand.u32 %v1061, 4294901760
        %1063 = vmatmul.mubr.f32.gmra.mrb[0].mxu0 %v1062
        %v1064 = vpop.f32.mrb[0].mxu0
        %v1065 = vadd.f32 %v435, %v1064
        %v1066 = vpop.f32.mrb[0].mxu0
        %v1067 = vadd.f32 %v435, %v1066
        %1068 = vmatprep.mubr.f32.mxu0 0.0
        %v1069 = vand.u32 %v447, 4294901760
        %v1070 = vsub.f32 %v447, %v1069
        %v1071 = vand.u32 %v1070, 4294901760
        %v1072 = vsub.f32 %v1070, %v1071
        %v1073 = vand.u32 %v1072, 4294901760
        %1074 = vmatmul.mubr.f32.gmra.mrb[0].mxu0 %v1073
        %v1075 = vpop.f32.mrb[0].mxu0
        %v1076 = vadd.f32 %v440, %v1075
        %v1077 = vpop.f32.mrb[0].mxu0
        %v1078 = vadd.f32 %v440, %v1077
        %1079 = vdwg.mxu0
        %v1080 = vand.u32 %v427, 4294901760
        %v1081 = vsub.f32 %v427, %v1080
        %v1082 = vand.u32 %v1081, 4294901760
        %v1083 = vsub.f32 %v1081, %v1082
        %v1084 = vand.u32 %v1083, 4294901760
        %1085 = vmatprep.subr.mxu0 %v1084
        %v1086 = vand.u32 %v426, 4294901760
        %v1087 = vsub.f32 %v426, %v1086
        %v1088 = vand.u32 %v1087, 4294901760
        %v1089 = vsub.f32 %v1087, %v1088
        %v1090 = vand.u32 %v1089, 4294901760
        %1091 = vmatpush1.msra.mxu0 %v1090
        %v1092 = vand.u32 %v431, 4294901760
        %v1093 = vsub.f32 %v431, %v1092
        %v1094 = vand.u32 %v1093, 4294901760
        %v1095 = vsub.f32 %v1093, %v1094
        %v1096 = vand.u32 %v1095, 4294901760
        %1097 = vmatprep.subr.mxu0 %v1096
        %v1098 = vand.u32 %v430, 4294901760
        %v1099 = vsub.f32 %v430, %v1098
        %v1100 = vand.u32 %v1099, 4294901760
        %v1101 = vsub.f32 %v1099, %v1100
        %v1102 = vand.u32 %v1101, 4294901760
        %1103 = vmatpush1.msra.mxu0 %v1102
        %1104 = vmatprep.subr.mxu0 0.0
        %1105 = vmatpush1.msra.mxu0 0.0
        %1106 = vmatprep.subr.mxu0 0.0
        %1107 = vmatpush1.msra.mxu0 0.0
        %1108 = vmatprep.subr.mxu0 0.0
        %1109 = vmatpush1.msra.mxu0 0.0
        %1110 = vmatprep.subr.mxu0 0.0
        %1111 = vmatpush1.msra.mxu0 0.0
        %1112 = vmatprep.subr.mxu0 0.0
        %1113 = vmatpush1.msra.mxu0 0.0
        %1114 = vmatprep.subr.mxu0 0.0
        %1115 = vmatpush1.msra.mxu0 0.0
        %1116 = vmatprep.subr.mxu0 0.0
        %1117 = vmatpush1.msra.mxu0 0.0
        %1118 = vmatprep.subr.mxu0 0.0
        %1119 = vmatpush1.msra.mxu0 0.0
        %1120 = vmatprep.subr.mxu0 0.0
        %1121 = vmatpush1.msra.mxu0 0.0
        %1122 = vmatprep.subr.mxu0 0.0
        %1123 = vmatpush1.msra.mxu0 0.0
        %1124 = vmatprep.subr.mxu0 0.0
        %1125 = vmatpush1.msra.mxu0 0.0
        %1126 = vmatprep.subr.mxu0 0.0
        %1127 = vmatpush1.msra.mxu0 0.0
        %1128 = vmatprep.subr.mxu0 0.0
        %1129 = vmatpush1.msra.mxu0 0.0
        %1130 = vmatprep.subr.mxu0 0.0
        %1131 = vmatpush1.msra.mxu0 0.0
        %1132 = vmatprep.subr.mxu0 0.0
        %1133 = vmatpush1.msra.mxu0 0.0
        %1134 = vmatprep.subr.mxu0 0.0
        %1135 = vmatpush1.msra.mxu0 0.0
        %1136 = vmatprep.subr.mxu0 0.0
        %1137 = vmatpush1.msra.mxu0 0.0
        %1138 = vmatprep.subr.mxu0 0.0
        %1139 = vmatpush1.msra.mxu0 0.0
        %1140 = vmatprep.subr.mxu0 0.0
        %1141 = vmatpush1.msra.mxu0 0.0
        %1142 = vmatprep.subr.mxu0 0.0
        %1143 = vmatpush1.msra.mxu0 0.0
        %1144 = vmatprep.subr.mxu0 0.0
        %1145 = vmatpush1.msra.mxu0 0.0
        %1146 = vmatprep.subr.mxu0 0.0
        %1147 = vmatpush1.msra.mxu0 0.0
        %1148 = vmatprep.subr.mxu0 0.0
        %1149 = vmatpush1.msra.mxu0 0.0
        %1150 = vmatprep.subr.mxu0 0.0
        %1151 = vmatpush1.msra.mxu0 0.0
        %1152 = vmatprep.subr.mxu0 0.0
        %1153 = vmatpush1.msra.mxu0 0.0
        %1154 = vmatprep.subr.mxu0 0.0
        %1155 = vmatpush1.msra.mxu0 0.0
        %1156 = vmatprep.subr.mxu0 0.0
        %1157 = vmatpush1.msra.mxu0 0.0
        %1158 = vmatprep.subr.mxu0 0.0
        %1159 = vmatpush1.msra.mxu0 0.0
        %1160 = vmatprep.subr.mxu0 0.0
        %1161 = vmatpush1.msra.mxu0 0.0
        %1162 = vmatprep.subr.mxu0 0.0
        %1163 = vmatpush1.msra.mxu0 0.0
        %1164 = vmatprep.mubr.f32.mxu0 0.0
        %v1165 = vand.u32 %v444, 4294901760
        %1166 = vmatmul.mubr.f32.gmra.mrb[0].mxu0 %v1165
        %v1167 = vpop.f32.mrb[0].mxu0
        %v1168 = vadd.f32 %v1065, %v1167
        %v1169 = vpop.f32.mrb[0].mxu0
        %v1170 = vadd.f32 %v1067, %v1169
        %1171 = vmatprep.mubr.f32.mxu0 0.0
        %v1172 = vand.u32 %v447, 4294901760
        %1173 = vmatmul.mubr.f32.gmra.mrb[0].mxu0 %v1172
        %v1174 = vpop.f32.mrb[0].mxu0
        %v1175 = vadd.f32 %v1076, %v1174
        %v1176 = vpop.f32.mrb[0].mxu0
        %v1177 = vadd.f32 %v1078, %v1176
        %1178 = vdwg.mxu0
        %v1179 = vand.u32 %v427, 4294901760
        %v1180 = vsub.f32 %v427, %v1179
        %1181 = vmatprep.subr.mxu0 %v1180
        %v1182 = vand.u32 %v426, 4294901760
        %v1183 = vsub.f32 %v426, %v1182
        %1184 = vmatpush1.msra.mxu0 %v1183
        %v1185 = vand.u32 %v431, 4294901760
        %v1186 = vsub.f32 %v431, %v1185
        %1187 = vmatprep.subr.mxu0 %v1186
        %v1188 = vand.u32 %v430, 4294901760
        %v1189 = vsub.f32 %v430, %v1188
        %1190 = vmatpush1.msra.mxu0 %v1189
        %1191 = vmatprep.subr.mxu0 0.0
        %1192 = vmatpush1.msra.mxu0 0.0
        %1193 = vmatprep.subr.mxu0 0.0
        %1194 = vmatpush1.msra.mxu0 0.0
        %1195 = vmatprep.subr.mxu0 0.0
        %1196 = vmatpush1.msra.mxu0 0.0
        %1197 = vmatprep.subr.mxu0 0.0
        %1198 = vmatpush1.msra.mxu0 0.0
        %1199 = vmatprep.subr.mxu0 0.0
        %1200 = vmatpush1.msra.mxu0 0.0
        %1201 = vmatprep.subr.mxu0 0.0
        %1202 = vmatpush1.msra.mxu0 0.0
        %1203 = vmatprep.subr.mxu0 0.0
        %1204 = vmatpush1.msra.mxu0 0.0
        %1205 = vmatprep.subr.mxu0 0.0
        %1206 = vmatpush1.msra.mxu0 0.0
        %1207 = vmatprep.subr.mxu0 0.0
        %1208 = vmatpush1.msra.mxu0 0.0
        %1209 = vmatprep.subr.mxu0 0.0
        %1210 = vmatpush1.msra.mxu0 0.0
        %1211 = vmatprep.subr.mxu0 0.0
        %1212 = vmatpush1.msra.mxu0 0.0
        %1213 = vmatprep.subr.mxu0 0.0
        %1214 = vmatpush1.msra.mxu0 0.0
        %1215 = vmatprep.subr.mxu0 0.0
        %1216 = vmatpush1.msra.mxu0 0.0
        %1217 = vmatprep.subr.mxu0 0.0
        %1218 = vmatpush1.msra.mxu0 0.0
        %1219 = vmatprep.subr.mxu0 0.0
        %1220 = vmatpush1.msra.mxu0 0.0
        %1221 = vmatprep.subr.mxu0 0.0
        %1222 = vmatpush1.msra.mxu0 0.0
        %1223 = vmatprep.subr.mxu0 0.0
        %1224 = vmatpush1.msra.mxu0 0.0
        %1225 = vmatprep.subr.mxu0 0.0
        %1226 = vmatpush1.msra.mxu0 0.0
        %1227 = vmatprep.subr.mxu0 0.0
        %1228 = vmatpush1.msra.mxu0 0.0
        %1229 = vmatprep.subr.mxu0 0.0
        %1230 = vmatpush1.msra.mxu0 0.0
        %1231 = vmatprep.subr.mxu0 0.0
        %1232 = vmatpush1.msra.mxu0 0.0
        %1233 = vmatprep.subr.mxu0 0.0
        %1234 = vmatpush1.msra.mxu0 0.0
        %1235 = vmatprep.subr.mxu0 0.0
        %1236 = vmatpush1.msra.mxu0 0.0
        %1237 = vmatprep.subr.mxu0 0.0
        %1238 = vmatpush1.msra.mxu0 0.0
        %1239 = vmatprep.subr.mxu0 0.0
        %1240 = vmatpush1.msra.mxu0 0.0
        %1241 = vmatprep.subr.mxu0 0.0
        %1242 = vmatpush1.msra.mxu0 0.0
        %1243 = vmatprep.subr.mxu0 0.0
        %1244 = vmatpush1.msra.mxu0 0.0
        %1245 = vmatprep.subr.mxu0 0.0
        %1246 = vmatpush1.msra.mxu0 0.0
        %1247 = vmatprep.subr.mxu0 0.0
        %1248 = vmatpush1.msra.mxu0 0.0
        %1249 = vmatprep.subr.mxu0 0.0
        %1250 = vmatpush1.msra.mxu0 0.0
        %1251 = vmatprep.mubr.f32.mxu0 0.0
        %v1252 = vand.u32 %v444, 4294901760
        %v1253 = vsub.f32 %v444, %v1252
        %1254 = vmatmul.mubr.f32.gmra.mrb[0].mxu0 %v1253
        %v1255 = vpop.f32.mrb[0].mxu0
        %v1256 = vadd.f32 %v1168, %v1255
        %v1257 = vpop.f32.mrb[0].mxu0
        %v1258 = vadd.f32 %v1170, %v1257
        %1259 = vmatprep.mubr.f32.mxu0 0.0
        %v1260 = vand.u32 %v447, 4294901760
        %v1261 = vsub.f32 %v447, %v1260
        %1262 = vmatmul.mubr.f32.gmra.mrb[0].mxu0 %v1261
        %v1263 = vpop.f32.mrb[0].mxu0
        %v1264 = vadd.f32 %v1175, %v1263
        %v1265 = vpop.f32.mrb[0].mxu0
        %v1266 = vadd.f32 %v1177, %v1265
        %1267 = vdwg.mxu0
        %v1268 = vand.u32 %v427, 4294901760
        %1269 = vmatprep.subr.mxu0 %v1268
        %v1270 = vand.u32 %v426, 4294901760
        %1271 = vmatpush1.msra.mxu0 %v1270
        %v1272 = vand.u32 %v431, 4294901760
        %1273 = vmatprep.subr.mxu0 %v1272
        %v1274 = vand.u32 %v430, 4294901760
        %1275 = vmatpush1.msra.mxu0 %v1274
        %1276 = vmatprep.subr.mxu0 0.0
        %1277 = vmatpush1.msra.mxu0 0.0
        %1278 = vmatprep.subr.mxu0 0.0
        %1279 = vmatpush1.msra.mxu0 0.0
        %1280 = vmatprep.subr.mxu0 0.0
        %1281 = vmatpush1.msra.mxu0 0.0
        %1282 = vmatprep.subr.mxu0 0.0
        %1283 = vmatpush1.msra.mxu0 0.0
        %1284 = vmatprep.subr.mxu0 0.0
        %1285 = vmatpush1.msra.mxu0 0.0
        %1286 = vmatprep.subr.mxu0 0.0
        %1287 = vmatpush1.msra.mxu0 0.0
        %1288 = vmatprep.subr.mxu0 0.0
        %1289 = vmatpush1.msra.mxu0 0.0
        %1290 = vmatprep.subr.mxu0 0.0
        %1291 = vmatpush1.msra.mxu0 0.0
        %1292 = vmatprep.subr.mxu0 0.0
        %1293 = vmatpush1.msra.mxu0 0.0
        %1294 = vmatprep.subr.mxu0 0.0
        %1295 = vmatpush1.msra.mxu0 0.0
        %1296 = vmatprep.subr.mxu0 0.0
        %1297 = vmatpush1.msra.mxu0 0.0
        %1298 = vmatprep.subr.mxu0 0.0
        %1299 = vmatpush1.msra.mxu0 0.0
        %1300 = vmatprep.subr.mxu0 0.0
        %1301 = vmatpush1.msra.mxu0 0.0
        %1302 = vmatprep.subr.mxu0 0.0
        %1303 = vmatpush1.msra.mxu0 0.0
        %1304 = vmatprep.subr.mxu0 0.0
        %1305 = vmatpush1.msra.mxu0 0.0
        %1306 = vmatprep.subr.mxu0 0.0
        %1307 = vmatpush1.msra.mxu0 0.0
        %1308 = vmatprep.subr.mxu0 0.0
        %1309 = vmatpush1.msra.mxu0 0.0
        %1310 = vmatprep.subr.mxu0 0.0
        %1311 = vmatpush1.msra.mxu0 0.0
        %1312 = vmatprep.subr.mxu0 0.0
        %1313 = vmatpush1.msra.mxu0 0.0
        %1314 = vmatprep.subr.mxu0 0.0
        %1315 = vmatpush1.msra.mxu0 0.0
        %1316 = vmatprep.subr.mxu0 0.0
        %1317 = vmatpush1.msra.mxu0 0.0
        %1318 = vmatprep.subr.mxu0 0.0
        %1319 = vmatpush1.msra.mxu0 0.0
        %1320 = vmatprep.subr.mxu0 0.0
        %1321 = vmatpush1.msra.mxu0 0.0
        %1322 = vmatprep.subr.mxu0 0.0
        %1323 = vmatpush1.msra.mxu0 0.0
        %1324 = vmatprep.subr.mxu0 0.0
        %1325 = vmatpush1.msra.mxu0 0.0
        %1326 = vmatprep.subr.mxu0 0.0
        %1327 = vmatpush1.msra.mxu0 0.0
        %1328 = vmatprep.subr.mxu0 0.0
        %1329 = vmatpush1.msra.mxu0 0.0
        %1330 = vmatprep.subr.mxu0 0.0
        %1331 = vmatpush1.msra.mxu0 0.0
        %1332 = vmatprep.subr.mxu0 0.0
        %1333 = vmatpush1.msra.mxu0 0.0
        %1334 = vmatprep.subr.mxu0 0.0
        %1335 = vmatpush1.msra.mxu0 0.0
        %1336 = vmatprep.mubr.f32.mxu0 0.0
        %v1337 = vand.u32 %v444, 4294901760
        %v1338 = vsub.f32 %v444, %v1337
        %v1339 = vand.u32 %v1338, 4294901760
        %1340 = vmatmul.mubr.f32.gmra.mrb[0].mxu0 %v1339
        %v1341 = vpop.f32.mrb[0].mxu0
        %v1342 = vadd.f32 %v1256, %v1341
        %v1343 = vpop.f32.mrb[0].mxu0
        %v1344 = vadd.f32 %v1258, %v1343
        %1345 = vmatprep.mubr.f32.mxu0 0.0
        %v1346 = vand.u32 %v447, 4294901760
        %v1347 = vsub.f32 %v447, %v1346
        %v1348 = vand.u32 %v1347, 4294901760
        %1349 = vmatmul.mubr.f32.gmra.mrb[0].mxu0 %v1348
        %v1350 = vpop.f32.mrb[0].mxu0
        %v1351 = vadd.f32 %v1264, %v1350
        %v1352 = vpop.f32.mrb[0].mxu0
        %v1353 = vadd.f32 %v1266, %v1352
        %1354 = vdwg.mxu0
        %v1355 = vand.u32 %v427, 4294901760
        %v1356 = vsub.f32 %v427, %v1355
        %v1357 = vand.u32 %v1356, 4294901760
        %1358 = vmatprep.subr.mxu0 %v1357
        %v1359 = vand.u32 %v426, 4294901760
        %v1360 = vsub.f32 %v426, %v1359
        %v1361 = vand.u32 %v1360, 4294901760
        %1362 = vmatpush1.msra.mxu0 %v1361
        %v1363 = vand.u32 %v431, 4294901760
        %v1364 = vsub.f32 %v431, %v1363
        %v1365 = vand.u32 %v1364, 4294901760
        %1366 = vmatprep.subr.mxu0 %v1365
        %v1367 = vand.u32 %v430, 4294901760
        %v1368 = vsub.f32 %v430, %v1367
        %v1369 = vand.u32 %v1368, 4294901760
        %1370 = vmatpush1.msra.mxu0 %v1369
        %1371 = vmatprep.subr.mxu0 0.0
        %1372 = vmatpush1.msra.mxu0 0.0
        %1373 = vmatprep.subr.mxu0 0.0
        %1374 = vmatpush1.msra.mxu0 0.0
        %1375 = vmatprep.subr.mxu0 0.0
        %1376 = vmatpush1.msra.mxu0 0.0
        %1377 = vmatprep.subr.mxu0 0.0
        %1378 = vmatpush1.msra.mxu0 0.0
        %1379 = vmatprep.subr.mxu0 0.0
        %1380 = vmatpush1.msra.mxu0 0.0
        %1381 = vmatprep.subr.mxu0 0.0
        %1382 = vmatpush1.msra.mxu0 0.0
        %1383 = vmatprep.subr.mxu0 0.0
        %1384 = vmatpush1.msra.mxu0 0.0
        %1385 = vmatprep.subr.mxu0 0.0
        %1386 = vmatpush1.msra.mxu0 0.0
        %1387 = vmatprep.subr.mxu0 0.0
        %1388 = vmatpush1.msra.mxu0 0.0
        %1389 = vmatprep.subr.mxu0 0.0
        %1390 = vmatpush1.msra.mxu0 0.0
        %1391 = vmatprep.subr.mxu0 0.0
        %1392 = vmatpush1.msra.mxu0 0.0
        %1393 = vmatprep.subr.mxu0 0.0
        %1394 = vmatpush1.msra.mxu0 0.0
        %1395 = vmatprep.subr.mxu0 0.0
        %1396 = vmatpush1.msra.mxu0 0.0
        %1397 = vmatprep.subr.mxu0 0.0
        %1398 = vmatpush1.msra.mxu0 0.0
        %1399 = vmatprep.subr.mxu0 0.0
        %1400 = vmatpush1.msra.mxu0 0.0
        %1401 = vmatprep.subr.mxu0 0.0
        %1402 = vmatpush1.msra.mxu0 0.0
        %1403 = vmatprep.subr.mxu0 0.0
        %1404 = vmatpush1.msra.mxu0 0.0
        %1405 = vmatprep.subr.mxu0 0.0
        %1406 = vmatpush1.msra.mxu0 0.0
        %1407 = vmatprep.subr.mxu0 0.0
        %1408 = vmatpush1.msra.mxu0 0.0
        %1409 = vmatprep.subr.mxu0 0.0
        %1410 = vmatpush1.msra.mxu0 0.0
        %1411 = vmatprep.subr.mxu0 0.0
        %1412 = vmatpush1.msra.mxu0 0.0
        %1413 = vmatprep.subr.mxu0 0.0
        %1414 = vmatpush1.msra.mxu0 0.0
        %1415 = vmatprep.subr.mxu0 0.0
        %1416 = vmatpush1.msra.mxu0 0.0
        %1417 = vmatprep.subr.mxu0 0.0
        %1418 = vmatpush1.msra.mxu0 0.0
        %1419 = vmatprep.subr.mxu0 0.0
        %1420 = vmatpush1.msra.mxu0 0.0
        %1421 = vmatprep.subr.mxu0 0.0
        %1422 = vmatpush1.msra.mxu0 0.0
        %1423 = vmatprep.subr.mxu0 0.0
        %1424 = vmatpush1.msra.mxu0 0.0
        %1425 = vmatprep.subr.mxu0 0.0
        %1426 = vmatpush1.msra.mxu0 0.0
        %1427 = vmatprep.subr.mxu0 0.0
        %1428 = vmatpush1.msra.mxu0 0.0
        %1429 = vmatprep.subr.mxu0 0.0
        %1430 = vmatpush1.msra.mxu0 0.0
        %1431 = vmatprep.mubr.f32.mxu0 0.0
        %v1432 = vand.u32 %v444, 4294901760
        %1433 = vmatmul.mubr.f32.gmra.mrb[0].mxu0 %v1432
        %v1434 = vpop.f32.mrb[0].mxu0
        %v1435 = vadd.f32 %v1342, %v1434
        %v1436 = vpop.f32.mrb[0].mxu0
        %v1437 = vadd.f32 %v1344, %v1436
        %1438 = vmatprep.mubr.f32.mxu0 0.0
        %v1439 = vand.u32 %v447, 4294901760
        %1440 = vmatmul.mubr.f32.gmra.mrb[0].mxu0 %v1439
        %v1441 = vpop.f32.mrb[0].mxu0
        %v1442 = vadd.f32 %v1351, %v1441
        %v1443 = vpop.f32.mrb[0].mxu0
        %v1444 = vadd.f32 %v1353, %v1443
        %1445 = vdwg.mxu0
        %v1446 = vand.u32 %v427, 4294901760
        %1447 = vmatprep.subr.mxu0 %v1446
        %v1448 = vand.u32 %v426, 4294901760
        %1449 = vmatpush1.msra.mxu0 %v1448
        %v1450 = vand.u32 %v431, 4294901760
        %1451 = vmatprep.subr.mxu0 %v1450
        %v1452 = vand.u32 %v430, 4294901760
        %1453 = vmatpush1.msra.mxu0 %v1452
        %1454 = vmatprep.subr.mxu0 0.0
        %1455 = vmatpush1.msra.mxu0 0.0
        %1456 = vmatprep.subr.mxu0 0.0
        %1457 = vmatpush1.msra.mxu0 0.0
        %1458 = vmatprep.subr.mxu0 0.0
        %1459 = vmatpush1.msra.mxu0 0.0
        %1460 = vmatprep.subr.mxu0 0.0
        %1461 = vmatpush1.msra.mxu0 0.0
        %1462 = vmatprep.subr.mxu0 0.0
        %1463 = vmatpush1.msra.mxu0 0.0
        %1464 = vmatprep.subr.mxu0 0.0
        %1465 = vmatpush1.msra.mxu0 0.0
        %1466 = vmatprep.subr.mxu0 0.0
        %1467 = vmatpush1.msra.mxu0 0.0
        %1468 = vmatprep.subr.mxu0 0.0
        %1469 = vmatpush1.msra.mxu0 0.0
        %1470 = vmatprep.subr.mxu0 0.0
        %1471 = vmatpush1.msra.mxu0 0.0
        %1472 = vmatprep.subr.mxu0 0.0
        %1473 = vmatpush1.msra.mxu0 0.0
        %1474 = vmatprep.subr.mxu0 0.0
        %1475 = vmatpush1.msra.mxu0 0.0
        %1476 = vmatprep.subr.mxu0 0.0
        %1477 = vmatpush1.msra.mxu0 0.0
        %1478 = vmatprep.subr.mxu0 0.0
        %1479 = vmatpush1.msra.mxu0 0.0
        %1480 = vmatprep.subr.mxu0 0.0
        %1481 = vmatpush1.msra.mxu0 0.0
        %1482 = vmatprep.subr.mxu0 0.0
        %1483 = vmatpush1.msra.mxu0 0.0
        %1484 = vmatprep.subr.mxu0 0.0
        %1485 = vmatpush1.msra.mxu0 0.0
        %1486 = vmatprep.subr.mxu0 0.0
        %1487 = vmatpush1.msra.mxu0 0.0
        %1488 = vmatprep.subr.mxu0 0.0
        %1489 = vmatpush1.msra.mxu0 0.0
        %1490 = vmatprep.subr.mxu0 0.0
        %1491 = vmatpush1.msra.mxu0 0.0
        %1492 = vmatprep.subr.mxu0 0.0
        %1493 = vmatpush1.msra.mxu0 0.0
        %1494 = vmatprep.subr.mxu0 0.0
        %1495 = vmatpush1.msra.mxu0 0.0
        %1496 = vmatprep.subr.mxu0 0.0
        %1497 = vmatpush1.msra.mxu0 0.0
        %1498 = vmatprep.subr.mxu0 0.0
        %1499 = vmatpush1.msra.mxu0 0.0
        %1500 = vmatprep.subr.mxu0 0.0
        %1501 = vmatpush1.msra.mxu0 0.0
        %1502 = vmatprep.subr.mxu0 0.0
        %1503 = vmatpush1.msra.mxu0 0.0
        %1504 = vmatprep.subr.mxu0 0.0
        %1505 = vmatpush1.msra.mxu0 0.0
        %1506 = vmatprep.subr.mxu0 0.0
        %1507 = vmatpush1.msra.mxu0 0.0
        %1508 = vmatprep.subr.mxu0 0.0
        %1509 = vmatpush1.msra.mxu0 0.0
        %1510 = vmatprep.subr.mxu0 0.0
        %1511 = vmatpush1.msra.mxu0 0.0
        %1512 = vmatprep.subr.mxu0 0.0
        %1513 = vmatpush1.msra.mxu0 0.0
        %1514 = vmatprep.mubr.f32.mxu0 0.0
        %v1515 = vand.u32 %v444, 4294901760
        %1516 = vmatmul.mubr.f32.gmra.mrb[0].mxu0 %v1515
        %v1517 = vpop.f32.mrb[0].mxu0
        %v1518 = vadd.f32 %v1435, %v1517
        %v1519 = vpop.f32.mrb[0].mxu0
        %v1520 = vadd.f32 %v1437, %v1519
        %1521 = vmatprep.mubr.f32.mxu0 0.0
        %v1522 = vand.u32 %v447, 4294901760
        %1523 = vmatmul.mubr.f32.gmra.mrb[0].mxu0 %v1522
        %v1524 = vpop.f32.mrb[0].mxu0
        %v1525 = vadd.f32 %v1442, %v1524
        %v1526 = vpop.f32.mrb[0].mxu0
        %v1527 = vadd.f32 %v1444, %v1526
        %1528 = vdwg.mxu0
        %v1529 = vmax.f32 %v978, 0.0
        %v1530 = vmax.f32 %v980, 0.0
        %v1531 = vmax.f32 %v1518, 0.0
        %v1532 = vmax.f32 %v1520, 0.0
        %v1533 = vmax.f32 %v985, 0.0
        %v1534 = vmax.f32 %v987, 0.0
        %v1535 = vmax.f32 %v1525, 0.0
        %v1536 = vmax.f32 %v1527, 0.0
        %1538 = vset.pattern.permute.xlu0 0
        %1539 = vperm.xlu0 %1538, %v289
        %v1540 = vpop.permute.xlu0 %1539
        %v1543 = vsel %vm442, %v288, 0
        %v1545 = vand.u32 %v1530, 4294901760
        %1546 = vmatprep.subr.mxu0 %v1545
        %v1547 = vand.u32 %v1529, 4294901760
        %1548 = vmatpush1.msra.mxu0 %v1547
        %v1549 = vand.u32 %v1534, 4294901760
        %1550 = vmatprep.subr.mxu0 %v1549
        %v1551 = vand.u32 %v1533, 4294901760
        %1552 = vmatpush1.msra.mxu0 %v1551
        %1553 = vmatprep.subr.mxu0 0.0
        %1554 = vmatpush1.msra.mxu0 0.0
        %1555 = vmatprep.subr.mxu0 0.0
        %1556 = vmatpush1.msra.mxu0 0.0
        %1557 = vmatprep.subr.mxu0 0.0
        %1558 = vmatpush1.msra.mxu0 0.0
        %1559 = vmatprep.subr.mxu0 0.0
        %1560 = vmatpush1.msra.mxu0 0.0
        %1561 = vmatprep.subr.mxu0 0.0
        %1562 = vmatpush1.msra.mxu0 0.0
        %1563 = vmatprep.subr.mxu0 0.0
        %1564 = vmatpush1.msra.mxu0 0.0
        %1565 = vmatprep.subr.mxu0 0.0
        %1566 = vmatpush1.msra.mxu0 0.0
        %1567 = vmatprep.subr.mxu0 0.0
        %1568 = vmatpush1.msra.mxu0 0.0
        %1569 = vmatprep.subr.mxu0 0.0
        %1570 = vmatpush1.msra.mxu0 0.0
        %1571 = vmatprep.subr.mxu0 0.0
        %1572 = vmatpush1.msra.mxu0 0.0
        %1573 = vmatprep.subr.mxu0 0.0
        %1574 = vmatpush1.msra.mxu0 0.0
        %1575 = vmatprep.subr.mxu0 0.0
        %1576 = vmatpush1.msra.mxu0 0.0
        %1577 = vmatprep.subr.mxu0 0.0
        %1578 = vmatpush1.msra.mxu0 0.0
        %1579 = vmatprep.subr.mxu0 0.0
        %1580 = vmatpush1.msra.mxu0 0.0
        %1581 = vmatprep.subr.mxu0 0.0
        %1582 = vmatpush1.msra.mxu0 0.0
        %1583 = vmatprep.subr.mxu0 0.0
        %1584 = vmatpush1.msra.mxu0 0.0
        %1585 = vmatprep.subr.mxu0 0.0
        %1586 = vmatpush1.msra.mxu0 0.0
        %1587 = vmatprep.subr.mxu0 0.0
        %1588 = vmatpush1.msra.mxu0 0.0
        %1589 = vmatprep.subr.mxu0 0.0
        %1590 = vmatpush1.msra.mxu0 0.0
        %1591 = vmatprep.subr.mxu0 0.0
        %1592 = vmatpush1.msra.mxu0 0.0
        %1593 = vmatprep.subr.mxu0 0.0
        %1594 = vmatpush1.msra.mxu0 0.0
        %1595 = vmatprep.subr.mxu0 0.0
        %1596 = vmatpush1.msra.mxu0 0.0
        %1597 = vmatprep.subr.mxu0 0.0
        %1598 = vmatpush1.msra.mxu0 0.0
        %1599 = vmatprep.subr.mxu0 0.0
        %1600 = vmatpush1.msra.mxu0 0.0
        %1601 = vmatprep.subr.mxu0 0.0
        %1602 = vmatpush1.msra.mxu0 0.0
        %1603 = vmatprep.subr.mxu0 0.0
        %1604 = vmatpush1.msra.mxu0 0.0
        %1605 = vmatprep.subr.mxu0 0.0
        %1606 = vmatpush1.msra.mxu0 0.0
        %1607 = vmatprep.subr.mxu0 0.0
        %1608 = vmatpush1.msra.mxu0 0.0
        %1609 = vmatprep.subr.mxu0 0.0
        %1610 = vmatpush1.msra.mxu0 0.0
        %1611 = vmatprep.subr.mxu0 0.0
        %1612 = vmatpush1.msra.mxu0 0.0
        %1613 = vmatprep.mubr.f32.mxu0 0.0
        %v1614 = vand.u32 %v1543, 4294901760
        %v1615 = vsub.f32 %v1543, %v1614
        %v1616 = vand.u32 %v1615, 4294901760
        %v1617 = vsub.f32 %v1615, %v1616
        %v1618 = vand.u32 %v1617, 4294901760
        %1619 = vmatmul.mubr.f32.gmra.mrb[0].mxu0 %v1618
        %v1620 = vpop.f32.mrb[0].mxu0
        %v1621 = vadd.f32 %v1540, %v1620
        %v1622 = vpop.f32.mrb[0].mxu0
        %v1623 = vadd.f32 %v1540, %v1622
        %1624 = vdwg.mxu0
        %v1625 = vand.u32 %v1530, 4294901760
        %v1626 = vsub.f32 %v1530, %v1625
        %v1627 = vand.u32 %v1626, 4294901760
        %v1628 = vsub.f32 %v1626, %v1627
        %v1629 = vand.u32 %v1628, 4294901760
        %1630 = vmatprep.subr.mxu0 %v1629
        %v1631 = vand.u32 %v1529, 4294901760
        %v1632 = vsub.f32 %v1529, %v1631
        %v1633 = vand.u32 %v1632, 4294901760
        %v1634 = vsub.f32 %v1632, %v1633
        %v1635 = vand.u32 %v1634, 4294901760
        %1636 = vmatpush1.msra.mxu0 %v1635
        %v1637 = vand.u32 %v1534, 4294901760
        %v1638 = vsub.f32 %v1534, %v1637
        %v1639 = vand.u32 %v1638, 4294901760
        %v1640 = vsub.f32 %v1638, %v1639
        %v1641 = vand.u32 %v1640, 4294901760
        %1642 = vmatprep.subr.mxu0 %v1641
        %v1643 = vand.u32 %v1533, 4294901760
        %v1644 = vsub.f32 %v1533, %v1643
        %v1645 = vand.u32 %v1644, 4294901760
        %v1646 = vsub.f32 %v1644, %v1645
        %v1647 = vand.u32 %v1646, 4294901760
        %1648 = vmatpush1.msra.mxu0 %v1647
        %1649 = vmatprep.subr.mxu0 0.0
        %1650 = vmatpush1.msra.mxu0 0.0
        %1651 = vmatprep.subr.mxu0 0.0
        %1652 = vmatpush1.msra.mxu0 0.0
        %1653 = vmatprep.subr.mxu0 0.0
        %1654 = vmatpush1.msra.mxu0 0.0
        %1655 = vmatprep.subr.mxu0 0.0
        %1656 = vmatpush1.msra.mxu0 0.0
        %1657 = vmatprep.subr.mxu0 0.0
        %1658 = vmatpush1.msra.mxu0 0.0
        %1659 = vmatprep.subr.mxu0 0.0
        %1660 = vmatpush1.msra.mxu0 0.0
        %1661 = vmatprep.subr.mxu0 0.0
        %1662 = vmatpush1.msra.mxu0 0.0
        %1663 = vmatprep.subr.mxu0 0.0
        %1664 = vmatpush1.msra.mxu0 0.0
        %1665 = vmatprep.subr.mxu0 0.0
        %1666 = vmatpush1.msra.mxu0 0.0
        %1667 = vmatprep.subr.mxu0 0.0
        %1668 = vmatpush1.msra.mxu0 0.0
        %1669 = vmatprep.subr.mxu0 0.0
        %1670 = vmatpush1.msra.mxu0 0.0
        %1671 = vmatprep.subr.mxu0 0.0
        %1672 = vmatpush1.msra.mxu0 0.0
        %1673 = vmatprep.subr.mxu0 0.0
        %1674 = vmatpush1.msra.mxu0 0.0
        %1675 = vmatprep.subr.mxu0 0.0
        %1676 = vmatpush1.msra.mxu0 0.0
        %1677 = vmatprep.subr.mxu0 0.0
        %1678 = vmatpush1.msra.mxu0 0.0
        %1679 = vmatprep.subr.mxu0 0.0
        %1680 = vmatpush1.msra.mxu0 0.0
        %1681 = vmatprep.subr.mxu0 0.0
        %1682 = vmatpush1.msra.mxu0 0.0
        %1683 = vmatprep.subr.mxu0 0.0
        %1684 = vmatpush1.msra.mxu0 0.0
        %1685 = vmatprep.subr.mxu0 0.0
        %1686 = vmatpush1.msra.mxu0 0.0
        %1687 = vmatprep.subr.mxu0 0.0
        %1688 = vmatpush1.msra.mxu0 0.0
        %1689 = vmatprep.subr.mxu0 0.0
        %1690 = vmatpush1.msra.mxu0 0.0
        %1691 = vmatprep.subr.mxu0 0.0
        %1692 = vmatpush1.msra.mxu0 0.0
        %1693 = vmatprep.subr.mxu0 0.0
        %1694 = vmatpush1.msra.mxu0 0.0
        %1695 = vmatprep.subr.mxu0 0.0
        %1696 = vmatpush1.msra.mxu0 0.0
        %1697 = vmatprep.subr.mxu0 0.0
        %1698 = vmatpush1.msra.mxu0 0.0
        %1699 = vmatprep.subr.mxu0 0.0
        %1700 = vmatpush1.msra.mxu0 0.0
        %1701 = vmatprep.subr.mxu0 0.0
        %1702 = vmatpush1.msra.mxu0 0.0
        %1703 = vmatprep.subr.mxu0 0.0
        %1704 = vmatpush1.msra.mxu0 0.0
        %1705 = vmatprep.subr.mxu0 0.0
        %1706 = vmatpush1.msra.mxu0 0.0
        %1707 = vmatprep.subr.mxu0 0.0
        %1708 = vmatpush1.msra.mxu0 0.0
        %1709 = vmatprep.mubr.f32.mxu0 0.0
        %v1710 = vand.u32 %v1543, 4294901760
        %1711 = vmatmul.mubr.f32.gmra.mrb[0].mxu0 %v1710
        %v1712 = vpop.f32.mrb[0].mxu0
        %v1713 = vadd.f32 %v1621, %v1712
        %v1714 = vpop.f32.mrb[0].mxu0
        %v1715 = vadd.f32 %v1623, %v1714
        %1716 = vdwg.mxu0
        %v1717 = vand.u32 %v1530, 4294901760
        %v1718 = vsub.f32 %v1530, %v1717
        %1719 = vmatprep.subr.mxu0 %v1718
        %v1720 = vand.u32 %v1529, 4294901760
        %v1721 = vsub.f32 %v1529, %v1720
        %1722 = vmatpush1.msra.mxu0 %v1721
        %v1723 = vand.u32 %v1534, 4294901760
        %v1724 = vsub.f32 %v1534, %v1723
        %1725 = vmatprep.subr.mxu0 %v1724
        %v1726 = vand.u32 %v1533, 4294901760
        %v1727 = vsub.f32 %v1533, %v1726
        %1728 = vmatpush1.msra.mxu0 %v1727
        %1729 = vmatprep.subr.mxu0 0.0
        %1730 = vmatpush1.msra.mxu0 0.0
        %1731 = vmatprep.subr.mxu0 0.0
        %1732 = vmatpush1.msra.mxu0 0.0
        %1733 = vmatprep.subr.mxu0 0.0
        %1734 = vmatpush1.msra.mxu0 0.0
        %1735 = vmatprep.subr.mxu0 0.0
        %1736 = vmatpush1.msra.mxu0 0.0
        %1737 = vmatprep.subr.mxu0 0.0
        %1738 = vmatpush1.msra.mxu0 0.0
        %1739 = vmatprep.subr.mxu0 0.0
        %1740 = vmatpush1.msra.mxu0 0.0
        %1741 = vmatprep.subr.mxu0 0.0
        %1742 = vmatpush1.msra.mxu0 0.0
        %1743 = vmatprep.subr.mxu0 0.0
        %1744 = vmatpush1.msra.mxu0 0.0
        %1745 = vmatprep.subr.mxu0 0.0
        %1746 = vmatpush1.msra.mxu0 0.0
        %1747 = vmatprep.subr.mxu0 0.0
        %1748 = vmatpush1.msra.mxu0 0.0
        %1749 = vmatprep.subr.mxu0 0.0
        %1750 = vmatpush1.msra.mxu0 0.0
        %1751 = vmatprep.subr.mxu0 0.0
        %1752 = vmatpush1.msra.mxu0 0.0
        %1753 = vmatprep.subr.mxu0 0.0
        %1754 = vmatpush1.msra.mxu0 0.0
        %1755 = vmatprep.subr.mxu0 0.0
        %1756 = vmatpush1.msra.mxu0 0.0
        %1757 = vmatprep.subr.mxu0 0.0
        %1758 = vmatpush1.msra.mxu0 0.0
        %1759 = vmatprep.subr.mxu0 0.0
        %1760 = vmatpush1.msra.mxu0 0.0
        %1761 = vmatprep.subr.mxu0 0.0
        %1762 = vmatpush1.msra.mxu0 0.0
        %1763 = vmatprep.subr.mxu0 0.0
        %1764 = vmatpush1.msra.mxu0 0.0
        %1765 = vmatprep.subr.mxu0 0.0
        %1766 = vmatpush1.msra.mxu0 0.0
        %1767 = vmatprep.subr.mxu0 0.0
        %1768 = vmatpush1.msra.mxu0 0.0
        %1769 = vmatprep.subr.mxu0 0.0
        %1770 = vmatpush1.msra.mxu0 0.0
        %1771 = vmatprep.subr.mxu0 0.0
        %1772 = vmatpush1.msra.mxu0 0.0
        %1773 = vmatprep.subr.mxu0 0.0
        %1774 = vmatpush1.msra.mxu0 0.0
        %1775 = vmatprep.subr.mxu0 0.0
        %1776 = vmatpush1.msra.mxu0 0.0
        %1777 = vmatprep.subr.mxu0 0.0
        %1778 = vmatpush1.msra.mxu0 0.0
        %1779 = vmatprep.subr.mxu0 0.0
        %1780 = vmatpush1.msra.mxu0 0.0
        %1781 = vmatprep.subr.mxu0 0.0
        %1782 = vmatpush1.msra.mxu0 0.0
        %1783 = vmatprep.subr.mxu0 0.0
        %1784 = vmatpush1.msra.mxu0 0.0
        %1785 = vmatprep.subr.mxu0 0.0
        %1786 = vmatpush1.msra.mxu0 0.0
        %1787 = vmatprep.subr.mxu0 0.0
        %1788 = vmatpush1.msra.mxu0 0.0
        %1789 = vmatprep.mubr.f32.mxu0 0.0
        %v1790 = vand.u32 %v1543, 4294901760
        %v1791 = vsub.f32 %v1543, %v1790
        %1792 = vmatmul.mubr.f32.gmra.mrb[0].mxu0 %v1791
        %v1793 = vpop.f32.mrb[0].mxu0
        %v1794 = vadd.f32 %v1713, %v1793
        %v1795 = vpop.f32.mrb[0].mxu0
        %v1796 = vadd.f32 %v1715, %v1795
        %1797 = vdwg.mxu0
        %v1798 = vand.u32 %v1530, 4294901760
        %1799 = vmatprep.subr.mxu0 %v1798
        %v1800 = vand.u32 %v1529, 4294901760
        %1801 = vmatpush1.msra.mxu0 %v1800
        %v1802 = vand.u32 %v1534, 4294901760
        %1803 = vmatprep.subr.mxu0 %v1802
        %v1804 = vand.u32 %v1533, 4294901760
        %1805 = vmatpush1.msra.mxu0 %v1804
        %1806 = vmatprep.subr.mxu0 0.0
        %1807 = vmatpush1.msra.mxu0 0.0
        %1808 = vmatprep.subr.mxu0 0.0
        %1809 = vmatpush1.msra.mxu0 0.0
        %1810 = vmatprep.subr.mxu0 0.0
        %1811 = vmatpush1.msra.mxu0 0.0
        %1812 = vmatprep.subr.mxu0 0.0
        %1813 = vmatpush1.msra.mxu0 0.0
        %1814 = vmatprep.subr.mxu0 0.0
        %1815 = vmatpush1.msra.mxu0 0.0
        %1816 = vmatprep.subr.mxu0 0.0
        %1817 = vmatpush1.msra.mxu0 0.0
        %1818 = vmatprep.subr.mxu0 0.0
        %1819 = vmatpush1.msra.mxu0 0.0
        %1820 = vmatprep.subr.mxu0 0.0
        %1821 = vmatpush1.msra.mxu0 0.0
        %1822 = vmatprep.subr.mxu0 0.0
        %1823 = vmatpush1.msra.mxu0 0.0
        %1824 = vmatprep.subr.mxu0 0.0
        %1825 = vmatpush1.msra.mxu0 0.0
        %1826 = vmatprep.subr.mxu0 0.0
        %1827 = vmatpush1.msra.mxu0 0.0
        %1828 = vmatprep.subr.mxu0 0.0
        %1829 = vmatpush1.msra.mxu0 0.0
        %1830 = vmatprep.subr.mxu0 0.0
        %1831 = vmatpush1.msra.mxu0 0.0
        %1832 = vmatprep.subr.mxu0 0.0
        %1833 = vmatpush1.msra.mxu0 0.0
        %1834 = vmatprep.subr.mxu0 0.0
        %1835 = vmatpush1.msra.mxu0 0.0
        %1836 = vmatprep.subr.mxu0 0.0
        %1837 = vmatpush1.msra.mxu0 0.0
        %1838 = vmatprep.subr.mxu0 0.0
        %1839 = vmatpush1.msra.mxu0 0.0
        %1840 = vmatprep.subr.mxu0 0.0
        %1841 = vmatpush1.msra.mxu0 0.0
        %1842 = vmatprep.subr.mxu0 0.0
        %1843 = vmatpush1.msra.mxu0 0.0
        %1844 = vmatprep.subr.mxu0 0.0
        %1845 = vmatpush1.msra.mxu0 0.0
        %1846 = vmatprep.subr.mxu0 0.0
        %1847 = vmatpush1.msra.mxu0 0.0
        %1848 = vmatprep.subr.mxu0 0.0
        %1849 = vmatpush1.msra.mxu0 0.0
        %1850 = vmatprep.subr.mxu0 0.0
        %1851 = vmatpush1.msra.mxu0 0.0
        %1852 = vmatprep.subr.mxu0 0.0
        %1853 = vmatpush1.msra.mxu0 0.0
        %1854 = vmatprep.subr.mxu0 0.0
        %1855 = vmatpush1.msra.mxu0 0.0
        %1856 = vmatprep.subr.mxu0 0.0
        %1857 = vmatpush1.msra.mxu0 0.0
        %1858 = vmatprep.subr.mxu0 0.0
        %1859 = vmatpush1.msra.mxu0 0.0
        %1860 = vmatprep.subr.mxu0 0.0
        %1861 = vmatpush1.msra.mxu0 0.0
        %1862 = vmatprep.subr.mxu0 0.0
        %1863 = vmatpush1.msra.mxu0 0.0
        %1864 = vmatprep.subr.mxu0 0.0
        %1865 = vmatpush1.msra.mxu0 0.0
        %1866 = vmatprep.mubr.f32.mxu0 0.0
        %v1867 = vand.u32 %v1543, 4294901760
        %v1868 = vsub.f32 %v1543, %v1867
        %v1869 = vand.u32 %v1868, 4294901760
        %1870 = vmatmul.mubr.f32.gmra.mrb[0].mxu0 %v1869
        %v1871 = vpop.f32.mrb[0].mxu0
        %v1872 = vadd.f32 %v1794, %v1871
        %v1873 = vpop.f32.mrb[0].mxu0
        %v1874 = vadd.f32 %v1796, %v1873
        %1875 = vdwg.mxu0
        %v1876 = vand.u32 %v1530, 4294901760
        %v1877 = vsub.f32 %v1530, %v1876
        %v1878 = vand.u32 %v1877, 4294901760
        %1879 = vmatprep.subr.mxu0 %v1878
        %v1880 = vand.u32 %v1529, 4294901760
        %v1881 = vsub.f32 %v1529, %v1880
        %v1882 = vand.u32 %v1881, 4294901760
        %1883 = vmatpush1.msra.mxu0 %v1882
        %v1884 = vand.u32 %v1534, 4294901760
        %v1885 = vsub.f32 %v1534, %v1884
        %v1886 = vand.u32 %v1885, 4294901760
        %1887 = vmatprep.subr.mxu0 %v1886
        %v1888 = vand.u32 %v1533, 4294901760
        %v1889 = vsub.f32 %v1533, %v1888
        %v1890 = vand.u32 %v1889, 4294901760
        %1891 = vmatpush1.msra.mxu0 %v1890
        %1892 = vmatprep.subr.mxu0 0.0
        %1893 = vmatpush1.msra.mxu0 0.0
        %1894 = vmatprep.subr.mxu0 0.0
        %1895 = vmatpush1.msra.mxu0 0.0
        %1896 = vmatprep.subr.mxu0 0.0
        %1897 = vmatpush1.msra.mxu0 0.0
        %1898 = vmatprep.subr.mxu0 0.0
        %1899 = vmatpush1.msra.mxu0 0.0
        %1900 = vmatprep.subr.mxu0 0.0
        %1901 = vmatpush1.msra.mxu0 0.0
        %1902 = vmatprep.subr.mxu0 0.0
        %1903 = vmatpush1.msra.mxu0 0.0
        %1904 = vmatprep.subr.mxu0 0.0
        %1905 = vmatpush1.msra.mxu0 0.0
        %1906 = vmatprep.subr.mxu0 0.0
        %1907 = vmatpush1.msra.mxu0 0.0
        %1908 = vmatprep.subr.mxu0 0.0
        %1909 = vmatpush1.msra.mxu0 0.0
        %1910 = vmatprep.subr.mxu0 0.0
        %1911 = vmatpush1.msra.mxu0 0.0
        %1912 = vmatprep.subr.mxu0 0.0
        %1913 = vmatpush1.msra.mxu0 0.0
        %1914 = vmatprep.subr.mxu0 0.0
        %1915 = vmatpush1.msra.mxu0 0.0
        %1916 = vmatprep.subr.mxu0 0.0
        %1917 = vmatpush1.msra.mxu0 0.0
        %1918 = vmatprep.subr.mxu0 0.0
        %1919 = vmatpush1.msra.mxu0 0.0
        %1920 = vmatprep.subr.mxu0 0.0
        %1921 = vmatpush1.msra.mxu0 0.0
        %1922 = vmatprep.subr.mxu0 0.0
        %1923 = vmatpush1.msra.mxu0 0.0
        %1924 = vmatprep.subr.mxu0 0.0
        %1925 = vmatpush1.msra.mxu0 0.0
        %1926 = vmatprep.subr.mxu0 0.0
        %1927 = vmatpush1.msra.mxu0 0.0
        %1928 = vmatprep.subr.mxu0 0.0
        %1929 = vmatpush1.msra.mxu0 0.0
        %1930 = vmatprep.subr.mxu0 0.0
        %1931 = vmatpush1.msra.mxu0 0.0
        %1932 = vmatprep.subr.mxu0 0.0
        %1933 = vmatpush1.msra.mxu0 0.0
        %1934 = vmatprep.subr.mxu0 0.0
        %1935 = vmatpush1.msra.mxu0 0.0
        %1936 = vmatprep.subr.mxu0 0.0
        %1937 = vmatpush1.msra.mxu0 0.0
        %1938 = vmatprep.subr.mxu0 0.0
        %1939 = vmatpush1.msra.mxu0 0.0
        %1940 = vmatprep.subr.mxu0 0.0
        %1941 = vmatpush1.msra.mxu0 0.0
        %1942 = vmatprep.subr.mxu0 0.0
        %1943 = vmatpush1.msra.mxu0 0.0
        %1944 = vmatprep.subr.mxu0 0.0
        %1945 = vmatpush1.msra.mxu0 0.0
        %1946 = vmatprep.subr.mxu0 0.0
        %1947 = vmatpush1.msra.mxu0 0.0
        %1948 = vmatprep.subr.mxu0 0.0
        %1949 = vmatpush1.msra.mxu0 0.0
        %1950 = vmatprep.subr.mxu0 0.0
        %1951 = vmatpush1.msra.mxu0 0.0
        %1952 = vmatprep.mubr.f32.mxu0 0.0
        %v1953 = vand.u32 %v1543, 4294901760
        %1954 = vmatmul.mubr.f32.gmra.mrb[0].mxu0 %v1953
        %v1955 = vpop.f32.mrb[0].mxu0
        %v1956 = vadd.f32 %v1872, %v1955
        %v1957 = vpop.f32.mrb[0].mxu0
        %v1958 = vadd.f32 %v1874, %v1957
        %1959 = vdwg.mxu0
        %v1960 = vand.u32 %v1530, 4294901760
        %1961 = vmatprep.subr.mxu0 %v1960
        %v1962 = vand.u32 %v1529, 4294901760
        %1963 = vmatpush1.msra.mxu0 %v1962
        %v1964 = vand.u32 %v1534, 4294901760
        %1965 = vmatprep.subr.mxu0 %v1964
        %v1966 = vand.u32 %v1533, 4294901760
        %1967 = vmatpush1.msra.mxu0 %v1966
        %1968 = vmatprep.subr.mxu0 0.0
        %1969 = vmatpush1.msra.mxu0 0.0
        %1970 = vmatprep.subr.mxu0 0.0
        %1971 = vmatpush1.msra.mxu0 0.0
        %1972 = vmatprep.subr.mxu0 0.0
        %1973 = vmatpush1.msra.mxu0 0.0
        %1974 = vmatprep.subr.mxu0 0.0
        %1975 = vmatpush1.msra.mxu0 0.0
        %1976 = vmatprep.subr.mxu0 0.0
        %1977 = vmatpush1.msra.mxu0 0.0
        %1978 = vmatprep.subr.mxu0 0.0
        %1979 = vmatpush1.msra.mxu0 0.0
        %1980 = vmatprep.subr.mxu0 0.0
        %1981 = vmatpush1.msra.mxu0 0.0
        %1982 = vmatprep.subr.mxu0 0.0
        %1983 = vmatpush1.msra.mxu0 0.0
        %1984 = vmatprep.subr.mxu0 0.0
        %1985 = vmatpush1.msra.mxu0 0.0
        %1986 = vmatprep.subr.mxu0 0.0
        %1987 = vmatpush1.msra.mxu0 0.0
        %1988 = vmatprep.subr.mxu0 0.0
        %1989 = vmatpush1.msra.mxu0 0.0
        %1990 = vmatprep.subr.mxu0 0.0
        %1991 = vmatpush1.msra.mxu0 0.0
        %1992 = vmatprep.subr.mxu0 0.0
        %1993 = vmatpush1.msra.mxu0 0.0
        %1994 = vmatprep.subr.mxu0 0.0
        %1995 = vmatpush1.msra.mxu0 0.0
        %1996 = vmatprep.subr.mxu0 0.0
        %1997 = vmatpush1.msra.mxu0 0.0
        %1998 = vmatprep.subr.mxu0 0.0
        %1999 = vmatpush1.msra.mxu0 0.0
        %2000 = vmatprep.subr.mxu0 0.0
        %2001 = vmatpush1.msra.mxu0 0.0
        %2002 = vmatprep.subr.mxu0 0.0
        %2003 = vmatpush1.msra.mxu0 0.0
        %2004 = vmatprep.subr.mxu0 0.0
        %2005 = vmatpush1.msra.mxu0 0.0
        %2006 = vmatprep.subr.mxu0 0.0
        %2007 = vmatpush1.msra.mxu0 0.0
        %2008 = vmatprep.subr.mxu0 0.0
        %2009 = vmatpush1.msra.mxu0 0.0
        %2010 = vmatprep.subr.mxu0 0.0
        %2011 = vmatpush1.msra.mxu0 0.0
        %2012 = vmatprep.subr.mxu0 0.0
        %2013 = vmatpush1.msra.mxu0 0.0
        %2014 = vmatprep.subr.mxu0 0.0
        %2015 = vmatpush1.msra.mxu0 0.0
        %2016 = vmatprep.subr.mxu0 0.0
        %2017 = vmatpush1.msra.mxu0 0.0
        %2018 = vmatprep.subr.mxu0 0.0
        %2019 = vmatpush1.msra.mxu0 0.0
        %2020 = vmatprep.subr.mxu0 0.0
        %2021 = vmatpush1.msra.mxu0 0.0
        %2022 = vmatprep.subr.mxu0 0.0
        %2023 = vmatpush1.msra.mxu0 0.0
        %2024 = vmatprep.subr.mxu0 0.0
        %2025 = vmatpush1.msra.mxu0 0.0
        %2026 = vmatprep.subr.mxu0 0.0
        %2027 = vmatpush1.msra.mxu0 0.0
        %2028 = vmatprep.mubr.f32.mxu0 0.0
        %v2029 = vand.u32 %v1543, 4294901760
        %2030 = vmatmul.mubr.f32.gmra.mrb[0].mxu0 %v2029
        %v2031 = vpop.f32.mrb[0].mxu0
        %v2032 = vadd.f32 %v1956, %v2031
        %v2033 = vpop.f32.mrb[0].mxu0
        %v2034 = vadd.f32 %v1958, %v2033
        %2035 = vdwg.mxu0
        %v2036 = vand.u32 %v1532, 4294901760
        %2037 = vmatprep.subr.mxu0 %v2036
        %v2038 = vand.u32 %v1531, 4294901760
        %2039 = vmatpush1.msra.mxu0 %v2038
        %v2040 = vand.u32 %v1536, 4294901760
        %2041 = vmatprep.subr.mxu0 %v2040
        %v2042 = vand.u32 %v1535, 4294901760
        %2043 = vmatpush1.msra.mxu0 %v2042
        %2044 = vmatprep.subr.mxu0 0.0
        %2045 = vmatpush1.msra.mxu0 0.0
        %2046 = vmatprep.subr.mxu0 0.0
        %2047 = vmatpush1.msra.mxu0 0.0
        %2048 = vmatprep.subr.mxu0 0.0
        %2049 = vmatpush1.msra.mxu0 0.0
        %2050 = vmatprep.subr.mxu0 0.0
        %2051 = vmatpush1.msra.mxu0 0.0
        %2052 = vmatprep.subr.mxu0 0.0
        %2053 = vmatpush1.msra.mxu0 0.0
        %2054 = vmatprep.subr.mxu0 0.0
        %2055 = vmatpush1.msra.mxu0 0.0
        %2056 = vmatprep.subr.mxu0 0.0
        %2057 = vmatpush1.msra.mxu0 0.0
        %2058 = vmatprep.subr.mxu0 0.0
        %2059 = vmatpush1.msra.mxu0 0.0
        %2060 = vmatprep.subr.mxu0 0.0
        %2061 = vmatpush1.msra.mxu0 0.0
        %2062 = vmatprep.subr.mxu0 0.0
        %2063 = vmatpush1.msra.mxu0 0.0
        %2064 = vmatprep.subr.mxu0 0.0
        %2065 = vmatpush1.msra.mxu0 0.0
        %2066 = vmatprep.subr.mxu0 0.0
        %2067 = vmatpush1.msra.mxu0 0.0
        %2068 = vmatprep.subr.mxu0 0.0
        %2069 = vmatpush1.msra.mxu0 0.0
        %2070 = vmatprep.subr.mxu0 0.0
        %2071 = vmatpush1.msra.mxu0 0.0
        %2072 = vmatprep.subr.mxu0 0.0
        %2073 = vmatpush1.msra.mxu0 0.0
        %2074 = vmatprep.subr.mxu0 0.0
        %2075 = vmatpush1.msra.mxu0 0.0
        %2076 = vmatprep.subr.mxu0 0.0
        %2077 = vmatpush1.msra.mxu0 0.0
        %2078 = vmatprep.subr.mxu0 0.0
        %2079 = vmatpush1.msra.mxu0 0.0
        %2080 = vmatprep.subr.mxu0 0.0
        %2081 = vmatpush1.msra.mxu0 0.0
        %2082 = vmatprep.subr.mxu0 0.0
        %2083 = vmatpush1.msra.mxu0 0.0
        %2084 = vmatprep.subr.mxu0 0.0
        %2085 = vmatpush1.msra.mxu0 0.0
        %2086 = vmatprep.subr.mxu0 0.0
        %2087 = vmatpush1.msra.mxu0 0.0
        %2088 = vmatprep.subr.mxu0 0.0
        %2089 = vmatpush1.msra.mxu0 0.0
        %2090 = vmatprep.subr.mxu0 0.0
        %2091 = vmatpush1.msra.mxu0 0.0
        %2092 = vmatprep.subr.mxu0 0.0
        %2093 = vmatpush1.msra.mxu0 0.0
        %2094 = vmatprep.subr.mxu0 0.0
        %2095 = vmatpush1.msra.mxu0 0.0
        %2096 = vmatprep.subr.mxu0 0.0
        %2097 = vmatpush1.msra.mxu0 0.0
        %2098 = vmatprep.subr.mxu0 0.0
        %2099 = vmatpush1.msra.mxu0 0.0
        %2100 = vmatprep.subr.mxu0 0.0
        %2101 = vmatpush1.msra.mxu0 0.0
        %2102 = vmatprep.subr.mxu0 0.0
        %2103 = vmatpush1.msra.mxu0 0.0
        %2104 = vmatprep.mubr.f32.mxu0 0.0
        %v2105 = vand.u32 %v1543, 4294901760
        %v2106 = vsub.f32 %v1543, %v2105
        %v2107 = vand.u32 %v2106, 4294901760
        %v2108 = vsub.f32 %v2106, %v2107
        %v2109 = vand.u32 %v2108, 4294901760
        %2110 = vmatmul.mubr.f32.gmra.mrb[0].mxu0 %v2109
        %v2111 = vpop.f32.mrb[0].mxu0
        %v2112 = vadd.f32 %v1540, %v2111
        %v2113 = vpop.f32.mrb[0].mxu0
        %v2114 = vadd.f32 %v1540, %v2113
        %2115 = vdwg.mxu0
        %v2116 = vand.u32 %v1532, 4294901760
        %v2117 = vsub.f32 %v1532, %v2116
        %v2118 = vand.u32 %v2117, 4294901760
        %v2119 = vsub.f32 %v2117, %v2118
        %v2120 = vand.u32 %v2119, 4294901760
        %2121 = vmatprep.subr.mxu0 %v2120
        %v2122 = vand.u32 %v1531, 4294901760
        %v2123 = vsub.f32 %v1531, %v2122
        %v2124 = vand.u32 %v2123, 4294901760
        %v2125 = vsub.f32 %v2123, %v2124
        %v2126 = vand.u32 %v2125, 4294901760
        %2127 = vmatpush1.msra.mxu0 %v2126
        %v2128 = vand.u32 %v1536, 4294901760
        %v2129 = vsub.f32 %v1536, %v2128
        %v2130 = vand.u32 %v2129, 4294901760
        %v2131 = vsub.f32 %v2129, %v2130
        %v2132 = vand.u32 %v2131, 4294901760
        %2133 = vmatprep.subr.mxu0 %v2132
        %v2134 = vand.u32 %v1535, 4294901760
        %v2135 = vsub.f32 %v1535, %v2134
        %v2136 = vand.u32 %v2135, 4294901760
        %v2137 = vsub.f32 %v2135, %v2136
        %v2138 = vand.u32 %v2137, 4294901760
        %2139 = vmatpush1.msra.mxu0 %v2138
        %2140 = vmatprep.subr.mxu0 0.0
        %2141 = vmatpush1.msra.mxu0 0.0
        %2142 = vmatprep.subr.mxu0 0.0
        %2143 = vmatpush1.msra.mxu0 0.0
        %2144 = vmatprep.subr.mxu0 0.0
        %2145 = vmatpush1.msra.mxu0 0.0
        %2146 = vmatprep.subr.mxu0 0.0
        %2147 = vmatpush1.msra.mxu0 0.0
        %2148 = vmatprep.subr.mxu0 0.0
        %2149 = vmatpush1.msra.mxu0 0.0
        %2150 = vmatprep.subr.mxu0 0.0
        %2151 = vmatpush1.msra.mxu0 0.0
        %2152 = vmatprep.subr.mxu0 0.0
        %2153 = vmatpush1.msra.mxu0 0.0
        %2154 = vmatprep.subr.mxu0 0.0
        %2155 = vmatpush1.msra.mxu0 0.0
        %2156 = vmatprep.subr.mxu0 0.0
        %2157 = vmatpush1.msra.mxu0 0.0
        %2158 = vmatprep.subr.mxu0 0.0
        %2159 = vmatpush1.msra.mxu0 0.0
        %2160 = vmatprep.subr.mxu0 0.0
        %2161 = vmatpush1.msra.mxu0 0.0
        %2162 = vmatprep.subr.mxu0 0.0
        %2163 = vmatpush1.msra.mxu0 0.0
        %2164 = vmatprep.subr.mxu0 0.0
        %2165 = vmatpush1.msra.mxu0 0.0
        %2166 = vmatprep.subr.mxu0 0.0
        %2167 = vmatpush1.msra.mxu0 0.0
        %2168 = vmatprep.subr.mxu0 0.0
        %2169 = vmatpush1.msra.mxu0 0.0
        %2170 = vmatprep.subr.mxu0 0.0
        %2171 = vmatpush1.msra.mxu0 0.0
        %2172 = vmatprep.subr.mxu0 0.0
        %2173 = vmatpush1.msra.mxu0 0.0
        %2174 = vmatprep.subr.mxu0 0.0
        %2175 = vmatpush1.msra.mxu0 0.0
        %2176 = vmatprep.subr.mxu0 0.0
        %2177 = vmatpush1.msra.mxu0 0.0
        %2178 = vmatprep.subr.mxu0 0.0
        %2179 = vmatpush1.msra.mxu0 0.0
        %2180 = vmatprep.subr.mxu0 0.0
        %2181 = vmatpush1.msra.mxu0 0.0
        %2182 = vmatprep.subr.mxu0 0.0
        %2183 = vmatpush1.msra.mxu0 0.0
        %2184 = vmatprep.subr.mxu0 0.0
        %2185 = vmatpush1.msra.mxu0 0.0
        %2186 = vmatprep.subr.mxu0 0.0
        %2187 = vmatpush1.msra.mxu0 0.0
        %2188 = vmatprep.subr.mxu0 0.0
        %2189 = vmatpush1.msra.mxu0 0.0
        %2190 = vmatprep.subr.mxu0 0.0
        %2191 = vmatpush1.msra.mxu0 0.0
        %2192 = vmatprep.subr.mxu0 0.0
        %2193 = vmatpush1.msra.mxu0 0.0
        %2194 = vmatprep.subr.mxu0 0.0
        %2195 = vmatpush1.msra.mxu0 0.0
        %2196 = vmatprep.subr.mxu0 0.0
        %2197 = vmatpush1.msra.mxu0 0.0
        %2198 = vmatprep.subr.mxu0 0.0
        %2199 = vmatpush1.msra.mxu0 0.0
        %2200 = vmatprep.mubr.f32.mxu0 0.0
        %v2201 = vand.u32 %v1543, 4294901760
        %2202 = vmatmul.mubr.f32.gmra.mrb[0].mxu0 %v2201
        %v2203 = vpop.f32.mrb[0].mxu0
        %v2204 = vadd.f32 %v2112, %v2203
        %v2205 = vpop.f32.mrb[0].mxu0
        %v2206 = vadd.f32 %v2114, %v2205
        %2207 = vdwg.mxu0
        %v2208 = vand.u32 %v1532, 4294901760
        %v2209 = vsub.f32 %v1532, %v2208
        %2210 = vmatprep.subr.mxu0 %v2209
        %v2211 = vand.u32 %v1531, 4294901760
        %v2212 = vsub.f32 %v1531, %v2211
        %2213 = vmatpush1.msra.mxu0 %v2212
        %v2214 = vand.u32 %v1536, 4294901760
        %v2215 = vsub.f32 %v1536, %v2214
        %2216 = vmatprep.subr.mxu0 %v2215
        %v2217 = vand.u32 %v1535, 4294901760
        %v2218 = vsub.f32 %v1535, %v2217
        %2219 = vmatpush1.msra.mxu0 %v2218
        %2220 = vmatprep.subr.mxu0 0.0
        %2221 = vmatpush1.msra.mxu0 0.0
        %2222 = vmatprep.subr.mxu0 0.0
        %2223 = vmatpush1.msra.mxu0 0.0
        %2224 = vmatprep.subr.mxu0 0.0
        %2225 = vmatpush1.msra.mxu0 0.0
        %2226 = vmatprep.subr.mxu0 0.0
        %2227 = vmatpush1.msra.mxu0 0.0
        %2228 = vmatprep.subr.mxu0 0.0
        %2229 = vmatpush1.msra.mxu0 0.0
        %2230 = vmatprep.subr.mxu0 0.0
        %2231 = vmatpush1.msra.mxu0 0.0
        %2232 = vmatprep.subr.mxu0 0.0
        %2233 = vmatpush1.msra.mxu0 0.0
        %2234 = vmatprep.subr.mxu0 0.0
        %2235 = vmatpush1.msra.mxu0 0.0
        %2236 = vmatprep.subr.mxu0 0.0
        %2237 = vmatpush1.msra.mxu0 0.0
        %2238 = vmatprep.subr.mxu0 0.0
        %2239 = vmatpush1.msra.mxu0 0.0
        %2240 = vmatprep.subr.mxu0 0.0
        %2241 = vmatpush1.msra.mxu0 0.0
        %2242 = vmatprep.subr.mxu0 0.0
        %2243 = vmatpush1.msra.mxu0 0.0
        %2244 = vmatprep.subr.mxu0 0.0
        %2245 = vmatpush1.msra.mxu0 0.0
        %2246 = vmatprep.subr.mxu0 0.0
        %2247 = vmatpush1.msra.mxu0 0.0
        %2248 = vmatprep.subr.mxu0 0.0
        %2249 = vmatpush1.msra.mxu0 0.0
        %2250 = vmatprep.subr.mxu0 0.0
        %2251 = vmatpush1.msra.mxu0 0.0
        %2252 = vmatprep.subr.mxu0 0.0
        %2253 = vmatpush1.msra.mxu0 0.0
        %2254 = vmatprep.subr.mxu0 0.0
        %2255 = vmatpush1.msra.mxu0 0.0
        %2256 = vmatprep.subr.mxu0 0.0
        %2257 = vmatpush1.msra.mxu0 0.0
        %2258 = vmatprep.subr.mxu0 0.0
        %2259 = vmatpush1.msra.mxu0 0.0
        %2260 = vmatprep.subr.mxu0 0.0
        %2261 = vmatpush1.msra.mxu0 0.0
        %2262 = vmatprep.subr.mxu0 0.0
        %2263 = vmatpush1.msra.mxu0 0.0
        %2264 = vmatprep.subr.mxu0 0.0
        %2265 = vmatpush1.msra.mxu0 0.0
        %2266 = vmatprep.subr.mxu0 0.0
        %2267 = vmatpush1.msra.mxu0 0.0
        %2268 = vmatprep.subr.mxu0 0.0
        %2269 = vmatpush1.msra.mxu0 0.0
        %2270 = vmatprep.subr.mxu0 0.0
        %2271 = vmatpush1.msra.mxu0 0.0
        %2272 = vmatprep.subr.mxu0 0.0
        %2273 = vmatpush1.msra.mxu0 0.0
        %2274 = vmatprep.subr.mxu0 0.0
        %2275 = vmatpush1.msra.mxu0 0.0
        %2276 = vmatprep.subr.mxu0 0.0
        %2277 = vmatpush1.msra.mxu0 0.0
        %2278 = vmatprep.subr.mxu0 0.0
        %2279 = vmatpush1.msra.mxu0 0.0
        %2280 = vmatprep.mubr.f32.mxu0 0.0
        %v2281 = vand.u32 %v1543, 4294901760
        %v2282 = vsub.f32 %v1543, %v2281
        %2283 = vmatmul.mubr.f32.gmra.mrb[0].mxu0 %v2282
        %v2284 = vpop.f32.mrb[0].mxu0
        %v2285 = vadd.f32 %v2204, %v2284
        %v2286 = vpop.f32.mrb[0].mxu0
        %v2287 = vadd.f32 %v2206, %v2286
        %2288 = vdwg.mxu0
        %v2289 = vand.u32 %v1532, 4294901760
        %2290 = vmatprep.subr.mxu0 %v2289
        %v2291 = vand.u32 %v1531, 4294901760
        %2292 = vmatpush1.msra.mxu0 %v2291
        %v2293 = vand.u32 %v1536, 4294901760
        %2294 = vmatprep.subr.mxu0 %v2293
        %v2295 = vand.u32 %v1535, 4294901760
        %2296 = vmatpush1.msra.mxu0 %v2295
        %2297 = vmatprep.subr.mxu0 0.0
        %2298 = vmatpush1.msra.mxu0 0.0
        %2299 = vmatprep.subr.mxu0 0.0
        %2300 = vmatpush1.msra.mxu0 0.0
        %2301 = vmatprep.subr.mxu0 0.0
        %2302 = vmatpush1.msra.mxu0 0.0
        %2303 = vmatprep.subr.mxu0 0.0
        %2304 = vmatpush1.msra.mxu0 0.0
        %2305 = vmatprep.subr.mxu0 0.0
        %2306 = vmatpush1.msra.mxu0 0.0
        %2307 = vmatprep.subr.mxu0 0.0
        %2308 = vmatpush1.msra.mxu0 0.0
        %2309 = vmatprep.subr.mxu0 0.0
        %2310 = vmatpush1.msra.mxu0 0.0
        %2311 = vmatprep.subr.mxu0 0.0
        %2312 = vmatpush1.msra.mxu0 0.0
        %2313 = vmatprep.subr.mxu0 0.0
        %2314 = vmatpush1.msra.mxu0 0.0
        %2315 = vmatprep.subr.mxu0 0.0
        %2316 = vmatpush1.msra.mxu0 0.0
        %2317 = vmatprep.subr.mxu0 0.0
        %2318 = vmatpush1.msra.mxu0 0.0
        %2319 = vmatprep.subr.mxu0 0.0
        %2320 = vmatpush1.msra.mxu0 0.0
        %2321 = vmatprep.subr.mxu0 0.0
        %2322 = vmatpush1.msra.mxu0 0.0
        %2323 = vmatprep.subr.mxu0 0.0
        %2324 = vmatpush1.msra.mxu0 0.0
        %2325 = vmatprep.subr.mxu0 0.0
        %2326 = vmatpush1.msra.mxu0 0.0
        %2327 = vmatprep.subr.mxu0 0.0
        %2328 = vmatpush1.msra.mxu0 0.0
        %2329 = vmatprep.subr.mxu0 0.0
        %2330 = vmatpush1.msra.mxu0 0.0
        %2331 = vmatprep.subr.mxu0 0.0
        %2332 = vmatpush1.msra.mxu0 0.0
        %2333 = vmatprep.subr.mxu0 0.0
        %2334 = vmatpush1.msra.mxu0 0.0
        %2335 = vmatprep.subr.mxu0 0.0
        %2336 = vmatpush1.msra.mxu0 0.0
        %2337 = vmatprep.subr.mxu0 0.0
        %2338 = vmatpush1.msra.mxu0 0.0
        %2339 = vmatprep.subr.mxu0 0.0
        %2340 = vmatpush1.msra.mxu0 0.0
        %2341 = vmatprep.subr.mxu0 0.0
        %2342 = vmatpush1.msra.mxu0 0.0
        %2343 = vmatprep.subr.mxu0 0.0
        %2344 = vmatpush1.msra.mxu0 0.0
        %2345 = vmatprep.subr.mxu0 0.0
        %2346 = vmatpush1.msra.mxu0 0.0
        %2347 = vmatprep.subr.mxu0 0.0
        %2348 = vmatpush1.msra.mxu0 0.0
        %2349 = vmatprep.subr.mxu0 0.0
        %2350 = vmatpush1.msra.mxu0 0.0
        %2351 = vmatprep.subr.mxu0 0.0
        %2352 = vmatpush1.msra.mxu0 0.0
        %2353 = vmatprep.subr.mxu0 0.0
        %2354 = vmatpush1.msra.mxu0 0.0
        %2355 = vmatprep.subr.mxu0 0.0
        %2356 = vmatpush1.msra.mxu0 0.0
        %2357 = vmatprep.mubr.f32.mxu0 0.0
        %v2358 = vand.u32 %v1543, 4294901760
        %v2359 = vsub.f32 %v1543, %v2358
        %v2360 = vand.u32 %v2359, 4294901760
        %2361 = vmatmul.mubr.f32.gmra.mrb[0].mxu0 %v2360
        %v2362 = vpop.f32.mrb[0].mxu0
        %v2363 = vadd.f32 %v2285, %v2362
        %v2364 = vpop.f32.mrb[0].mxu0
        %v2365 = vadd.f32 %v2287, %v2364
        %2366 = vdwg.mxu0
        %v2367 = vand.u32 %v1532, 4294901760
        %v2368 = vsub.f32 %v1532, %v2367
        %v2369 = vand.u32 %v2368, 4294901760
        %2370 = vmatprep.subr.mxu0 %v2369
        %v2371 = vand.u32 %v1531, 4294901760
        %v2372 = vsub.f32 %v1531, %v2371
        %v2373 = vand.u32 %v2372, 4294901760
        %2374 = vmatpush1.msra.mxu0 %v2373
        %v2375 = vand.u32 %v1536, 4294901760
        %v2376 = vsub.f32 %v1536, %v2375
        %v2377 = vand.u32 %v2376, 4294901760
        %2378 = vmatprep.subr.mxu0 %v2377
        %v2379 = vand.u32 %v1535, 4294901760
        %v2380 = vsub.f32 %v1535, %v2379
        %v2381 = vand.u32 %v2380, 4294901760
        %2382 = vmatpush1.msra.mxu0 %v2381
        %2383 = vmatprep.subr.mxu0 0.0
        %2384 = vmatpush1.msra.mxu0 0.0
        %2385 = vmatprep.subr.mxu0 0.0
        %2386 = vmatpush1.msra.mxu0 0.0
        %2387 = vmatprep.subr.mxu0 0.0
        %2388 = vmatpush1.msra.mxu0 0.0
        %2389 = vmatprep.subr.mxu0 0.0
        %2390 = vmatpush1.msra.mxu0 0.0
        %2391 = vmatprep.subr.mxu0 0.0
        %2392 = vmatpush1.msra.mxu0 0.0
        %2393 = vmatprep.subr.mxu0 0.0
        %2394 = vmatpush1.msra.mxu0 0.0
        %2395 = vmatprep.subr.mxu0 0.0
        %2396 = vmatpush1.msra.mxu0 0.0
        %2397 = vmatprep.subr.mxu0 0.0
        %2398 = vmatpush1.msra.mxu0 0.0
        %2399 = vmatprep.subr.mxu0 0.0
        %2400 = vmatpush1.msra.mxu0 0.0
        %2401 = vmatprep.subr.mxu0 0.0
        %2402 = vmatpush1.msra.mxu0 0.0
        %2403 = vmatprep.subr.mxu0 0.0
        %2404 = vmatpush1.msra.mxu0 0.0
        %2405 = vmatprep.subr.mxu0 0.0
        %2406 = vmatpush1.msra.mxu0 0.0
        %2407 = vmatprep.subr.mxu0 0.0
        %2408 = vmatpush1.msra.mxu0 0.0
        %2409 = vmatprep.subr.mxu0 0.0
        %2410 = vmatpush1.msra.mxu0 0.0
        %2411 = vmatprep.subr.mxu0 0.0
        %2412 = vmatpush1.msra.mxu0 0.0
        %2413 = vmatprep.subr.mxu0 0.0
        %2414 = vmatpush1.msra.mxu0 0.0
        %2415 = vmatprep.subr.mxu0 0.0
        %2416 = vmatpush1.msra.mxu0 0.0
        %2417 = vmatprep.subr.mxu0 0.0
        %2418 = vmatpush1.msra.mxu0 0.0
        %2419 = vmatprep.subr.mxu0 0.0
        %2420 = vmatpush1.msra.mxu0 0.0
        %2421 = vmatprep.subr.mxu0 0.0
        %2422 = vmatpush1.msra.mxu0 0.0
        %2423 = vmatprep.subr.mxu0 0.0
        %2424 = vmatpush1.msra.mxu0 0.0
        %2425 = vmatprep.subr.mxu0 0.0
        %2426 = vmatpush1.msra.mxu0 0.0
        %2427 = vmatprep.subr.mxu0 0.0
        %2428 = vmatpush1.msra.mxu0 0.0
        %2429 = vmatprep.subr.mxu0 0.0
        %2430 = vmatpush1.msra.mxu0 0.0
        %2431 = vmatprep.subr.mxu0 0.0
        %2432 = vmatpush1.msra.mxu0 0.0
        %2433 = vmatprep.subr.mxu0 0.0
        %2434 = vmatpush1.msra.mxu0 0.0
        %2435 = vmatprep.subr.mxu0 0.0
        %2436 = vmatpush1.msra.mxu0 0.0
        %2437 = vmatprep.subr.mxu0 0.0
        %2438 = vmatpush1.msra.mxu0 0.0
        %2439 = vmatprep.subr.mxu0 0.0
        %2440 = vmatpush1.msra.mxu0 0.0
        %2441 = vmatprep.subr.mxu0 0.0
        %2442 = vmatpush1.msra.mxu0 0.0
        %2443 = vmatprep.mubr.f32.mxu0 0.0
        %v2444 = vand.u32 %v1543, 4294901760
        %2445 = vmatmul.mubr.f32.gmra.mrb[0].mxu0 %v2444
        %v2446 = vpop.f32.mrb[0].mxu0
        %v2447 = vadd.f32 %v2363, %v2446
        %v2448 = vpop.f32.mrb[0].mxu0
        %v2449 = vadd.f32 %v2365, %v2448
        %2450 = vdwg.mxu0
        %v2451 = vand.u32 %v1532, 4294901760
        %2452 = vmatprep.subr.mxu0 %v2451
        %v2453 = vand.u32 %v1531, 4294901760
        %2454 = vmatpush1.msra.mxu0 %v2453
        %v2455 = vand.u32 %v1536, 4294901760
        %2456 = vmatprep.subr.mxu0 %v2455
        %v2457 = vand.u32 %v1535, 4294901760
        %2458 = vmatpush1.msra.mxu0 %v2457
        %2459 = vmatprep.subr.mxu0 0.0
        %2460 = vmatpush1.msra.mxu0 0.0
        %2461 = vmatprep.subr.mxu0 0.0
        %2462 = vmatpush1.msra.mxu0 0.0
        %2463 = vmatprep.subr.mxu0 0.0
        %2464 = vmatpush1.msra.mxu0 0.0
        %2465 = vmatprep.subr.mxu0 0.0
        %2466 = vmatpush1.msra.mxu0 0.0
        %2467 = vmatprep.subr.mxu0 0.0
        %2468 = vmatpush1.msra.mxu0 0.0
        %2469 = vmatprep.subr.mxu0 0.0
        %2470 = vmatpush1.msra.mxu0 0.0
        %2471 = vmatprep.subr.mxu0 0.0
        %2472 = vmatpush1.msra.mxu0 0.0
        %2473 = vmatprep.subr.mxu0 0.0
        %2474 = vmatpush1.msra.mxu0 0.0
        %2475 = vmatprep.subr.mxu0 0.0
        %2476 = vmatpush1.msra.mxu0 0.0
        %2477 = vmatprep.subr.mxu0 0.0
        %2478 = vmatpush1.msra.mxu0 0.0
        %2479 = vmatprep.subr.mxu0 0.0
        %2480 = vmatpush1.msra.mxu0 0.0
        %2481 = vmatprep.subr.mxu0 0.0
        %2482 = vmatpush1.msra.mxu0 0.0
        %2483 = vmatprep.subr.mxu0 0.0
        %2484 = vmatpush1.msra.mxu0 0.0
        %2485 = vmatprep.subr.mxu0 0.0
        %2486 = vmatpush1.msra.mxu0 0.0
        %2487 = vmatprep.subr.mxu0 0.0
        %2488 = vmatpush1.msra.mxu0 0.0
        %2489 = vmatprep.subr.mxu0 0.0
        %2490 = vmatpush1.msra.mxu0 0.0
        %2491 = vmatprep.subr.mxu0 0.0
        %2492 = vmatpush1.msra.mxu0 0.0
        %2493 = vmatprep.subr.mxu0 0.0
        %2494 = vmatpush1.msra.mxu0 0.0
        %2495 = vmatprep.subr.mxu0 0.0
        %2496 = vmatpush1.msra.mxu0 0.0
        %2497 = vmatprep.subr.mxu0 0.0
        %2498 = vmatpush1.msra.mxu0 0.0
        %2499 = vmatprep.subr.mxu0 0.0
        %2500 = vmatpush1.msra.mxu0 0.0
        %2501 = vmatprep.subr.mxu0 0.0
        %2502 = vmatpush1.msra.mxu0 0.0
        %2503 = vmatprep.subr.mxu0 0.0
        %2504 = vmatpush1.msra.mxu0 0.0
        %2505 = vmatprep.subr.mxu0 0.0
        %2506 = vmatpush1.msra.mxu0 0.0
        %2507 = vmatprep.subr.mxu0 0.0
        %2508 = vmatpush1.msra.mxu0 0.0
        %2509 = vmatprep.subr.mxu0 0.0
        %2510 = vmatpush1.msra.mxu0 0.0
        %2511 = vmatprep.subr.mxu0 0.0
        %2512 = vmatpush1.msra.mxu0 0.0
        %2513 = vmatprep.subr.mxu0 0.0
        %2514 = vmatpush1.msra.mxu0 0.0
        %2515 = vmatprep.subr.mxu0 0.0
        %2516 = vmatpush1.msra.mxu0 0.0
        %2517 = vmatprep.subr.mxu0 0.0
        %2518 = vmatpush1.msra.mxu0 0.0
        %2519 = vmatprep.mubr.f32.mxu0 0.0
        %v2520 = vand.u32 %v1543, 4294901760
        %2521 = vmatmul.mubr.f32.gmra.mrb[0].mxu0 %v2520
        %v2522 = vpop.f32.mrb[0].mxu0
        %v2523 = vadd.f32 %v2447, %v2522
        %v2524 = vpop.f32.mrb[0].mxu0
        %v2525 = vadd.f32 %v2449, %v2524
        %2526 = vdwg.mxu0
        %v2531 = vcombine.low %v2032, %v2034
        %v2532 = vcombine.low %v2523, %v2525
        %2535 = vst [vmem:[%s272] sm:$0x77] %v2531
        %2536 = vst [vmem:[%s272 + $0x8] sm:$0x77] %v2532
        %s2537 = sand.u32 %s181, 1
        %s2538 = scalar_lea.sflag [#allocation3], %s2537
        %s2539 = sand.u32 %s181, 1
        %s2540 = smul.addr %s2539, 16
        %s2541 = scalar_lea.vmem [#allocation2], %s2540
        // Predicated region
        $region49: #{tpu_custom_call.1} parent=47 // pred_check
          %p2542 = pneg %p191
        $region50: #{tpu_custom_call.1} parent=47 // pred_check_branch
          %2544 = sbr.rel (%p2542) target = $region52
        $region51: #{tpu_custom_call.1} parent=47 // pred_region
          %s2545 = smul.u32 4, %s21
          %s2547 = ssub.s32 256, 256
          %2548 = vsyncadd %s2538, %s2547
          %s2549 = smul.addr %s2545, 64
          %s2550 = scalar_lea.hbm %s7, %s2549
          %s2552 = sshll.u32 %s2541, 4
          %s2553 = int_to_ptr.vmem [resolvable:$true] %s2552
          %2555 = dma.vmem_to_hbm [thread:$0]  %s2553, 256, %s2550, %s2538
        $region52: #{tpu_custom_call.1} parent=47 // pred_fallthru
          _
      $region48: #{tpu_custom_call.1} parent=5 // pred_fallthru
        _
      %p2556 = scmp.le.s32.totalorder 2, %s16
      // Predicated region
      $region53: #{tpu_custom_call.1} parent=5 // pred_check
        %p2557 = pneg %p2556
      $region54: #{tpu_custom_call.1} parent=5 // pred_check_branch
        %2559 = sbr.rel (%p2557) target = $region56
      $region55: #{tpu_custom_call.1} parent=5 // pred_region
        %s2560 = ssub.s32 %s16, 2
        // Predicated region
        $region57: #{tpu_custom_call.1} parent=55 // pred_check
          %p2561 = pneg %p197
        $region58: #{tpu_custom_call.1} parent=55 // pred_check_branch
          %2563 = sbr.rel (%p2561) target = $region60
        $region59: #{tpu_custom_call.1} parent=55 // pred_region
          %s2564 = sand.u32 %s182, 1
          %s2565 = scalar_lea.sflag [#allocation3], %s2564
          %s2566 = sand.u32 %s182, 1
          %s2567 = smul.addr %s2566, 16
          %s2568 = scalar_lea.vmem [#allocation2], %s2567
          %2569 = dma.done %s2565, 256
        $region60: #{tpu_custom_call.1} parent=55 // pred_fallthru
          _
      $region56: #{tpu_custom_call.1} parent=5 // pred_fallthru
        _
    $region6: #{tpu_custom_call.1} parent=1 // loop_footer
      %s20 = sadd.s32 1, %s16
    $region7: #{tpu_custom_call.1} parent=1 // loop_footer_branch
      %15 = sbr.rel target = $region3
    $region8: #{tpu_custom_call.1} parent=1 // loop_exit
      _
    %2570 = vsyncpa [#allocation3], 1
    %s2571 = scalar_lea.sflag [#allocation3], 1
    %2572 = vsyncpa %s2571, 1

</llo_original>
